<compile_context>
chip_gen: v7x
topology: tpu7x:2x2x1
jax: 0.10.0
libtpu: 0.0.40
codegen_flags: <defaults>
</compile_context>

<pallas_src>
import functools
import math

import jax
import jax.numpy as jnp
from jax.experimental import pallas as pl
from jax.experimental.pallas import tpu as pltpu

# ---------------- synthetic BERT config (small) ----------------
VOCAB = 64
HIDDEN = 32
N_LAYERS = 2
N_HEADS = 2
HEAD_DIM = HIDDEN // N_HEADS
INTERMEDIATE = 64
MAX_POS = 64
LN_EPS = 1e-12


# ---------------- fused Pallas kernel ----------------
def _bert_fused_kernel(ids_ref, mask_ref, word_emb_ref, pos_emb_ref, type_emb_ref,
                       emb_g_ref, emb_b_ref,
                       qkv_w_ref, qkv_b_ref, o_w_ref, o_b_ref,
                       ln1_g_ref, ln1_b_ref, fc1_w_ref, fc1_b_ref,
                       fc2_w_ref, fc2_b_ref, ln2_g_ref, ln2_b_ref,
                       out_ref, *, n_heads, use_mean):
    _, B, S = mask_ref.shape
    V, H = word_emb_ref.shape
    D = H // n_heads
    L = qkv_w_ref.shape[0]
    BS = B * S

    def ln(h_in, g, b):
        mu = jnp.mean(h_in, axis=-1, keepdims=True)
        var = jnp.mean(jnp.square(h_in - mu), axis=-1, keepdims=True)
        return (h_in - mu) * jax.lax.rsqrt(var + LN_EPS) * g + b

    def mm(xx, w):
        # bf16 operands on the MXU, f32 accumulation.
        return jax.lax.dot_general(
            xx.astype(jnp.bfloat16), w.astype(jnp.bfloat16),
            dimension_numbers=(((1,), (0,)), ((), ())),
            preferred_element_type=jnp.float32)

    ids = ids_ref[0]                                   # (B*S, 1) int32
    mask = mask_ref[0]                                 # (B, S)   f32 (1 keep / 0 pad)
    add_mask = ((1.0 - mask) * -10000.0)[:, None, :]   # (B, 1, S) additive attn mask

    # ---- in-kernel embedding gather: one-hot (B*S, V) x (V, H) on the MXU ----
    vocab_iota = jax.lax.broadcasted_iota(jnp.int32, (BS, V), 1)
    onehot = (vocab_iota == ids).astype(jnp.float32)
    word = jnp.dot(onehot, word_emb_ref[...], preferred_element_type=jnp.float32)
    emb = (word.reshape(B, S, H)
           + pos_emb_ref[...][None]
           + type_emb_ref[...][None]).reshape(BS, H)
    x = ln(emb, emb_g_ref[...], emb_b_ref[...])        # (B*S, H) f32

    for layer in range(L):
        # ---- fused QKV projection: one (H, 3H) matmul; bf16 cast hoisted once ----
        qkv3 = (mm(x, qkv_w_ref[layer]) + qkv_b_ref[layer]) \
            .reshape(B, S, 3 * H).astype(jnp.bfloat16)          # (B, S, 3H)

        # ---- attention: batched over B via single-batch-dim einsums ----
        heads = []
        for h in range(n_heads):
            c0 = h * D
            q = qkv3[:, :, c0:c0 + D]                           # (B, S, D)
            k = qkv3[:, :, H + c0:H + c0 + D]                   # (B, S, D)
            v = qkv3[:, :, 2 * H + c0:2 * H + c0 + D]           # (B, S, D)
            # 1/sqrt(D) is folded into the Q projection at init.
            s = jnp.einsum('bqd,bkd->bqk', q, k,
                           preferred_element_type=jnp.float32) + add_mask
            smax = jnp.max(s, axis=-1, keepdims=True)
            e = jnp.exp(s - smax)
            p = e * pl.reciprocal(jnp.sum(e, axis=-1, keepdims=True), approx=True)
            heads.append(jnp.einsum('bqk,bkd->bqd', p.astype(jnp.bfloat16), v,
                                    preferred_element_type=jnp.float32))
        # head contexts concatenated in registers (no scratch / masked column stores)
        ctx = jnp.concatenate(heads, axis=-1).reshape(BS, H)    # (B*S, H) f32

        # ---- attention output projection + residual LN ----
        attn = mm(ctx, o_w_ref[layer]) + o_b_ref[layer]
        x = ln(attn + x, ln1_g_ref[layer], ln1_b_ref[layer])

        # ---- FFN + residual LN ----
        ffn = mm(x, fc1_w_ref[layer]) + fc1_b_ref[layer]
        # TODO(synk): HF BERT uses erf-GELU; tanh-approx GELU used for robust Mosaic lowering.
        ffn = jax.nn.gelu(ffn, approximate=True)
        ffn = mm(ffn, fc2_w_ref[layer]) + fc2_b_ref[layer]
        x = ln(ffn + x, ln2_g_ref[layer], ln2_b_ref[layer])

    # ---- fused pooling (Text_Encoder / Text_Encoder_mean), batched over B ----
    x3 = x.reshape(B, S, H)
    if use_mean:
        num = jnp.sum(x3 * mask[:, :, None], axis=1)                     # (B, H)
        den = jnp.maximum(jnp.sum(mask, axis=-1, keepdims=True), 1e-9)   # (B, 1)
        pooled = num / den
    else:
        pooled = x3[:, 0:1, :].reshape(B, H)                             # CLS token
    out_ref[...] = pooled.reshape(1, B, H)


def _resident_spec(arr):
    # Full-array block with a constant index_map: DMA'd once, resident across grid.
    nd = arr.ndim
    return pl.BlockSpec(arr.shape, lambda a, nd=nd: (0,) * nd)


@functools.partial(jax.jit, static_argnames=("use_mean",))
def bert_encode_pooled(params, input_ids, attention_mask, *, use_mean=False):
    """Fully fused BERT forward + pooling for a stack of attributes.

    input_ids / attention_mask: (n_attrs, B, S). Returns (n_attrs, B, HIDDEN).
    """
    A, B, S = input_ids.shape
    ids = input_ids.astype(jnp.int32).reshape(A, B * S, 1)
    mask_f = attention_mask.astype(jnp.float32)                 # (A, B, S)
    pos = params["pos_emb"][:S]                                  # (S, H)
    typ = params["type_emb"][0:1]                                # (1, H)

    operands = (ids, mask_f, params["word_emb"], pos, typ,
                params["emb_ln_g"], params["emb_ln_b"],
                params["qkv_w"], params["qkv_b"],
                params["o_w"], params["o_b"],
                params["ln1_g"], params["ln1_b"],
                params["fc1_w"], params["fc1_b"],
                params["fc2_w"], params["fc2_b"],
                params["ln2_g"], params["ln2_b"])

    in_specs = [
        pl.BlockSpec((1, B * S, 1), lambda a: (a, 0, 0)),        # ids, per attribute
        pl.BlockSpec((1, B, S), lambda a: (a, 0, 0)),            # mask, per attribute
    ] + [_resident_spec(op) for op in operands[2:]]              # table + weights resident

    kernel = functools.partial(_bert_fused_kernel,
                               n_heads=N_HEADS, use_mean=use_mean)
    return pl.pallas_call(
        kernel,
        out_shape=jax.ShapeDtypeStruct((A, B, HIDDEN), jnp.float32),
        grid=(A,),
        in_specs=in_specs,
        out_specs=pl.BlockSpec((1, B, HIDDEN), lambda a: (a, 0, 0)),
        compiler_params=pltpu.CompilerParams(dimension_semantics=("parallel",)),
    )(*operands)


# ---------------- synthetic BERT params (stacked per-layer) ----------------
def init_bert_params(key):
    ks = jax.random.split(key, 8)

    def nrm(k, shape):
        return jax.random.normal(k, shape, jnp.float32) * 0.02

    qkv_w = nrm(ks[3], (N_LAYERS, HIDDEN, 3 * HIDDEN))
    qkv_b = jnp.zeros((N_LAYERS, 1, 3 * HIDDEN), jnp.float32)
    # Fold the 1/sqrt(D) attention scale into the Q projection (weights + bias).
    # Valid only because these synthetic params have no other (unscaled) consumer.
    scale = 1.0 / math.sqrt(HEAD_DIM)
    qkv_w = qkv_w.at[:, :, :HIDDEN].multiply(scale)
    qkv_b = qkv_b.at[:, :, :HIDDEN].multiply(scale)

    return {
        "word_emb": nrm(ks[0], (VOCAB, HIDDEN)),
        "pos_emb": nrm(ks[1], (MAX_POS, HIDDEN)),
        "type_emb": nrm(ks[2], (2, HIDDEN)),
        "emb_ln_g": jnp.ones((1, HIDDEN), jnp.float32),
        "emb_ln_b": jnp.zeros((1, HIDDEN), jnp.float32),
        # stacked per-layer weights; matmul weights stored in bf16 (MXU-native)
        "qkv_w": qkv_w.astype(jnp.bfloat16),
        "qkv_b": qkv_b,
        "o_w": nrm(ks[4], (N_LAYERS, HIDDEN, HIDDEN)).astype(jnp.bfloat16),
        "o_b": jnp.zeros((N_LAYERS, 1, HIDDEN), jnp.float32),
        "ln1_g": jnp.ones((N_LAYERS, 1, HIDDEN), jnp.float32),
        "ln1_b": jnp.zeros((N_LAYERS, 1, HIDDEN), jnp.float32),
        "fc1_w": nrm(ks[5], (N_LAYERS, HIDDEN, INTERMEDIATE)).astype(jnp.bfloat16),
        "fc1_b": jnp.zeros((N_LAYERS, 1, INTERMEDIATE), jnp.float32),
        "fc2_w": nrm(ks[6], (N_LAYERS, INTERMEDIATE, HIDDEN)).astype(jnp.bfloat16),
        "fc2_b": jnp.zeros((N_LAYERS, 1, HIDDEN), jnp.float32),
        "ln2_g": jnp.ones((N_LAYERS, 1, HIDDEN), jnp.float32),
        "ln2_b": jnp.zeros((N_LAYERS, 1, HIDDEN), jnp.float32),
    }


# ---------------- Bert_Encoder equivalent ----------------
class Args:
    def __init__(self, **kw):
        self.__dict__.update(kw)


class BertEncoder:
    """JAX/Pallas port of Bert_Encoder.forward."""

    def __init__(self, args, bert_params):
        self.args = args
        self.attributes2length = {
            "title": args.num_words_title * 2,
            "abstract": args.num_words_abstract * 2,
            "body": args.num_words_body * 2,
        }
        for key in list(self.attributes2length.keys()):
            if key not in args.news_attributes:
                self.attributes2length[key] = 0
        keys = list(self.attributes2length.keys())
        vals = list(self.attributes2length.values())
        self.attributes2start = {k: sum(vals[: keys.index(k)]) for k in keys}
        assert len(args.news_attributes) > 0
        candidates = ["title", "abstract", "body"]
        self.use_mean = "opt" in args.bert_model_load
        self.bert_params = bert_params
        self.newsname = [n for n in candidates if n in set(args.news_attributes)]

    def __call__(self, news):
        # Group attributes by sequence length so each group runs as ONE fused
        # pallas_call (grid over attributes); mean over attributes is order-invariant.
        groups = {}
        for name in self.newsname:
            start = self.attributes2start[name]
            length = self.attributes2length[name]
            nw = length // 2
            seg = news[:, start:start + length]
            groups.setdefault(nw, []).append((seg[:, :nw], seg[:, nw:]))

        chunks = []
        for nw, items in groups.items():
            ids = jnp.stack([it[0] for it in items], axis=0)     # (A, B, nw)
            msk = jnp.stack([it[1] for it in items], axis=0)     # (A, B, nw)
            chunks.append(bert_encode_pooled(self.bert_params, ids, msk,
                                             use_mean=self.use_mean))  # (A, B, H)
        all_vecs = jnp.concatenate(chunks, axis=0)               # (A_total, B, H)
        if all_vecs.shape[0] == 1:
            return all_vecs[0]
        return jnp.mean(all_vecs, axis=0)


# ---------------- main ----------------
if __name__ == "__main__":
    args = Args(
        num_words_title=8,
        num_words_abstract=8,
        num_words_body=16,
        news_attributes=["title", "abstract"],   # 'body' dropped -> length 0
        bert_model_load="bert_tiny_uncased",     # not 'opt' -> CLS-token Text_Encoder
        embedding_dim=HIDDEN,
        word_embedding_dim=HIDDEN,
    )

    key = jax.random.PRNGKey(0)
    pkey, ikey = jax.random.split(key)
    params = init_bert_params(pkey)
    encoder = BertEncoder(args, params)

    batch = 2
    segments = []
    for name in ["title", "abstract", "body"]:
        L = encoder.attributes2length[name]
        if L == 0:
            continue
        nw = L // 2
        ikey, k_ids, k_len = jax.random.split(ikey, 3)
        ids = jax.random.randint(k_ids, (batch, nw), 0, VOCAB)
        lens = jax.random.randint(k_len, (batch, 1), 1, nw + 1)
        mask = (jnp.arange(nw)[None, :] < lens).astype(jnp.int32)
        segments.append(jnp.concatenate([ids, mask], axis=1))
    news = jnp.concatenate(segments, axis=1).astype(jnp.int32)   # (batch, 32)

    out = encoder(news)
    out = jax.block_until_ready(out)
    assert out.shape == (batch, HIDDEN), out.shape
    assert bool(jnp.all(jnp.isfinite(out)))
    print("KERNEL_OK")
</pallas_src>

<mosaic_0001>
module attributes {stable_mosaic.version = 11 : i64} {
  func.func @_bert_fused_kernel(%arg0: i32, %arg1: memref<1x16x1xi32, #tpu.memory_space<vmem>>, %arg2: memref<1x2x8xf32, #tpu.memory_space<vmem>>, %arg3: memref<64x32xf32, #tpu.memory_space<vmem>>, %arg4: memref<8x32xf32, #tpu.memory_space<vmem>>, %arg5: memref<1x32xf32, #tpu.memory_space<vmem>>, %arg6: memref<1x32xf32, #tpu.memory_space<vmem>>, %arg7: memref<1x32xf32, #tpu.memory_space<vmem>>, %arg8: memref<2x32x96xbf16, #tpu.memory_space<vmem>>, %arg9: memref<2x1x96xf32, #tpu.memory_space<vmem>>, %arg10: memref<2x32x32xbf16, #tpu.memory_space<vmem>>, %arg11: memref<2x1x32xf32, #tpu.memory_space<vmem>>, %arg12: memref<2x1x32xf32, #tpu.memory_space<vmem>>, %arg13: memref<2x1x32xf32, #tpu.memory_space<vmem>>, %arg14: memref<2x32x64xbf16, #tpu.memory_space<vmem>>, %arg15: memref<2x1x64xf32, #tpu.memory_space<vmem>>, %arg16: memref<2x64x32xbf16, #tpu.memory_space<vmem>>, %arg17: memref<2x1x32xf32, #tpu.memory_space<vmem>>, %arg18: memref<2x1x32xf32, #tpu.memory_space<vmem>>, %arg19: memref<2x1x32xf32, #tpu.memory_space<vmem>>, %arg20: memref<1x2x32xf32, #tpu.memory_space<vmem>>) attributes {dimension_semantics = [#tpu.dimension_semantics<parallel>], iteration_bounds = array<i64: 2>, scalar_prefetch = 0 : i64, scratch_operands = 0 : i64, tpu.core_type = #tpu.core_type<tc>, window_params = [{transform_indices = @transform_0, window_bounds = array<i64: 1, 16, 1>}, {transform_indices = @transform_1, window_bounds = array<i64: 1, 2, 8>}, {pipeline_mode = #tpu.pipeline_mode<synchronous>, transform_indices = @transform_2, window_bounds = array<i64: 64, 32>}, {pipeline_mode = #tpu.pipeline_mode<synchronous>, transform_indices = @transform_3, window_bounds = array<i64: 8, 32>}, {pipeline_mode = #tpu.pipeline_mode<synchronous>, transform_indices = @transform_4, window_bounds = array<i64: 1, 32>}, {pipeline_mode = #tpu.pipeline_mode<synchronous>, transform_indices = @transform_5, window_bounds = array<i64: 1, 32>}, {pipeline_mode = #tpu.pipeline_mode<synchronous>, transform_indices = @transform_6, window_bounds = array<i64: 1, 32>}, {pipeline_mode = #tpu.pipeline_mode<synchronous>, transform_indices = @transform_7, window_bounds = array<i64: 2, 32, 96>}, {pipeline_mode = #tpu.pipeline_mode<synchronous>, transform_indices = @transform_8, window_bounds = array<i64: 2, 1, 96>}, {pipeline_mode = #tpu.pipeline_mode<synchronous>, transform_indices = @transform_9, window_bounds = array<i64: 2, 32, 32>}, {pipeline_mode = #tpu.pipeline_mode<synchronous>, transform_indices = @transform_10, window_bounds = array<i64: 2, 1, 32>}, {pipeline_mode = #tpu.pipeline_mode<synchronous>, transform_indices = @transform_11, window_bounds = array<i64: 2, 1, 32>}, {pipeline_mode = #tpu.pipeline_mode<synchronous>, transform_indices = @transform_12, window_bounds = array<i64: 2, 1, 32>}, {pipeline_mode = #tpu.pipeline_mode<synchronous>, transform_indices = @transform_13, window_bounds = array<i64: 2, 32, 64>}, {pipeline_mode = #tpu.pipeline_mode<synchronous>, transform_indices = @transform_14, window_bounds = array<i64: 2, 1, 64>}, {pipeline_mode = #tpu.pipeline_mode<synchronous>, transform_indices = @transform_15, window_bounds = array<i64: 2, 64, 32>}, {pipeline_mode = #tpu.pipeline_mode<synchronous>, transform_indices = @transform_16, window_bounds = array<i64: 2, 1, 32>}, {pipeline_mode = #tpu.pipeline_mode<synchronous>, transform_indices = @transform_17, window_bounds = array<i64: 2, 1, 32>}, {pipeline_mode = #tpu.pipeline_mode<synchronous>, transform_indices = @transform_18, window_bounds = array<i64: 2, 1, 32>}, {transform_indices = @transform_19, window_bounds = array<i64: 1, 2, 32>}]} {
    %c0 = arith.constant 0 : index
    %c0_0 = arith.constant 0 : index
    %c0_1 = arith.constant 0 : index
    %0 = vector.load %arg1[%c0, %c0_0, %c0_1] : memref<1x16x1xi32, #tpu.memory_space<vmem>>, vector<1x16x1xi32>
    %1 = vector.shape_cast %0 : vector<1x16x1xi32> to vector<16x1xi32>
    %c0_2 = arith.constant 0 : index
    %c0_3 = arith.constant 0 : index
    %c0_4 = arith.constant 0 : index
    %2 = vector.load %arg2[%c0_2, %c0_3, %c0_4] : memref<1x2x8xf32, #tpu.memory_space<vmem>>, vector<1x2x8xf32>
    %3 = vector.shape_cast %2 : vector<1x2x8xf32> to vector<2x8xf32>
    %cst = arith.constant 1.000000e+00 : f32
    %4 = vector.broadcast %cst : f32 to vector<2x8xf32>
    %5 = arith.subf %4, %3 : vector<2x8xf32>
    %cst_5 = arith.constant -1.000000e+04 : f32
    %6 = vector.broadcast %cst_5 : f32 to vector<2x8xf32>
    %7 = arith.mulf %5, %6 : vector<2x8xf32>
    %8 = vector.shape_cast %7 : vector<2x8xf32> to vector<2x1x8xf32>
    %9 = tpu.iota {dimensions = array<i32: 1>} : vector<16x64xi32>
    %10 = vector.broadcast %1 : vector<16x1xi32> to vector<16x64xi32>
    %11 = arith.cmpi eq, %9, %10 : vector<16x64xi32>
    %12 = arith.extui %11 : vector<16x64xi1> to vector<16x64xi32>
    %13 = arith.sitofp %12 : vector<16x64xi32> to vector<16x64xf32>
    %c0_6 = arith.constant 0 : index
    %c0_7 = arith.constant 0 : index
    %14 = vector.load %arg3[%c0_6, %c0_7] : memref<64x32xf32, #tpu.memory_space<vmem>>, vector<64x32xf32>
    %cst_8 = arith.constant dense<0.000000e+00> : vector<16x32xf32>
    %15 = tpu.matmul %13, %14, %cst_8 {dimension_numbers = #tpu.dot_dimension_numbers<[1], [0], [0], [1], [0, 0, 1, 1], [], []>} : vector<16x64xf32>, vector<64x32xf32>, vector<16x32xf32> -> vector<16x32xf32>
    %16 = vector.shape_cast %15 : vector<16x32xf32> to vector<2x8x32xf32>
    %c0_9 = arith.constant 0 : index
    %c0_10 = arith.constant 0 : index
    %17 = vector.load %arg4[%c0_9, %c0_10] : memref<8x32xf32, #tpu.memory_space<vmem>>, vector<8x32xf32>
    %18 = vector.shape_cast %17 : vector<8x32xf32> to vector<1x8x32xf32>
    %19 = vector.broadcast %18 : vector<1x8x32xf32> to vector<2x8x32xf32>
    %20 = arith.addf %16, %19 : vector<2x8x32xf32>
    %c0_11 = arith.constant 0 : index
    %c0_12 = arith.constant 0 : index
    %21 = vector.load %arg5[%c0_11, %c0_12] : memref<1x32xf32, #tpu.memory_space<vmem>>, vector<1x32xf32>
    %22 = vector.shape_cast %21 : vector<1x32xf32> to vector<1x1x32xf32>
    %23 = vector.broadcast %22 : vector<1x1x32xf32> to vector<2x8x32xf32>
    %24 = arith.addf %20, %23 : vector<2x8x32xf32>
    %25 = vector.shape_cast %24 : vector<2x8x32xf32> to vector<16x32xf32>
    %c0_13 = arith.constant 0 : index
    %c0_14 = arith.constant 0 : index
    %26 = vector.load %arg6[%c0_13, %c0_14] : memref<1x32xf32, #tpu.memory_space<vmem>>, vector<1x32xf32>
    %c0_15 = arith.constant 0 : index
    %c0_16 = arith.constant 0 : index
    %27 = vector.load %arg7[%c0_15, %c0_16] : memref<1x32xf32, #tpu.memory_space<vmem>>, vector<1x32xf32>
    %cst_17 = arith.constant dense<0.000000e+00> : vector<16xf32>
    %28 = vector.multi_reduction <add>, %25, %cst_17 [1] : vector<16x32xf32> to vector<16xf32>
    %29 = vector.shape_cast %28 : vector<16xf32> to vector<16x1xf32>
    %cst_18 = arith.constant 3.200000e+01 : f32
    %30 = vector.broadcast %cst_18 : f32 to vector<16x1xf32>
    %31 = arith.divf %29, %30 : vector<16x1xf32>
    %32 = vector.broadcast %31 : vector<16x1xf32> to vector<16x32xf32>
    %33 = arith.subf %25, %32 : vector<16x32xf32>
    %34 = arith.mulf %33, %33 : vector<16x32xf32>
    %cst_19 = arith.constant dense<0.000000e+00> : vector<16xf32>
    %35 = vector.multi_reduction <add>, %34, %cst_19 [1] : vector<16x32xf32> to vector<16xf32>
    %36 = vector.shape_cast %35 : vector<16xf32> to vector<16x1xf32>
    %cst_20 = arith.constant 3.200000e+01 : f32
    %37 = vector.broadcast %cst_20 : f32 to vector<16x1xf32>
    %38 = arith.divf %36, %37 : vector<16x1xf32>
    %39 = vector.broadcast %31 : vector<16x1xf32> to vector<16x32xf32>
    %40 = arith.subf %25, %39 : vector<16x32xf32>
    %cst_21 = arith.constant 9.99999996E-13 : f32
    %41 = vector.broadcast %cst_21 : f32 to vector<16x1xf32>
    %42 = arith.addf %38, %41 : vector<16x1xf32>
    %43 = math.rsqrt %42 : vector<16x1xf32>
    %44 = vector.broadcast %43 : vector<16x1xf32> to vector<16x32xf32>
    %45 = arith.mulf %40, %44 : vector<16x32xf32>
    %46 = vector.broadcast %26 : vector<1x32xf32> to vector<16x32xf32>
    %47 = arith.mulf %45, %46 : vector<16x32xf32>
    %48 = vector.broadcast %27 : vector<1x32xf32> to vector<16x32xf32>
    %49 = arith.addf %47, %48 : vector<16x32xf32>
    %c0_22 = arith.constant 0 : index
    %c0_23 = arith.constant 0 : index
    %c0_24 = arith.constant 0 : index
    %50 = vector.load %arg8[%c0_22, %c0_23, %c0_24] : memref<2x32x96xbf16, #tpu.memory_space<vmem>>, vector<1x32x96xbf16>
    %51 = vector.shape_cast %50 : vector<1x32x96xbf16> to vector<32x96xbf16>
    %52 = arith.truncf %49 : vector<16x32xf32> to vector<16x32xbf16>
    %cst_25 = arith.constant dense<0.000000e+00> : vector<16x96xf32>
    %53 = tpu.matmul %52, %51, %cst_25 {dimension_numbers = #tpu.dot_dimension_numbers<[1], [0], [0], [1], [0, 0, 1, 1], [], []>} : vector<16x32xbf16>, vector<32x96xbf16>, vector<16x96xf32> -> vector<16x96xf32>
    %c0_26 = arith.constant 0 : index
    %c0_27 = arith.constant 0 : index
    %c0_28 = arith.constant 0 : index
    %54 = vector.load %arg9[%c0_26, %c0_27, %c0_28] : memref<2x1x96xf32, #tpu.memory_space<vmem>>, vector<1x1x96xf32>
    %55 = vector.shape_cast %54 : vector<1x1x96xf32> to vector<1x96xf32>
    %56 = vector.broadcast %55 : vector<1x96xf32> to vector<16x96xf32>
    %57 = arith.addf %53, %56 : vector<16x96xf32>
    %58 = vector.shape_cast %57 : vector<16x96xf32> to vector<2x8x96xf32>
    %59 = arith.truncf %58 : vector<2x8x96xf32> to vector<2x8x96xbf16>
    %60 = vector.extract_strided_slice %59 {offsets = [0, 0, 0], sizes = [2, 8, 16], strides = [1, 1, 1]} : vector<2x8x96xbf16> to vector<2x8x16xbf16>
    %61 = vector.extract_strided_slice %59 {offsets = [0, 0, 32], sizes = [2, 8, 16], strides = [1, 1, 1]} : vector<2x8x96xbf16> to vector<2x8x16xbf16>
    %62 = vector.extract_strided_slice %59 {offsets = [0, 0, 64], sizes = [2, 8, 16], strides = [1, 1, 1]} : vector<2x8x96xbf16> to vector<2x8x16xbf16>
    "tpu.trace_start"() <{level = 10 : i32, message = "bqd,bkd->bqk"}> : () -> ()
    %cst_29 = arith.constant dense<0.000000e+00> : vector<2x8x8xf32>
    %63 = tpu.matmul %60, %61, %cst_29 {dimension_numbers = #tpu.dot_dimension_numbers<[2], [2], [1], [1], [0, 0, 0, 1, 1, 1], [0], [0]>} : vector<2x8x16xbf16>, vector<2x8x16xbf16>, vector<2x8x8xf32> -> vector<2x8x8xf32>
    "tpu.trace_stop"() : () -> ()
    %64 = vector.broadcast %8 : vector<2x1x8xf32> to vector<2x8x8xf32>
    %65 = arith.addf %63, %64 : vector<2x8x8xf32>
    %cst_30 = arith.constant dense<0xFF800000> : vector<2x8xf32>
    %66 = vector.multi_reduction <maximumf>, %65, %cst_30 [2] : vector<2x8x8xf32> to vector<2x8xf32>
    %67 = vector.shape_cast %66 : vector<2x8xf32> to vector<2x8x1xf32>
    %68 = vector.broadcast %67 : vector<2x8x1xf32> to vector<2x8x8xf32>
    %69 = arith.subf %65, %68 : vector<2x8x8xf32>
    %70 = math.exp %69 : vector<2x8x8xf32>
    %cst_31 = arith.constant dense<0.000000e+00> : vector<2x8xf32>
    %71 = vector.multi_reduction <add>, %70, %cst_31 [2] : vector<2x8x8xf32> to vector<2x8xf32>
    %72 = vector.shape_cast %71 : vector<2x8xf32> to vector<2x8x1xf32>
    %73 = tpu.reciprocal %72 {approx = true} : vector<2x8x1xf32> -> vector<2x8x1xf32>
    %74 = vector.broadcast %73 : vector<2x8x1xf32> to vector<2x8x8xf32>
    %75 = arith.mulf %70, %74 : vector<2x8x8xf32>
    %76 = arith.truncf %75 : vector<2x8x8xf32> to vector<2x8x8xbf16>
    "tpu.trace_start"() <{level = 10 : i32, message = "bqk,bkd->bqd"}> : () -> ()
    %cst_32 = arith.constant dense<0.000000e+00> : vector<2x8x16xf32>
    %77 = tpu.matmul %76, %62, %cst_32 {dimension_numbers = #tpu.dot_dimension_numbers<[2], [1], [1], [2], [0, 0, 0, 1, 1, 2], [0], [0]>} : vector<2x8x8xbf16>, vector<2x8x16xbf16>, vector<2x8x16xf32> -> vector<2x8x16xf32>
    "tpu.trace_stop"() : () -> ()
    %78 = vector.extract_strided_slice %59 {offsets = [0, 0, 16], sizes = [2, 8, 16], strides = [1, 1, 1]} : vector<2x8x96xbf16> to vector<2x8x16xbf16>
    %79 = vector.extract_strided_slice %59 {offsets = [0, 0, 48], sizes = [2, 8, 16], strides = [1, 1, 1]} : vector<2x8x96xbf16> to vector<2x8x16xbf16>
    %80 = vector.extract_strided_slice %59 {offsets = [0, 0, 80], sizes = [2, 8, 16], strides = [1, 1, 1]} : vector<2x8x96xbf16> to vector<2x8x16xbf16>
    "tpu.trace_start"() <{level = 10 : i32, message = "bqd,bkd->bqk"}> : () -> ()
    %cst_33 = arith.constant dense<0.000000e+00> : vector<2x8x8xf32>
    %81 = tpu.matmul %78, %79, %cst_33 {dimension_numbers = #tpu.dot_dimension_numbers<[2], [2], [1], [1], [0, 0, 0, 1, 1, 1], [0], [0]>} : vector<2x8x16xbf16>, vector<2x8x16xbf16>, vector<2x8x8xf32> -> vector<2x8x8xf32>
    "tpu.trace_stop"() : () -> ()
    %82 = vector.broadcast %8 : vector<2x1x8xf32> to vector<2x8x8xf32>
    %83 = arith.addf %81, %82 : vector<2x8x8xf32>
    %cst_34 = arith.constant dense<0xFF800000> : vector<2x8xf32>
    %84 = vector.multi_reduction <maximumf>, %83, %cst_34 [2] : vector<2x8x8xf32> to vector<2x8xf32>
    %85 = vector.shape_cast %84 : vector<2x8xf32> to vector<2x8x1xf32>
    %86 = vector.broadcast %85 : vector<2x8x1xf32> to vector<2x8x8xf32>
    %87 = arith.subf %83, %86 : vector<2x8x8xf32>
    %88 = math.exp %87 : vector<2x8x8xf32>
    %cst_35 = arith.constant dense<0.000000e+00> : vector<2x8xf32>
    %89 = vector.multi_reduction <add>, %88, %cst_35 [2] : vector<2x8x8xf32> to vector<2x8xf32>
    %90 = vector.shape_cast %89 : vector<2x8xf32> to vector<2x8x1xf32>
    %91 = tpu.reciprocal %90 {approx = true} : vector<2x8x1xf32> -> vector<2x8x1xf32>
    %92 = vector.broadcast %91 : vector<2x8x1xf32> to vector<2x8x8xf32>
    %93 = arith.mulf %88, %92 : vector<2x8x8xf32>
    %94 = arith.truncf %93 : vector<2x8x8xf32> to vector<2x8x8xbf16>
    "tpu.trace_start"() <{level = 10 : i32, message = "bqk,bkd->bqd"}> : () -> ()
    %cst_36 = arith.constant dense<0.000000e+00> : vector<2x8x16xf32>
    %95 = tpu.matmul %94, %80, %cst_36 {dimension_numbers = #tpu.dot_dimension_numbers<[2], [1], [1], [2], [0, 0, 0, 1, 1, 2], [0], [0]>} : vector<2x8x8xbf16>, vector<2x8x16xbf16>, vector<2x8x16xf32> -> vector<2x8x16xf32>
    "tpu.trace_stop"() : () -> ()
    %96 = tpu.concatenate %77, %95 in 2 : vector<2x8x16xf32>, vector<2x8x16xf32> -> vector<2x8x32xf32>
    %97 = vector.shape_cast %96 : vector<2x8x32xf32> to vector<16x32xf32>
    %c0_37 = arith.constant 0 : index
    %c0_38 = arith.constant 0 : index
    %c0_39 = arith.constant 0 : index
    %98 = vector.load %arg10[%c0_37, %c0_38, %c0_39] : memref<2x32x32xbf16, #tpu.memory_space<vmem>>, vector<1x32x32xbf16>
    %99 = vector.shape_cast %98 : vector<1x32x32xbf16> to vector<32x32xbf16>
    %100 = arith.truncf %97 : vector<16x32xf32> to vector<16x32xbf16>
    %cst_40 = arith.constant dense<0.000000e+00> : vector<16x32xf32>
    %101 = tpu.matmul %100, %99, %cst_40 {dimension_numbers = #tpu.dot_dimension_numbers<[1], [0], [0], [1], [0, 0, 1, 1], [], []>} : vector<16x32xbf16>, vector<32x32xbf16>, vector<16x32xf32> -> vector<16x32xf32>
    %c0_41 = arith.constant 0 : index
    %c0_42 = arith.constant 0 : index
    %c0_43 = arith.constant 0 : index
    %102 = vector.load %arg11[%c0_41, %c0_42, %c0_43] : memref<2x1x32xf32, #tpu.memory_space<vmem>>, vector<1x1x32xf32>
    %103 = vector.shape_cast %102 : vector<1x1x32xf32> to vector<1x32xf32>
    %104 = vector.broadcast %103 : vector<1x32xf32> to vector<16x32xf32>
    %105 = arith.addf %101, %104 : vector<16x32xf32>
    %106 = arith.addf %105, %49 : vector<16x32xf32>
    %c0_44 = arith.constant 0 : index
    %c0_45 = arith.constant 0 : index
    %c0_46 = arith.constant 0 : index
    %107 = vector.load %arg12[%c0_44, %c0_45, %c0_46] : memref<2x1x32xf32, #tpu.memory_space<vmem>>, vector<1x1x32xf32>
    %108 = vector.shape_cast %107 : vector<1x1x32xf32> to vector<1x32xf32>
    %c0_47 = arith.constant 0 : index
    %c0_48 = arith.constant 0 : index
    %c0_49 = arith.constant 0 : index
    %109 = vector.load %arg13[%c0_47, %c0_48, %c0_49] : memref<2x1x32xf32, #tpu.memory_space<vmem>>, vector<1x1x32xf32>
    %110 = vector.shape_cast %109 : vector<1x1x32xf32> to vector<1x32xf32>
    %cst_50 = arith.constant dense<0.000000e+00> : vector<16xf32>
    %111 = vector.multi_reduction <add>, %106, %cst_50 [1] : vector<16x32xf32> to vector<16xf32>
    %112 = vector.shape_cast %111 : vector<16xf32> to vector<16x1xf32>
    %cst_51 = arith.constant 3.200000e+01 : f32
    %113 = vector.broadcast %cst_51 : f32 to vector<16x1xf32>
    %114 = arith.divf %112, %113 : vector<16x1xf32>
    %115 = vector.broadcast %114 : vector<16x1xf32> to vector<16x32xf32>
    %116 = arith.subf %106, %115 : vector<16x32xf32>
    %117 = arith.mulf %116, %116 : vector<16x32xf32>
    %cst_52 = arith.constant dense<0.000000e+00> : vector<16xf32>
    %118 = vector.multi_reduction <add>, %117, %cst_52 [1] : vector<16x32xf32> to vector<16xf32>
    %119 = vector.shape_cast %118 : vector<16xf32> to vector<16x1xf32>
    %cst_53 = arith.constant 3.200000e+01 : f32
    %120 = vector.broadcast %cst_53 : f32 to vector<16x1xf32>
    %121 = arith.divf %119, %120 : vector<16x1xf32>
    %122 = vector.broadcast %114 : vector<16x1xf32> to vector<16x32xf32>
    %123 = arith.subf %106, %122 : vector<16x32xf32>
    %cst_54 = arith.constant 9.99999996E-13 : f32
    %124 = vector.broadcast %cst_54 : f32 to vector<16x1xf32>
    %125 = arith.addf %121, %124 : vector<16x1xf32>
    %126 = math.rsqrt %125 : vector<16x1xf32>
    %127 = vector.broadcast %126 : vector<16x1xf32> to vector<16x32xf32>
    %128 = arith.mulf %123, %127 : vector<16x32xf32>
    %129 = vector.broadcast %108 : vector<1x32xf32> to vector<16x32xf32>
    %130 = arith.mulf %128, %129 : vector<16x32xf32>
    %131 = vector.broadcast %110 : vector<1x32xf32> to vector<16x32xf32>
    %132 = arith.addf %130, %131 : vector<16x32xf32>
    %c0_55 = arith.constant 0 : index
    %c0_56 = arith.constant 0 : index
    %c0_57 = arith.constant 0 : index
    %133 = vector.load %arg14[%c0_55, %c0_56, %c0_57] : memref<2x32x64xbf16, #tpu.memory_space<vmem>>, vector<1x32x64xbf16>
    %134 = vector.shape_cast %133 : vector<1x32x64xbf16> to vector<32x64xbf16>
    %135 = arith.truncf %132 : vector<16x32xf32> to vector<16x32xbf16>
    %cst_58 = arith.constant dense<0.000000e+00> : vector<16x64xf32>
    %136 = tpu.matmul %135, %134, %cst_58 {dimension_numbers = #tpu.dot_dimension_numbers<[1], [0], [0], [1], [0, 0, 1, 1], [], []>} : vector<16x32xbf16>, vector<32x64xbf16>, vector<16x64xf32> -> vector<16x64xf32>
    %c0_59 = arith.constant 0 : index
    %c0_60 = arith.constant 0 : index
    %c0_61 = arith.constant 0 : index
    %137 = vector.load %arg15[%c0_59, %c0_60, %c0_61] : memref<2x1x64xf32, #tpu.memory_space<vmem>>, vector<1x1x64xf32>
    %138 = vector.shape_cast %137 : vector<1x1x64xf32> to vector<1x64xf32>
    %139 = vector.broadcast %138 : vector<1x64xf32> to vector<16x64xf32>
    %140 = arith.addf %136, %139 : vector<16x64xf32>
    %141 = arith.mulf %140, %140 : vector<16x64xf32>
    %142 = arith.mulf %140, %141 : vector<16x64xf32>
    %cst_62 = arith.constant 4.471500e-02 : f32
    %143 = vector.broadcast %cst_62 : f32 to vector<16x64xf32>
    %144 = arith.mulf %143, %142 : vector<16x64xf32>
    %145 = arith.addf %140, %144 : vector<16x64xf32>
    %cst_63 = arith.constant 0.797884583 : f32
    %146 = vector.broadcast %cst_63 : f32 to vector<16x64xf32>
    %147 = arith.mulf %146, %145 : vector<16x64xf32>
    %148 = math.tanh %147 : vector<16x64xf32>
    %cst_64 = arith.constant 1.000000e+00 : f32
    %149 = vector.broadcast %cst_64 : f32 to vector<16x64xf32>
    %150 = arith.addf %149, %148 : vector<16x64xf32>
    %cst_65 = arith.constant 5.000000e-01 : f32
    %151 = vector.broadcast %cst_65 : f32 to vector<16x64xf32>
    %152 = arith.mulf %151, %150 : vector<16x64xf32>
    %153 = arith.mulf %140, %152 : vector<16x64xf32>
    %c0_66 = arith.constant 0 : index
    %c0_67 = arith.constant 0 : index
    %c0_68 = arith.constant 0 : index
    %154 = vector.load %arg16[%c0_66, %c0_67, %c0_68] : memref<2x64x32xbf16, #tpu.memory_space<vmem>>, vector<1x64x32xbf16>
    %155 = vector.shape_cast %154 : vector<1x64x32xbf16> to vector<64x32xbf16>
    %156 = arith.truncf %153 : vector<16x64xf32> to vector<16x64xbf16>
    %cst_69 = arith.constant dense<0.000000e+00> : vector<16x32xf32>
    %157 = tpu.matmul %156, %155, %cst_69 {dimension_numbers = #tpu.dot_dimension_numbers<[1], [0], [0], [1], [0, 0, 1, 1], [], []>} : vector<16x64xbf16>, vector<64x32xbf16>, vector<16x32xf32> -> vector<16x32xf32>
    %c0_70 = arith.constant 0 : index
    %c0_71 = arith.constant 0 : index
    %c0_72 = arith.constant 0 : index
    %158 = vector.load %arg17[%c0_70, %c0_71, %c0_72] : memref<2x1x32xf32, #tpu.memory_space<vmem>>, vector<1x1x32xf32>
    %159 = vector.shape_cast %158 : vector<1x1x32xf32> to vector<1x32xf32>
    %160 = vector.broadcast %159 : vector<1x32xf32> to vector<16x32xf32>
    %161 = arith.addf %157, %160 : vector<16x32xf32>
    %162 = arith.addf %161, %132 : vector<16x32xf32>
    %c0_73 = arith.constant 0 : index
    %c0_74 = arith.constant 0 : index
    %c0_75 = arith.constant 0 : index
    %163 = vector.load %arg18[%c0_73, %c0_74, %c0_75] : memref<2x1x32xf32, #tpu.memory_space<vmem>>, vector<1x1x32xf32>
    %164 = vector.shape_cast %163 : vector<1x1x32xf32> to vector<1x32xf32>
    %c0_76 = arith.constant 0 : index
    %c0_77 = arith.constant 0 : index
    %c0_78 = arith.constant 0 : index
    %165 = vector.load %arg19[%c0_76, %c0_77, %c0_78] : memref<2x1x32xf32, #tpu.memory_space<vmem>>, vector<1x1x32xf32>
    %166 = vector.shape_cast %165 : vector<1x1x32xf32> to vector<1x32xf32>
    %cst_79 = arith.constant dense<0.000000e+00> : vector<16xf32>
    %167 = vector.multi_reduction <add>, %162, %cst_79 [1] : vector<16x32xf32> to vector<16xf32>
    %168 = vector.shape_cast %167 : vector<16xf32> to vector<16x1xf32>
    %cst_80 = arith.constant 3.200000e+01 : f32
    %169 = vector.broadcast %cst_80 : f32 to vector<16x1xf32>
    %170 = arith.divf %168, %169 : vector<16x1xf32>
    %171 = vector.broadcast %170 : vector<16x1xf32> to vector<16x32xf32>
    %172 = arith.subf %162, %171 : vector<16x32xf32>
    %173 = arith.mulf %172, %172 : vector<16x32xf32>
    %cst_81 = arith.constant dense<0.000000e+00> : vector<16xf32>
    %174 = vector.multi_reduction <add>, %173, %cst_81 [1] : vector<16x32xf32> to vector<16xf32>
    %175 = vector.shape_cast %174 : vector<16xf32> to vector<16x1xf32>
    %cst_82 = arith.constant 3.200000e+01 : f32
    %176 = vector.broadcast %cst_82 : f32 to vector<16x1xf32>
    %177 = arith.divf %175, %176 : vector<16x1xf32>
    %178 = vector.broadcast %170 : vector<16x1xf32> to vector<16x32xf32>
    %179 = arith.subf %162, %178 : vector<16x32xf32>
    %cst_83 = arith.constant 9.99999996E-13 : f32
    %180 = vector.broadcast %cst_83 : f32 to vector<16x1xf32>
    %181 = arith.addf %177, %180 : vector<16x1xf32>
    %182 = math.rsqrt %181 : vector<16x1xf32>
    %183 = vector.broadcast %182 : vector<16x1xf32> to vector<16x32xf32>
    %184 = arith.mulf %179, %183 : vector<16x32xf32>
    %185 = vector.broadcast %164 : vector<1x32xf32> to vector<16x32xf32>
    %186 = arith.mulf %184, %185 : vector<16x32xf32>
    %187 = vector.broadcast %166 : vector<1x32xf32> to vector<16x32xf32>
    %188 = arith.addf %186, %187 : vector<16x32xf32>
    %c1 = arith.constant 1 : index
    %c0_84 = arith.constant 0 : index
    %c0_85 = arith.constant 0 : index
    %189 = vector.load %arg8[%c1, %c0_84, %c0_85] : memref<2x32x96xbf16, #tpu.memory_space<vmem>>, vector<1x32x96xbf16>
    %190 = vector.shape_cast %189 : vector<1x32x96xbf16> to vector<32x96xbf16>
    %191 = arith.truncf %188 : vector<16x32xf32> to vector<16x32xbf16>
    %cst_86 = arith.constant dense<0.000000e+00> : vector<16x96xf32>
    %192 = tpu.matmul %191, %190, %cst_86 {dimension_numbers = #tpu.dot_dimension_numbers<[1], [0], [0], [1], [0, 0, 1, 1], [], []>} : vector<16x32xbf16>, vector<32x96xbf16>, vector<16x96xf32> -> vector<16x96xf32>
    %c1_87 = arith.constant 1 : index
    %c0_88 = arith.constant 0 : index
    %c0_89 = arith.constant 0 : index
    %193 = vector.load %arg9[%c1_87, %c0_88, %c0_89] : memref<2x1x96xf32, #tpu.memory_space<vmem>>, vector<1x1x96xf32>
    %194 = vector.shape_cast %193 : vector<1x1x96xf32> to vector<1x96xf32>
    %195 = vector.broadcast %194 : vector<1x96xf32> to vector<16x96xf32>
    %196 = arith.addf %192, %195 : vector<16x96xf32>
    %197 = vector.shape_cast %196 : vector<16x96xf32> to vector<2x8x96xf32>
    %198 = arith.truncf %197 : vector<2x8x96xf32> to vector<2x8x96xbf16>
    %199 = vector.extract_strided_slice %198 {offsets = [0, 0, 0], sizes = [2, 8, 16], strides = [1, 1, 1]} : vector<2x8x96xbf16> to vector<2x8x16xbf16>
    %200 = vector.extract_strided_slice %198 {offsets = [0, 0, 32], sizes = [2, 8, 16], strides = [1, 1, 1]} : vector<2x8x96xbf16> to vector<2x8x16xbf16>
    %201 = vector.extract_strided_slice %198 {offsets = [0, 0, 64], sizes = [2, 8, 16], strides = [1, 1, 1]} : vector<2x8x96xbf16> to vector<2x8x16xbf16>
    "tpu.trace_start"() <{level = 10 : i32, message = "bqd,bkd->bqk"}> : () -> ()
    %cst_90 = arith.constant dense<0.000000e+00> : vector<2x8x8xf32>
    %202 = tpu.matmul %199, %200, %cst_90 {dimension_numbers = #tpu.dot_dimension_numbers<[2], [2], [1], [1], [0, 0, 0, 1, 1, 1], [0], [0]>} : vector<2x8x16xbf16>, vector<2x8x16xbf16>, vector<2x8x8xf32> -> vector<2x8x8xf32>
    "tpu.trace_stop"() : () -> ()
    %203 = vector.broadcast %8 : vector<2x1x8xf32> to vector<2x8x8xf32>
    %204 = arith.addf %202, %203 : vector<2x8x8xf32>
    %cst_91 = arith.constant dense<0xFF800000> : vector<2x8xf32>
    %205 = vector.multi_reduction <maximumf>, %204, %cst_91 [2] : vector<2x8x8xf32> to vector<2x8xf32>
    %206 = vector.shape_cast %205 : vector<2x8xf32> to vector<2x8x1xf32>
    %207 = vector.broadcast %206 : vector<2x8x1xf32> to vector<2x8x8xf32>
    %208 = arith.subf %204, %207 : vector<2x8x8xf32>
    %209 = math.exp %208 : vector<2x8x8xf32>
    %cst_92 = arith.constant dense<0.000000e+00> : vector<2x8xf32>
    %210 = vector.multi_reduction <add>, %209, %cst_92 [2] : vector<2x8x8xf32> to vector<2x8xf32>
    %211 = vector.shape_cast %210 : vector<2x8xf32> to vector<2x8x1xf32>
    %212 = tpu.reciprocal %211 {approx = true} : vector<2x8x1xf32> -> vector<2x8x1xf32>
    %213 = vector.broadcast %212 : vector<2x8x1xf32> to vector<2x8x8xf32>
    %214 = arith.mulf %209, %213 : vector<2x8x8xf32>
    %215 = arith.truncf %214 : vector<2x8x8xf32> to vector<2x8x8xbf16>
    "tpu.trace_start"() <{level = 10 : i32, message = "bqk,bkd->bqd"}> : () -> ()
    %cst_93 = arith.constant dense<0.000000e+00> : vector<2x8x16xf32>
    %216 = tpu.matmul %215, %201, %cst_93 {dimension_numbers = #tpu.dot_dimension_numbers<[2], [1], [1], [2], [0, 0, 0, 1, 1, 2], [0], [0]>} : vector<2x8x8xbf16>, vector<2x8x16xbf16>, vector<2x8x16xf32> -> vector<2x8x16xf32>
    "tpu.trace_stop"() : () -> ()
    %217 = vector.extract_strided_slice %198 {offsets = [0, 0, 16], sizes = [2, 8, 16], strides = [1, 1, 1]} : vector<2x8x96xbf16> to vector<2x8x16xbf16>
    %218 = vector.extract_strided_slice %198 {offsets = [0, 0, 48], sizes = [2, 8, 16], strides = [1, 1, 1]} : vector<2x8x96xbf16> to vector<2x8x16xbf16>
    %219 = vector.extract_strided_slice %198 {offsets = [0, 0, 80], sizes = [2, 8, 16], strides = [1, 1, 1]} : vector<2x8x96xbf16> to vector<2x8x16xbf16>
    "tpu.trace_start"() <{level = 10 : i32, message = "bqd,bkd->bqk"}> : () -> ()
    %cst_94 = arith.constant dense<0.000000e+00> : vector<2x8x8xf32>
    %220 = tpu.matmul %217, %218, %cst_94 {dimension_numbers = #tpu.dot_dimension_numbers<[2], [2], [1], [1], [0, 0, 0, 1, 1, 1], [0], [0]>} : vector<2x8x16xbf16>, vector<2x8x16xbf16>, vector<2x8x8xf32> -> vector<2x8x8xf32>
    "tpu.trace_stop"() : () -> ()
    %221 = vector.broadcast %8 : vector<2x1x8xf32> to vector<2x8x8xf32>
    %222 = arith.addf %220, %221 : vector<2x8x8xf32>
    %cst_95 = arith.constant dense<0xFF800000> : vector<2x8xf32>
    %223 = vector.multi_reduction <maximumf>, %222, %cst_95 [2] : vector<2x8x8xf32> to vector<2x8xf32>
    %224 = vector.shape_cast %223 : vector<2x8xf32> to vector<2x8x1xf32>
    %225 = vector.broadcast %224 : vector<2x8x1xf32> to vector<2x8x8xf32>
    %226 = arith.subf %222, %225 : vector<2x8x8xf32>
    %227 = math.exp %226 : vector<2x8x8xf32>
    %cst_96 = arith.constant dense<0.000000e+00> : vector<2x8xf32>
    %228 = vector.multi_reduction <add>, %227, %cst_96 [2] : vector<2x8x8xf32> to vector<2x8xf32>
    %229 = vector.shape_cast %228 : vector<2x8xf32> to vector<2x8x1xf32>
    %230 = tpu.reciprocal %229 {approx = true} : vector<2x8x1xf32> -> vector<2x8x1xf32>
    %231 = vector.broadcast %230 : vector<2x8x1xf32> to vector<2x8x8xf32>
    %232 = arith.mulf %227, %231 : vector<2x8x8xf32>
    %233 = arith.truncf %232 : vector<2x8x8xf32> to vector<2x8x8xbf16>
    "tpu.trace_start"() <{level = 10 : i32, message = "bqk,bkd->bqd"}> : () -> ()
    %cst_97 = arith.constant dense<0.000000e+00> : vector<2x8x16xf32>
    %234 = tpu.matmul %233, %219, %cst_97 {dimension_numbers = #tpu.dot_dimension_numbers<[2], [1], [1], [2], [0, 0, 0, 1, 1, 2], [0], [0]>} : vector<2x8x8xbf16>, vector<2x8x16xbf16>, vector<2x8x16xf32> -> vector<2x8x16xf32>
    "tpu.trace_stop"() : () -> ()
    %235 = tpu.concatenate %216, %234 in 2 : vector<2x8x16xf32>, vector<2x8x16xf32> -> vector<2x8x32xf32>
    %236 = vector.shape_cast %235 : vector<2x8x32xf32> to vector<16x32xf32>
    %c1_98 = arith.constant 1 : index
    %c0_99 = arith.constant 0 : index
    %c0_100 = arith.constant 0 : index
    %237 = vector.load %arg10[%c1_98, %c0_99, %c0_100] : memref<2x32x32xbf16, #tpu.memory_space<vmem>>, vector<1x32x32xbf16>
    %238 = vector.shape_cast %237 : vector<1x32x32xbf16> to vector<32x32xbf16>
    %239 = arith.truncf %236 : vector<16x32xf32> to vector<16x32xbf16>
    %cst_101 = arith.constant dense<0.000000e+00> : vector<16x32xf32>
    %240 = tpu.matmul %239, %238, %cst_101 {dimension_numbers = #tpu.dot_dimension_numbers<[1], [0], [0], [1], [0, 0, 1, 1], [], []>} : vector<16x32xbf16>, vector<32x32xbf16>, vector<16x32xf32> -> vector<16x32xf32>
    %c1_102 = arith.constant 1 : index
    %c0_103 = arith.constant 0 : index
    %c0_104 = arith.constant 0 : index
    %241 = vector.load %arg11[%c1_102, %c0_103, %c0_104] : memref<2x1x32xf32, #tpu.memory_space<vmem>>, vector<1x1x32xf32>
    %242 = vector.shape_cast %241 : vector<1x1x32xf32> to vector<1x32xf32>
    %243 = vector.broadcast %242 : vector<1x32xf32> to vector<16x32xf32>
    %244 = arith.addf %240, %243 : vector<16x32xf32>
    %245 = arith.addf %244, %188 : vector<16x32xf32>
    %c1_105 = arith.constant 1 : index
    %c0_106 = arith.constant 0 : index
    %c0_107 = arith.constant 0 : index
    %246 = vector.load %arg12[%c1_105, %c0_106, %c0_107] : memref<2x1x32xf32, #tpu.memory_space<vmem>>, vector<1x1x32xf32>
    %247 = vector.shape_cast %246 : vector<1x1x32xf32> to vector<1x32xf32>
    %c1_108 = arith.constant 1 : index
    %c0_109 = arith.constant 0 : index
    %c0_110 = arith.constant 0 : index
    %248 = vector.load %arg13[%c1_108, %c0_109, %c0_110] : memref<2x1x32xf32, #tpu.memory_space<vmem>>, vector<1x1x32xf32>
    %249 = vector.shape_cast %248 : vector<1x1x32xf32> to vector<1x32xf32>
    %cst_111 = arith.constant dense<0.000000e+00> : vector<16xf32>
    %250 = vector.multi_reduction <add>, %245, %cst_111 [1] : vector<16x32xf32> to vector<16xf32>
    %251 = vector.shape_cast %250 : vector<16xf32> to vector<16x1xf32>
    %cst_112 = arith.constant 3.200000e+01 : f32
    %252 = vector.broadcast %cst_112 : f32 to vector<16x1xf32>
    %253 = arith.divf %251, %252 : vector<16x1xf32>
    %254 = vector.broadcast %253 : vector<16x1xf32> to vector<16x32xf32>
    %255 = arith.subf %245, %254 : vector<16x32xf32>
    %256 = arith.mulf %255, %255 : vector<16x32xf32>
    %cst_113 = arith.constant dense<0.000000e+00> : vector<16xf32>
    %257 = vector.multi_reduction <add>, %256, %cst_113 [1] : vector<16x32xf32> to vector<16xf32>
    %258 = vector.shape_cast %257 : vector<16xf32> to vector<16x1xf32>
    %cst_114 = arith.constant 3.200000e+01 : f32
    %259 = vector.broadcast %cst_114 : f32 to vector<16x1xf32>
    %260 = arith.divf %258, %259 : vector<16x1xf32>
    %261 = vector.broadcast %253 : vector<16x1xf32> to vector<16x32xf32>
    %262 = arith.subf %245, %261 : vector<16x32xf32>
    %cst_115 = arith.constant 9.99999996E-13 : f32
    %263 = vector.broadcast %cst_115 : f32 to vector<16x1xf32>
    %264 = arith.addf %260, %263 : vector<16x1xf32>
    %265 = math.rsqrt %264 : vector<16x1xf32>
    %266 = vector.broadcast %265 : vector<16x1xf32> to vector<16x32xf32>
    %267 = arith.mulf %262, %266 : vector<16x32xf32>
    %268 = vector.broadcast %247 : vector<1x32xf32> to vector<16x32xf32>
    %269 = arith.mulf %267, %268 : vector<16x32xf32>
    %270 = vector.broadcast %249 : vector<1x32xf32> to vector<16x32xf32>
    %271 = arith.addf %269, %270 : vector<16x32xf32>
    %c1_116 = arith.constant 1 : index
    %c0_117 = arith.constant 0 : index
    %c0_118 = arith.constant 0 : index
    %272 = vector.load %arg14[%c1_116, %c0_117, %c0_118] : memref<2x32x64xbf16, #tpu.memory_space<vmem>>, vector<1x32x64xbf16>
    %273 = vector.shape_cast %272 : vector<1x32x64xbf16> to vector<32x64xbf16>
    %274 = arith.truncf %271 : vector<16x32xf32> to vector<16x32xbf16>
    %cst_119 = arith.constant dense<0.000000e+00> : vector<16x64xf32>
    %275 = tpu.matmul %274, %273, %cst_119 {dimension_numbers = #tpu.dot_dimension_numbers<[1], [0], [0], [1], [0, 0, 1, 1], [], []>} : vector<16x32xbf16>, vector<32x64xbf16>, vector<16x64xf32> -> vector<16x64xf32>
    %c1_120 = arith.constant 1 : index
    %c0_121 = arith.constant 0 : index
    %c0_122 = arith.constant 0 : index
    %276 = vector.load %arg15[%c1_120, %c0_121, %c0_122] : memref<2x1x64xf32, #tpu.memory_space<vmem>>, vector<1x1x64xf32>
    %277 = vector.shape_cast %276 : vector<1x1x64xf32> to vector<1x64xf32>
    %278 = vector.broadcast %277 : vector<1x64xf32> to vector<16x64xf32>
    %279 = arith.addf %275, %278 : vector<16x64xf32>
    %280 = arith.mulf %279, %279 : vector<16x64xf32>
    %281 = arith.mulf %279, %280 : vector<16x64xf32>
    %cst_123 = arith.constant 4.471500e-02 : f32
    %282 = vector.broadcast %cst_123 : f32 to vector<16x64xf32>
    %283 = arith.mulf %282, %281 : vector<16x64xf32>
    %284 = arith.addf %279, %283 : vector<16x64xf32>
    %cst_124 = arith.constant 0.797884583 : f32
    %285 = vector.broadcast %cst_124 : f32 to vector<16x64xf32>
    %286 = arith.mulf %285, %284 : vector<16x64xf32>
    %287 = math.tanh %286 : vector<16x64xf32>
    %cst_125 = arith.constant 1.000000e+00 : f32
    %288 = vector.broadcast %cst_125 : f32 to vector<16x64xf32>
    %289 = arith.addf %288, %287 : vector<16x64xf32>
    %cst_126 = arith.constant 5.000000e-01 : f32
    %290 = vector.broadcast %cst_126 : f32 to vector<16x64xf32>
    %291 = arith.mulf %290, %289 : vector<16x64xf32>
    %292 = arith.mulf %279, %291 : vector<16x64xf32>
    %c1_127 = arith.constant 1 : index
    %c0_128 = arith.constant 0 : index
    %c0_129 = arith.constant 0 : index
    %293 = vector.load %arg16[%c1_127, %c0_128, %c0_129] : memref<2x64x32xbf16, #tpu.memory_space<vmem>>, vector<1x64x32xbf16>
    %294 = vector.shape_cast %293 : vector<1x64x32xbf16> to vector<64x32xbf16>
    %295 = arith.truncf %292 : vector<16x64xf32> to vector<16x64xbf16>
    %cst_130 = arith.constant dense<0.000000e+00> : vector<16x32xf32>
    %296 = tpu.matmul %295, %294, %cst_130 {dimension_numbers = #tpu.dot_dimension_numbers<[1], [0], [0], [1], [0, 0, 1, 1], [], []>} : vector<16x64xbf16>, vector<64x32xbf16>, vector<16x32xf32> -> vector<16x32xf32>
    %c1_131 = arith.constant 1 : index
    %c0_132 = arith.constant 0 : index
    %c0_133 = arith.constant 0 : index
    %297 = vector.load %arg17[%c1_131, %c0_132, %c0_133] : memref<2x1x32xf32, #tpu.memory_space<vmem>>, vector<1x1x32xf32>
    %298 = vector.shape_cast %297 : vector<1x1x32xf32> to vector<1x32xf32>
    %299 = vector.broadcast %298 : vector<1x32xf32> to vector<16x32xf32>
    %300 = arith.addf %296, %299 : vector<16x32xf32>
    %301 = arith.addf %300, %271 : vector<16x32xf32>
    %c1_134 = arith.constant 1 : index
    %c0_135 = arith.constant 0 : index
    %c0_136 = arith.constant 0 : index
    %302 = vector.load %arg18[%c1_134, %c0_135, %c0_136] : memref<2x1x32xf32, #tpu.memory_space<vmem>>, vector<1x1x32xf32>
    %303 = vector.shape_cast %302 : vector<1x1x32xf32> to vector<1x32xf32>
    %c1_137 = arith.constant 1 : index
    %c0_138 = arith.constant 0 : index
    %c0_139 = arith.constant 0 : index
    %304 = vector.load %arg19[%c1_137, %c0_138, %c0_139] : memref<2x1x32xf32, #tpu.memory_space<vmem>>, vector<1x1x32xf32>
    %305 = vector.shape_cast %304 : vector<1x1x32xf32> to vector<1x32xf32>
    %cst_140 = arith.constant dense<0.000000e+00> : vector<16xf32>
    %306 = vector.multi_reduction <add>, %301, %cst_140 [1] : vector<16x32xf32> to vector<16xf32>
    %307 = vector.shape_cast %306 : vector<16xf32> to vector<16x1xf32>
    %cst_141 = arith.constant 3.200000e+01 : f32
    %308 = vector.broadcast %cst_141 : f32 to vector<16x1xf32>
    %309 = arith.divf %307, %308 : vector<16x1xf32>
    %310 = vector.broadcast %309 : vector<16x1xf32> to vector<16x32xf32>
    %311 = arith.subf %301, %310 : vector<16x32xf32>
    %312 = arith.mulf %311, %311 : vector<16x32xf32>
    %cst_142 = arith.constant dense<0.000000e+00> : vector<16xf32>
    %313 = vector.multi_reduction <add>, %312, %cst_142 [1] : vector<16x32xf32> to vector<16xf32>
    %314 = vector.shape_cast %313 : vector<16xf32> to vector<16x1xf32>
    %cst_143 = arith.constant 3.200000e+01 : f32
    %315 = vector.broadcast %cst_143 : f32 to vector<16x1xf32>
    %316 = arith.divf %314, %315 : vector<16x1xf32>
    %317 = vector.broadcast %309 : vector<16x1xf32> to vector<16x32xf32>
    %318 = arith.subf %301, %317 : vector<16x32xf32>
    %cst_144 = arith.constant 9.99999996E-13 : f32
    %319 = vector.broadcast %cst_144 : f32 to vector<16x1xf32>
    %320 = arith.addf %316, %319 : vector<16x1xf32>
    %321 = math.rsqrt %320 : vector<16x1xf32>
    %322 = vector.broadcast %321 : vector<16x1xf32> to vector<16x32xf32>
    %323 = arith.mulf %318, %322 : vector<16x32xf32>
    %324 = vector.broadcast %303 : vector<1x32xf32> to vector<16x32xf32>
    %325 = arith.mulf %323, %324 : vector<16x32xf32>
    %326 = vector.broadcast %305 : vector<1x32xf32> to vector<16x32xf32>
    %327 = arith.addf %325, %326 : vector<16x32xf32>
    %328 = vector.shape_cast %327 : vector<16x32xf32> to vector<2x8x32xf32>
    %329 = vector.extract_strided_slice %328 {offsets = [0, 0, 0], sizes = [2, 1, 32], strides = [1, 1, 1]} : vector<2x8x32xf32> to vector<2x1x32xf32>
    %330 = vector.shape_cast %329 : vector<2x1x32xf32> to vector<2x32xf32>
    %331 = vector.shape_cast %330 : vector<2x32xf32> to vector<1x2x32xf32>
    %c0_145 = arith.constant 0 : index
    %c0_146 = arith.constant 0 : index
    %c0_147 = arith.constant 0 : index
    %332 = vector.load %arg20[%c0_145, %c0_146, %c0_147] : memref<1x2x32xf32, #tpu.memory_space<vmem>>, vector<1x2x32xf32>
    tpu.vector_store %arg20[%c0_145, %c0_146, %c0_147], %331 {strides = array<i32>} : memref<1x2x32xf32, #tpu.memory_space<vmem>>, vector<1x2x32xf32>,
    return
  }
  func.func @transform_0(%arg0: i32) -> (i32, i32, i32) {
    %c0_i32 = arith.constant 0 : i32
    %c0_i32_0 = arith.constant 0 : i32
    %c0_i32_1 = arith.constant 0 : i32
    return %arg0, %c0_i32, %c0_i32_0 : i32, i32, i32
  }
  func.func @transform_1(%arg0: i32) -> (i32, i32, i32) {
    %c0_i32 = arith.constant 0 : i32
    %c0_i32_0 = arith.constant 0 : i32
    %c0_i32_1 = arith.constant 0 : i32
    return %arg0, %c0_i32, %c0_i32_0 : i32, i32, i32
  }
  func.func @transform_2(%arg0: i32) -> (i32, i32) {
    %c0_i32 = arith.constant 0 : i32
    %c0_i32_0 = arith.constant 0 : i32
    %c0_i32_1 = arith.constant 0 : i32
    return %c0_i32, %c0_i32_0 : i32, i32
  }
  func.func @transform_3(%arg0: i32) -> (i32, i32) {
    %c0_i32 = arith.constant 0 : i32
    %c0_i32_0 = arith.constant 0 : i32
    %c0_i32_1 = arith.constant 0 : i32
    return %c0_i32, %c0_i32_0 : i32, i32
  }
  func.func @transform_4(%arg0: i32) -> (i32, i32) {
    %c0_i32 = arith.constant 0 : i32
    %c0_i32_0 = arith.constant 0 : i32
    %c0_i32_1 = arith.constant 0 : i32
    return %c0_i32, %c0_i32_0 : i32, i32
  }
  func.func @transform_5(%arg0: i32) -> (i32, i32) {
    %c0_i32 = arith.constant 0 : i32
    %c0_i32_0 = arith.constant 0 : i32
    %c0_i32_1 = arith.constant 0 : i32
    return %c0_i32, %c0_i32_0 : i32, i32
  }
  func.func @transform_6(%arg0: i32) -> (i32, i32) {
    %c0_i32 = arith.constant 0 : i32
    %c0_i32_0 = arith.constant 0 : i32
    %c0_i32_1 = arith.constant 0 : i32
    return %c0_i32, %c0_i32_0 : i32, i32
  }
  func.func @transform_7(%arg0: i32) -> (i32, i32, i32) {
    %c0_i32 = arith.constant 0 : i32
    %c0_i32_0 = arith.constant 0 : i32
    %c0_i32_1 = arith.constant 0 : i32
    %c0_i32_2 = arith.constant 0 : i32
    return %c0_i32, %c0_i32_0, %c0_i32_1 : i32, i32, i32
  }
  func.func @transform_8(%arg0: i32) -> (i32, i32, i32) {
    %c0_i32 = arith.constant 0 : i32
    %c0_i32_0 = arith.constant 0 : i32
    %c0_i32_1 = arith.constant 0 : i32
    %c0_i32_2 = arith.constant 0 : i32
    return %c0_i32, %c0_i32_0, %c0_i32_1 : i32, i32, i32
  }
  func.func @transform_9(%arg0: i32) -> (i32, i32, i32) {
    %c0_i32 = arith.constant 0 : i32
    %c0_i32_0 = arith.constant 0 : i32
    %c0_i32_1 = arith.constant 0 : i32
    %c0_i32_2 = arith.constant 0 : i32
    return %c0_i32, %c0_i32_0, %c0_i32_1 : i32, i32, i32
  }
  func.func @transform_10(%arg0: i32) -> (i32, i32, i32) {
    %c0_i32 = arith.constant 0 : i32
    %c0_i32_0 = arith.constant 0 : i32
    %c0_i32_1 = arith.constant 0 : i32
    %c0_i32_2 = arith.constant 0 : i32
    return %c0_i32, %c0_i32_0, %c0_i32_1 : i32, i32, i32
  }
  func.func @transform_11(%arg0: i32) -> (i32, i32, i32) {
    %c0_i32 = arith.constant 0 : i32
    %c0_i32_0 = arith.constant 0 : i32
    %c0_i32_1 = arith.constant 0 : i32
    %c0_i32_2 = arith.constant 0 : i32
    return %c0_i32, %c0_i32_0, %c0_i32_1 : i32, i32, i32
  }
  func.func @transform_12(%arg0: i32) -> (i32, i32, i32) {
    %c0_i32 = arith.constant 0 : i32
    %c0_i32_0 = arith.constant 0 : i32
    %c0_i32_1 = arith.constant 0 : i32
    %c0_i32_2 = arith.constant 0 : i32
    return %c0_i32, %c0_i32_0, %c0_i32_1 : i32, i32, i32
  }
  func.func @transform_13(%arg0: i32) -> (i32, i32, i32) {
    %c0_i32 = arith.constant 0 : i32
    %c0_i32_0 = arith.constant 0 : i32
    %c0_i32_1 = arith.constant 0 : i32
    %c0_i32_2 = arith.constant 0 : i32
    return %c0_i32, %c0_i32_0, %c0_i32_1 : i32, i32, i32
  }
  func.func @transform_14(%arg0: i32) -> (i32, i32, i32) {
    %c0_i32 = arith.constant 0 : i32
    %c0_i32_0 = arith.constant 0 : i32
    %c0_i32_1 = arith.constant 0 : i32
    %c0_i32_2 = arith.constant 0 : i32
    return %c0_i32, %c0_i32_0, %c0_i32_1 : i32, i32, i32
  }
  func.func @transform_15(%arg0: i32) -> (i32, i32, i32) {
    %c0_i32 = arith.constant 0 : i32
    %c0_i32_0 = arith.constant 0 : i32
    %c0_i32_1 = arith.constant 0 : i32
    %c0_i32_2 = arith.constant 0 : i32
    return %c0_i32, %c0_i32_0, %c0_i32_1 : i32, i32, i32
  }
  func.func @transform_16(%arg0: i32) -> (i32, i32, i32) {
    %c0_i32 = arith.constant 0 : i32
    %c0_i32_0 = arith.constant 0 : i32
    %c0_i32_1 = arith.constant 0 : i32
    %c0_i32_2 = arith.constant 0 : i32
    return %c0_i32, %c0_i32_0, %c0_i32_1 : i32, i32, i32
  }
  func.func @transform_17(%arg0: i32) -> (i32, i32, i32) {
    %c0_i32 = arith.constant 0 : i32
    %c0_i32_0 = arith.constant 0 : i32
    %c0_i32_1 = arith.constant 0 : i32
    %c0_i32_2 = arith.constant 0 : i32
    return %c0_i32, %c0_i32_0, %c0_i32_1 : i32, i32, i32
  }
  func.func @transform_18(%arg0: i32) -> (i32, i32, i32) {
    %c0_i32 = arith.constant 0 : i32
    %c0_i32_0 = arith.constant 0 : i32
    %c0_i32_1 = arith.constant 0 : i32
    %c0_i32_2 = arith.constant 0 : i32
    return %c0_i32, %c0_i32_0, %c0_i32_1 : i32, i32, i32
  }
  func.func @transform_19(%arg0: i32) -> (i32, i32, i32) {
    %c0_i32 = arith.constant 0 : i32
    %c0_i32_0 = arith.constant 0 : i32
    %c0_i32_1 = arith.constant 0 : i32
    return %arg0, %c0_i32, %c0_i32_0 : i32, i32, i32
  }
}

</mosaic_0001>

<llo_original>
// kernel: bert_encode_pooled.1
$region0: #{bert_encode_pooled.1}
  #allocation0 [shape = 'u32[]', space=smem, size = 0x4, offset = 0x4, fixed_abs, tag = 'smem constant byte address 0x4 - core index']
  #allocation1 [shape = 'u32[144,128]{1,0:T(1,128)}', space=vmem, size = 0x12000, scoped, tag = 'internal scratch']
  %s0 = inlined_call_operand.vmem [shape: s32[2,16,1], index: 0, kind: input, shape index: {}]
  %s1 = inlined_call_operand.vmem [shape: f32[2,2,8], index: 1, kind: input, shape index: {}]
  %s2 = inlined_call_operand.vmem [shape: f32[64,32], index: 2, kind: input, shape index: {}]
  %s3 = inlined_call_operand.vmem [shape: f32[8,32], index: 3, kind: input, shape index: {}]
  %s4 = inlined_call_operand.vmem [shape: f32[1,32], index: 4, kind: input, shape index: {}]
  %s5 = inlined_call_operand.vmem [shape: f32[1,32], index: 5, kind: input, shape index: {}]
  %s6 = inlined_call_operand.vmem [shape: f32[1,32], index: 6, kind: input, shape index: {}]
  %s7 = inlined_call_operand.vmem [shape: bf16[2,32,96], index: 7, kind: input, shape index: {}]
  %s8 = inlined_call_operand.vmem [shape: f32[2,1,96], index: 8, kind: input, shape index: {}]
  %s9 = inlined_call_operand.vmem [shape: bf16[2,32,32], index: 9, kind: input, shape index: {}]
  %s10 = inlined_call_operand.vmem [shape: f32[2,1,32], index: 10, kind: input, shape index: {}]
  %s11 = inlined_call_operand.vmem [shape: f32[2,1,32], index: 11, kind: input, shape index: {}]
  %s12 = inlined_call_operand.vmem [shape: f32[2,1,32], index: 12, kind: input, shape index: {}]
  %s13 = inlined_call_operand.vmem [shape: bf16[2,32,64], index: 13, kind: input, shape index: {}]
  %s14 = inlined_call_operand.vmem [shape: f32[2,1,64], index: 14, kind: input, shape index: {}]
  %s15 = inlined_call_operand.vmem [shape: bf16[2,64,32], index: 15, kind: input, shape index: {}]
  %s16 = inlined_call_operand.vmem [shape: f32[2,1,32], index: 16, kind: input, shape index: {}]
  %s17 = inlined_call_operand.vmem [shape: f32[2,1,32], index: 17, kind: input, shape index: {}]
  %s18 = inlined_call_operand.vmem [shape: f32[2,1,32], index: 18, kind: input, shape index: {}]
  %s19 = inlined_call_operand.hbm [shape: f32[2,2,32], index: 19, kind: output, shape index: {}]
  %s20 = sld [smem:[#allocation0]]
  $region109: #{bert_encode_pooled.1} parent=0
    _
  %s22 = ssub.s32 1, %s20
  %s23 = scalar_select 0, %s22, %s20
  $region1: #{bert_encode_pooled.1} parent=0
    #allocation2 [shape = 'u8[2048]{0}', space=vmem, size = 0x800, scoped, tag = 'output window, operand 0']
    #allocation3 [shape = 's32[2]{0}', space=sflag, size = 0x8, scoped, tag = 'scoped memory for bert_encode_pooled.1']
    %24 = vsyncpa [#allocation3], 0
    %s25 = scalar_lea.sflag [#allocation3], 1
    %26 = vsyncpa %s25, 0
    loop: start=0, step=1, limit=4
    $region2: #{bert_encode_pooled.1} parent=1 // loop_pre_header
      _
    $region3: #{bert_encode_pooled.1} parent=1 // loop_header
      %s28 = sphi 0, %s32
      %p29 = scmp.ge.s32.totalorder %s28, 4
      %s38 = sphi 0, %s40
      %s41 = sphi 0, %s38
      %s42 = sphi 0, %s41
      %s58 = sphi 0, %s42
      %s64 = sphi 0, %s66
      %s67 = sphi 0, %s64
      %s68 = sphi 0, %s67
      %s84 = sphi 0, %s68
      %s88 = sphi 0, %s88
      %s90 = sphi 0, %s88
      %s91 = sphi 0, %s90
      %s105 = sphi 0, %s91
      %s109 = sphi 0, %s109
      %s111 = sphi 0, %s109
      %s112 = sphi 0, %s111
      %s126 = sphi 0, %s112
      %s130 = sphi 0, %s130
      %s132 = sphi 0, %s130
      %s133 = sphi 0, %s132
      %s147 = sphi 0, %s133
      %s151 = sphi 0, %s151
      %s153 = sphi 0, %s151
      %s154 = sphi 0, %s153
      %s168 = sphi 0, %s154
      %s172 = sphi 0, %s172
      %s174 = sphi 0, %s172
      %s175 = sphi 0, %s174
      %s189 = sphi 0, %s175
      %s193 = sphi 0, %s193
      %s195 = sphi 0, %s193
      %s196 = sphi 0, %s195
      %s210 = sphi 0, %s196
      %s214 = sphi 0, %s214
      %s216 = sphi 0, %s214
      %s217 = sphi 0, %s216
      %s231 = sphi 0, %s217
      %s235 = sphi 0, %s235
      %s237 = sphi 0, %s235
      %s238 = sphi 0, %s237
      %s252 = sphi 0, %s238
      %s256 = sphi 0, %s256
      %s258 = sphi 0, %s256
      %s259 = sphi 0, %s258
      %s273 = sphi 0, %s259
      %s277 = sphi 0, %s277
      %s279 = sphi 0, %s277
      %s280 = sphi 0, %s279
      %s294 = sphi 0, %s280
      %s298 = sphi 0, %s298
      %s300 = sphi 0, %s298
      %s301 = sphi 0, %s300
      %s315 = sphi 0, %s301
      %s319 = sphi 0, %s319
      %s321 = sphi 0, %s319
      %s322 = sphi 0, %s321
      %s336 = sphi 0, %s322
      %s340 = sphi 0, %s340
      %s342 = sphi 0, %s340
      %s343 = sphi 0, %s342
      %s357 = sphi 0, %s343
      %s361 = sphi 0, %s361
      %s363 = sphi 0, %s361
      %s364 = sphi 0, %s363
      %s378 = sphi 0, %s364
      %s382 = sphi 0, %s382
      %s384 = sphi 0, %s382
      %s385 = sphi 0, %s384
      %s399 = sphi 0, %s385
      %s403 = sphi 0, %s403
      %s405 = sphi 0, %s403
      %s406 = sphi 0, %s405
      %s420 = sphi 0, %s406
      %s424 = sphi 0, %s424
      %s426 = sphi 0, %s424
      %s427 = sphi 0, %s426
      %s441 = sphi 0, %s427
      %s447 = sphi 0, %s449
      %s450 = sphi 0, %s447
      %s451 = sphi 0, %s450
      %s467 = sphi 0, %s451
    $region4: #{bert_encode_pooled.1} parent=1 // loop_header_branch
      %31 = sbr.rel (%p29) target = $region8
    $region5: #{bert_encode_pooled.1} parent=1 // loop_body
      %s33 = ssub.s32 %s28, 1
      %s34 = ssub.s32 %s28, 2
      %s35 = sadd.s32 %s28, 1
      %s36 = ssub.s32 %s28, %s35
      %p37 = scmp.eq.s32.totalorder %s36, 0
      %s39 = sadd.s32 %s38, 1
      %s40 = scalar_select %p37, %s38, %s39
      %p43 = pneg %p37
      %p44 = scmp.eq.s32.totalorder %s28, 1
      %p45 = por %p43, %p44
      %p46 = scmp.ne.s32.totalorder %s38, %s41
      %p47 = scmp.eq.s32.totalorder %s28, 0
      %p48 = por %p46, %p47
      %p49 = scmp.ne.s32.totalorder %s38, %s41
      %p50 = scmp.eq.s32.totalorder %s33, 1
      %p51 = por %p49, %p50
      %p52 = scmp.ne.s32.totalorder %s41, %s42
      %p53 = scmp.eq.s32.totalorder %s33, 0
      %p54 = por %p52, %p53
      %p55 = scmp.ne.s32.totalorder %s41, %s42
      %p56 = scmp.eq.s32.totalorder %s34, 1
      %p57 = por %p55, %p56
      %p59 = scmp.ne.s32.totalorder %s42, %s58
      %p60 = scmp.eq.s32.totalorder %s34, 0
      %p61 = por %p59, %p60
      %s62 = ssub.s32 %s28, %s35
      %p63 = scmp.eq.s32.totalorder %s62, 0
      %s65 = sadd.s32 %s64, 1
      %s66 = scalar_select %p63, %s64, %s65
      %p69 = pneg %p63
      %p70 = scmp.eq.s32.totalorder %s28, 1
      %p71 = por %p69, %p70
      %p72 = scmp.ne.s32.totalorder %s64, %s67
      %p73 = scmp.eq.s32.totalorder %s28, 0
      %p74 = por %p72, %p73
      %p75 = scmp.ne.s32.totalorder %s64, %s67
      %p76 = scmp.eq.s32.totalorder %s33, 1
      %p77 = por %p75, %p76
      %p78 = scmp.ne.s32.totalorder %s67, %s68
      %p79 = scmp.eq.s32.totalorder %s33, 0
      %p80 = por %p78, %p79
      %p81 = scmp.ne.s32.totalorder %s67, %s68
      %p82 = scmp.eq.s32.totalorder %s34, 1
      %p83 = por %p81, %p82
      %p85 = scmp.ne.s32.totalorder %s68, %s84
      %p86 = scmp.eq.s32.totalorder %s34, 0
      %p87 = por %p85, %p86
      %s89 = sadd.s32 %s88, 1
      %p92 = scmp.eq.s32.totalorder %s28, 1
      %p93 = scmp.ne.s32.totalorder %s88, %s90
      %p94 = scmp.eq.s32.totalorder %s28, 0
      %p95 = por %p93, %p94
      %p96 = scmp.ne.s32.totalorder %s88, %s90
      %p97 = scmp.eq.s32.totalorder %s33, 1
      %p98 = por %p96, %p97
      %p99 = scmp.ne.s32.totalorder %s90, %s91
      %p100 = scmp.eq.s32.totalorder %s33, 0
      %p101 = por %p99, %p100
      %p102 = scmp.ne.s32.totalorder %s90, %s91
      %p103 = scmp.eq.s32.totalorder %s34, 1
      %p104 = por %p102, %p103
      %p106 = scmp.ne.s32.totalorder %s91, %s105
      %p107 = scmp.eq.s32.totalorder %s34, 0
      %p108 = por %p106, %p107
      %s110 = sadd.s32 %s109, 1
      %p113 = scmp.eq.s32.totalorder %s28, 1
      %p114 = scmp.ne.s32.totalorder %s109, %s111
      %p115 = scmp.eq.s32.totalorder %s28, 0
      %p116 = por %p114, %p115
      %p117 = scmp.ne.s32.totalorder %s109, %s111
      %p118 = scmp.eq.s32.totalorder %s33, 1
      %p119 = por %p117, %p118
      %p120 = scmp.ne.s32.totalorder %s111, %s112
      %p121 = scmp.eq.s32.totalorder %s33, 0
      %p122 = por %p120, %p121
      %p123 = scmp.ne.s32.totalorder %s111, %s112
      %p124 = scmp.eq.s32.totalorder %s34, 1
      %p125 = por %p123, %p124
      %p127 = scmp.ne.s32.totalorder %s112, %s126
      %p128 = scmp.eq.s32.totalorder %s34, 0
      %p129 = por %p127, %p128
      %s131 = sadd.s32 %s130, 1
      %p134 = scmp.eq.s32.totalorder %s28, 1
      %p135 = scmp.ne.s32.totalorder %s130, %s132
      %p136 = scmp.eq.s32.totalorder %s28, 0
      %p137 = por %p135, %p136
      %p138 = scmp.ne.s32.totalorder %s130, %s132
      %p139 = scmp.eq.s32.totalorder %s33, 1
      %p140 = por %p138, %p139
      %p141 = scmp.ne.s32.totalorder %s132, %s133
      %p142 = scmp.eq.s32.totalorder %s33, 0
      %p143 = por %p141, %p142
      %p144 = scmp.ne.s32.totalorder %s132, %s133
      %p145 = scmp.eq.s32.totalorder %s34, 1
      %p146 = por %p144, %p145
      %p148 = scmp.ne.s32.totalorder %s133, %s147
      %p149 = scmp.eq.s32.totalorder %s34, 0
      %p150 = por %p148, %p149
      %s152 = sadd.s32 %s151, 1
      %p155 = scmp.eq.s32.totalorder %s28, 1
      %p156 = scmp.ne.s32.totalorder %s151, %s153
      %p157 = scmp.eq.s32.totalorder %s28, 0
      %p158 = por %p156, %p157
      %p159 = scmp.ne.s32.totalorder %s151, %s153
      %p160 = scmp.eq.s32.totalorder %s33, 1
      %p161 = por %p159, %p160
      %p162 = scmp.ne.s32.totalorder %s153, %s154
      %p163 = scmp.eq.s32.totalorder %s33, 0
      %p164 = por %p162, %p163
      %p165 = scmp.ne.s32.totalorder %s153, %s154
      %p166 = scmp.eq.s32.totalorder %s34, 1
      %p167 = por %p165, %p166
      %p169 = scmp.ne.s32.totalorder %s154, %s168
      %p170 = scmp.eq.s32.totalorder %s34, 0
      %p171 = por %p169, %p170
      %s173 = sadd.s32 %s172, 1
      %p176 = scmp.eq.s32.totalorder %s28, 1
      %p177 = scmp.ne.s32.totalorder %s172, %s174
      %p178 = scmp.eq.s32.totalorder %s28, 0
      %p179 = por %p177, %p178
      %p180 = scmp.ne.s32.totalorder %s172, %s174
      %p181 = scmp.eq.s32.totalorder %s33, 1
      %p182 = por %p180, %p181
      %p183 = scmp.ne.s32.totalorder %s174, %s175
      %p184 = scmp.eq.s32.totalorder %s33, 0
      %p185 = por %p183, %p184
      %p186 = scmp.ne.s32.totalorder %s174, %s175
      %p187 = scmp.eq.s32.totalorder %s34, 1
      %p188 = por %p186, %p187
      %p190 = scmp.ne.s32.totalorder %s175, %s189
      %p191 = scmp.eq.s32.totalorder %s34, 0
      %p192 = por %p190, %p191
      %s194 = sadd.s32 %s193, 1
      %p197 = scmp.eq.s32.totalorder %s28, 1
      %p198 = scmp.ne.s32.totalorder %s193, %s195
      %p199 = scmp.eq.s32.totalorder %s28, 0
      %p200 = por %p198, %p199
      %p201 = scmp.ne.s32.totalorder %s193, %s195
      %p202 = scmp.eq.s32.totalorder %s33, 1
      %p203 = por %p201, %p202
      %p204 = scmp.ne.s32.totalorder %s195, %s196
      %p205 = scmp.eq.s32.totalorder %s33, 0
      %p206 = por %p204, %p205
      %p207 = scmp.ne.s32.totalorder %s195, %s196
      %p208 = scmp.eq.s32.totalorder %s34, 1
      %p209 = por %p207, %p208
      %p211 = scmp.ne.s32.totalorder %s196, %s210
      %p212 = scmp.eq.s32.totalorder %s34, 0
      %p213 = por %p211, %p212
      %s215 = sadd.s32 %s214, 1
      %p218 = scmp.eq.s32.totalorder %s28, 1
      %p219 = scmp.ne.s32.totalorder %s214, %s216
      %p220 = scmp.eq.s32.totalorder %s28, 0
      %p221 = por %p219, %p220
      %p222 = scmp.ne.s32.totalorder %s214, %s216
      %p223 = scmp.eq.s32.totalorder %s33, 1
      %p224 = por %p222, %p223
      %p225 = scmp.ne.s32.totalorder %s216, %s217
      %p226 = scmp.eq.s32.totalorder %s33, 0
      %p227 = por %p225, %p226
      %p228 = scmp.ne.s32.totalorder %s216, %s217
      %p229 = scmp.eq.s32.totalorder %s34, 1
      %p230 = por %p228, %p229
      %p232 = scmp.ne.s32.totalorder %s217, %s231
      %p233 = scmp.eq.s32.totalorder %s34, 0
      %p234 = por %p232, %p233
      %s236 = sadd.s32 %s235, 1
      %p239 = scmp.eq.s32.totalorder %s28, 1
      %p240 = scmp.ne.s32.totalorder %s235, %s237
      %p241 = scmp.eq.s32.totalorder %s28, 0
      %p242 = por %p240, %p241
      %p243 = scmp.ne.s32.totalorder %s235, %s237
      %p244 = scmp.eq.s32.totalorder %s33, 1
      %p245 = por %p243, %p244
      %p246 = scmp.ne.s32.totalorder %s237, %s238
      %p247 = scmp.eq.s32.totalorder %s33, 0
      %p248 = por %p246, %p247
      %p249 = scmp.ne.s32.totalorder %s237, %s238
      %p250 = scmp.eq.s32.totalorder %s34, 1
      %p251 = por %p249, %p250
      %p253 = scmp.ne.s32.totalorder %s238, %s252
      %p254 = scmp.eq.s32.totalorder %s34, 0
      %p255 = por %p253, %p254
      %s257 = sadd.s32 %s256, 1
      %p260 = scmp.eq.s32.totalorder %s28, 1
      %p261 = scmp.ne.s32.totalorder %s256, %s258
      %p262 = scmp.eq.s32.totalorder %s28, 0
      %p263 = por %p261, %p262
      %p264 = scmp.ne.s32.totalorder %s256, %s258
      %p265 = scmp.eq.s32.totalorder %s33, 1
      %p266 = por %p264, %p265
      %p267 = scmp.ne.s32.totalorder %s258, %s259
      %p268 = scmp.eq.s32.totalorder %s33, 0
      %p269 = por %p267, %p268
      %p270 = scmp.ne.s32.totalorder %s258, %s259
      %p271 = scmp.eq.s32.totalorder %s34, 1
      %p272 = por %p270, %p271
      %p274 = scmp.ne.s32.totalorder %s259, %s273
      %p275 = scmp.eq.s32.totalorder %s34, 0
      %p276 = por %p274, %p275
      %s278 = sadd.s32 %s277, 1
      %p281 = scmp.eq.s32.totalorder %s28, 1
      %p282 = scmp.ne.s32.totalorder %s277, %s279
      %p283 = scmp.eq.s32.totalorder %s28, 0
      %p284 = por %p282, %p283
      %p285 = scmp.ne.s32.totalorder %s277, %s279
      %p286 = scmp.eq.s32.totalorder %s33, 1
      %p287 = por %p285, %p286
      %p288 = scmp.ne.s32.totalorder %s279, %s280
      %p289 = scmp.eq.s32.totalorder %s33, 0
      %p290 = por %p288, %p289
      %p291 = scmp.ne.s32.totalorder %s279, %s280
      %p292 = scmp.eq.s32.totalorder %s34, 1
      %p293 = por %p291, %p292
      %p295 = scmp.ne.s32.totalorder %s280, %s294
      %p296 = scmp.eq.s32.totalorder %s34, 0
      %p297 = por %p295, %p296
      %s299 = sadd.s32 %s298, 1
      %p302 = scmp.eq.s32.totalorder %s28, 1
      %p303 = scmp.ne.s32.totalorder %s298, %s300
      %p304 = scmp.eq.s32.totalorder %s28, 0
      %p305 = por %p303, %p304
      %p306 = scmp.ne.s32.totalorder %s298, %s300
      %p307 = scmp.eq.s32.totalorder %s33, 1
      %p308 = por %p306, %p307
      %p309 = scmp.ne.s32.totalorder %s300, %s301
      %p310 = scmp.eq.s32.totalorder %s33, 0
      %p311 = por %p309, %p310
      %p312 = scmp.ne.s32.totalorder %s300, %s301
      %p313 = scmp.eq.s32.totalorder %s34, 1
      %p314 = por %p312, %p313
      %p316 = scmp.ne.s32.totalorder %s301, %s315
      %p317 = scmp.eq.s32.totalorder %s34, 0
      %p318 = por %p316, %p317
      %s320 = sadd.s32 %s319, 1
      %p323 = scmp.eq.s32.totalorder %s28, 1
      %p324 = scmp.ne.s32.totalorder %s319, %s321
      %p325 = scmp.eq.s32.totalorder %s28, 0
      %p326 = por %p324, %p325
      %p327 = scmp.ne.s32.totalorder %s319, %s321
      %p328 = scmp.eq.s32.totalorder %s33, 1
      %p329 = por %p327, %p328
      %p330 = scmp.ne.s32.totalorder %s321, %s322
      %p331 = scmp.eq.s32.totalorder %s33, 0
      %p332 = por %p330, %p331
      %p333 = scmp.ne.s32.totalorder %s321, %s322
      %p334 = scmp.eq.s32.totalorder %s34, 1
      %p335 = por %p333, %p334
      %p337 = scmp.ne.s32.totalorder %s322, %s336
      %p338 = scmp.eq.s32.totalorder %s34, 0
      %p339 = por %p337, %p338
      %s341 = sadd.s32 %s340, 1
      %p344 = scmp.eq.s32.totalorder %s28, 1
      %p345 = scmp.ne.s32.totalorder %s340, %s342
      %p346 = scmp.eq.s32.totalorder %s28, 0
      %p347 = por %p345, %p346
      %p348 = scmp.ne.s32.totalorder %s340, %s342
      %p349 = scmp.eq.s32.totalorder %s33, 1
      %p350 = por %p348, %p349
      %p351 = scmp.ne.s32.totalorder %s342, %s343
      %p352 = scmp.eq.s32.totalorder %s33, 0
      %p353 = por %p351, %p352
      %p354 = scmp.ne.s32.totalorder %s342, %s343
      %p355 = scmp.eq.s32.totalorder %s34, 1
      %p356 = por %p354, %p355
      %p358 = scmp.ne.s32.totalorder %s343, %s357
      %p359 = scmp.eq.s32.totalorder %s34, 0
      %p360 = por %p358, %p359
      %s362 = sadd.s32 %s361, 1
      %p365 = scmp.eq.s32.totalorder %s28, 1
      %p366 = scmp.ne.s32.totalorder %s361, %s363
      %p367 = scmp.eq.s32.totalorder %s28, 0
      %p368 = por %p366, %p367
      %p369 = scmp.ne.s32.totalorder %s361, %s363
      %p370 = scmp.eq.s32.totalorder %s33, 1
      %p371 = por %p369, %p370
      %p372 = scmp.ne.s32.totalorder %s363, %s364
      %p373 = scmp.eq.s32.totalorder %s33, 0
      %p374 = por %p372, %p373
      %p375 = scmp.ne.s32.totalorder %s363, %s364
      %p376 = scmp.eq.s32.totalorder %s34, 1
      %p377 = por %p375, %p376
      %p379 = scmp.ne.s32.totalorder %s364, %s378
      %p380 = scmp.eq.s32.totalorder %s34, 0
      %p381 = por %p379, %p380
      %s383 = sadd.s32 %s382, 1
      %p386 = scmp.eq.s32.totalorder %s28, 1
      %p387 = scmp.ne.s32.totalorder %s382, %s384
      %p388 = scmp.eq.s32.totalorder %s28, 0
      %p389 = por %p387, %p388
      %p390 = scmp.ne.s32.totalorder %s382, %s384
      %p391 = scmp.eq.s32.totalorder %s33, 1
      %p392 = por %p390, %p391
      %p393 = scmp.ne.s32.totalorder %s384, %s385
      %p394 = scmp.eq.s32.totalorder %s33, 0
      %p395 = por %p393, %p394
      %p396 = scmp.ne.s32.totalorder %s384, %s385
      %p397 = scmp.eq.s32.totalorder %s34, 1
      %p398 = por %p396, %p397
      %p400 = scmp.ne.s32.totalorder %s385, %s399
      %p401 = scmp.eq.s32.totalorder %s34, 0
      %p402 = por %p400, %p401
      %s404 = sadd.s32 %s403, 1
      %p407 = scmp.eq.s32.totalorder %s28, 1
      %p408 = scmp.ne.s32.totalorder %s403, %s405
      %p409 = scmp.eq.s32.totalorder %s28, 0
      %p410 = por %p408, %p409
      %p411 = scmp.ne.s32.totalorder %s403, %s405
      %p412 = scmp.eq.s32.totalorder %s33, 1
      %p413 = por %p411, %p412
      %p414 = scmp.ne.s32.totalorder %s405, %s406
      %p415 = scmp.eq.s32.totalorder %s33, 0
      %p416 = por %p414, %p415
      %p417 = scmp.ne.s32.totalorder %s405, %s406
      %p418 = scmp.eq.s32.totalorder %s34, 1
      %p419 = por %p417, %p418
      %p421 = scmp.ne.s32.totalorder %s406, %s420
      %p422 = scmp.eq.s32.totalorder %s34, 0
      %p423 = por %p421, %p422
      %s425 = sadd.s32 %s424, 1
      %p428 = scmp.eq.s32.totalorder %s28, 1
      %p429 = scmp.ne.s32.totalorder %s424, %s426
      %p430 = scmp.eq.s32.totalorder %s28, 0
      %p431 = por %p429, %p430
      %p432 = scmp.ne.s32.totalorder %s424, %s426
      %p433 = scmp.eq.s32.totalorder %s33, 1
      %p434 = por %p432, %p433
      %p435 = scmp.ne.s32.totalorder %s426, %s427
      %p436 = scmp.eq.s32.totalorder %s33, 0
      %p437 = por %p435, %p436
      %p438 = scmp.ne.s32.totalorder %s426, %s427
      %p439 = scmp.eq.s32.totalorder %s34, 1
      %p440 = por %p438, %p439
      %p442 = scmp.ne.s32.totalorder %s427, %s441
      %p443 = scmp.eq.s32.totalorder %s34, 0
      %p444 = por %p442, %p443
      %s445 = ssub.s32 %s28, %s35
      %p446 = scmp.eq.s32.totalorder %s445, 0
      %s448 = sadd.s32 %s447, 1
      %s449 = scalar_select %p446, %s447, %s448
      %p452 = pneg %p446
      %p453 = scmp.eq.s32.totalorder %s28, 1
      %p454 = por %p452, %p453
      %p455 = scmp.ne.s32.totalorder %s447, %s450
      %p456 = scmp.eq.s32.totalorder %s28, 0
      %p457 = por %p455, %p456
      %p458 = scmp.ne.s32.totalorder %s447, %s450
      %p459 = scmp.eq.s32.totalorder %s33, 1
      %p460 = por %p458, %p459
      %p461 = scmp.ne.s32.totalorder %s450, %s451
      %p462 = scmp.eq.s32.totalorder %s33, 0
      %p463 = por %p461, %p462
      %p464 = scmp.ne.s32.totalorder %s450, %s451
      %p465 = scmp.eq.s32.totalorder %s34, 1
      %p466 = por %p464, %p465
      %p468 = scmp.ne.s32.totalorder %s451, %s467
      %p469 = scmp.eq.s32.totalorder %s34, 0
      %p470 = por %p468, %p469
      %p471 = scmp.le.s32.totalorder 1, %s28
      %p472 = scmp.lt.s32.totalorder %s28, 3
      %p473 = pnand %p471, %p472
      %p474 = pneg %p473
      // Predicated region
      $region9: #{bert_encode_pooled.1} parent=5 // pred_check
        _
      $region10: #{bert_encode_pooled.1} parent=5 // pred_check_branch
        %476 = sbr.rel (%p473) target = $region12
      $region11: #{bert_encode_pooled.1} parent=5 // pred_region
        %s477 = ssub.s32 %s28, 1
        // Predicated region
        $region13: #{bert_encode_pooled.1} parent=11 // pred_check
          %p478 = pneg %p101
        $region14: #{bert_encode_pooled.1} parent=11 // pred_check_branch
          %480 = sbr.rel (%p478) target = $region16
        $region15: #{bert_encode_pooled.1} parent=11 // pred_region
          _
        $region16: #{bert_encode_pooled.1} parent=11 // pred_fallthru
          _
        // Predicated region
        $region17: #{bert_encode_pooled.1} parent=11 // pred_check
          %p481 = pneg %p122
        $region18: #{bert_encode_pooled.1} parent=11 // pred_check_branch
          %483 = sbr.rel (%p481) target = $region20
        $region19: #{bert_encode_pooled.1} parent=11 // pred_region
          _
        $region20: #{bert_encode_pooled.1} parent=11 // pred_fallthru
          _
        // Predicated region
        $region21: #{bert_encode_pooled.1} parent=11 // pred_check
          %p484 = pneg %p143
        $region22: #{bert_encode_pooled.1} parent=11 // pred_check_branch
          %486 = sbr.rel (%p484) target = $region24
        $region23: #{bert_encode_pooled.1} parent=11 // pred_region
          _
        $region24: #{bert_encode_pooled.1} parent=11 // pred_fallthru
          _
        // Predicated region
        $region25: #{bert_encode_pooled.1} parent=11 // pred_check
          %p487 = pneg %p164
        $region26: #{bert_encode_pooled.1} parent=11 // pred_check_branch
          %489 = sbr.rel (%p487) target = $region28
        $region27: #{bert_encode_pooled.1} parent=11 // pred_region
          _
        $region28: #{bert_encode_pooled.1} parent=11 // pred_fallthru
          _
        // Predicated region
        $region29: #{bert_encode_pooled.1} parent=11 // pred_check
          %p490 = pneg %p185
        $region30: #{bert_encode_pooled.1} parent=11 // pred_check_branch
          %492 = sbr.rel (%p490) target = $region32
        $region31: #{bert_encode_pooled.1} parent=11 // pred_region
          _
        $region32: #{bert_encode_pooled.1} parent=11 // pred_fallthru
          _
        // Predicated region
        $region33: #{bert_encode_pooled.1} parent=11 // pred_check
          %p493 = pneg %p206
        $region34: #{bert_encode_pooled.1} parent=11 // pred_check_branch
          %495 = sbr.rel (%p493) target = $region36
        $region35: #{bert_encode_pooled.1} parent=11 // pred_region
          _
        $region36: #{bert_encode_pooled.1} parent=11 // pred_fallthru
          _
        // Predicated region
        $region37: #{bert_encode_pooled.1} parent=11 // pred_check
          %p496 = pneg %p227
        $region38: #{bert_encode_pooled.1} parent=11 // pred_check_branch
          %498 = sbr.rel (%p496) target = $region40
        $region39: #{bert_encode_pooled.1} parent=11 // pred_region
          _
        $region40: #{bert_encode_pooled.1} parent=11 // pred_fallthru
          _
        // Predicated region
        $region41: #{bert_encode_pooled.1} parent=11 // pred_check
          %p499 = pneg %p248
        $region42: #{bert_encode_pooled.1} parent=11 // pred_check_branch
          %501 = sbr.rel (%p499) target = $region44
        $region43: #{bert_encode_pooled.1} parent=11 // pred_region
          _
        $region44: #{bert_encode_pooled.1} parent=11 // pred_fallthru
          _
        // Predicated region
        $region45: #{bert_encode_pooled.1} parent=11 // pred_check
          %p502 = pneg %p269
        $region46: #{bert_encode_pooled.1} parent=11 // pred_check_branch
          %504 = sbr.rel (%p502) target = $region48
        $region47: #{bert_encode_pooled.1} parent=11 // pred_region
          _
        $region48: #{bert_encode_pooled.1} parent=11 // pred_fallthru
          _
        // Predicated region
        $region49: #{bert_encode_pooled.1} parent=11 // pred_check
          %p505 = pneg %p290
        $region50: #{bert_encode_pooled.1} parent=11 // pred_check_branch
          %507 = sbr.rel (%p505) target = $region52
        $region51: #{bert_encode_pooled.1} parent=11 // pred_region
          _
        $region52: #{bert_encode_pooled.1} parent=11 // pred_fallthru
          _
        // Predicated region
        $region53: #{bert_encode_pooled.1} parent=11 // pred_check
          %p508 = pneg %p311
        $region54: #{bert_encode_pooled.1} parent=11 // pred_check_branch
          %510 = sbr.rel (%p508) target = $region56
        $region55: #{bert_encode_pooled.1} parent=11 // pred_region
          _
        $region56: #{bert_encode_pooled.1} parent=11 // pred_fallthru
          _
        // Predicated region
        $region57: #{bert_encode_pooled.1} parent=11 // pred_check
          %p511 = pneg %p332
        $region58: #{bert_encode_pooled.1} parent=11 // pred_check_branch
          %513 = sbr.rel (%p511) target = $region60
        $region59: #{bert_encode_pooled.1} parent=11 // pred_region
          _
        $region60: #{bert_encode_pooled.1} parent=11 // pred_fallthru
          _
        // Predicated region
        $region61: #{bert_encode_pooled.1} parent=11 // pred_check
          %p514 = pneg %p353
        $region62: #{bert_encode_pooled.1} parent=11 // pred_check_branch
          %516 = sbr.rel (%p514) target = $region64
        $region63: #{bert_encode_pooled.1} parent=11 // pred_region
          _
        $region64: #{bert_encode_pooled.1} parent=11 // pred_fallthru
          _
        // Predicated region
        $region65: #{bert_encode_pooled.1} parent=11 // pred_check
          %p517 = pneg %p374
        $region66: #{bert_encode_pooled.1} parent=11 // pred_check_branch
          %519 = sbr.rel (%p517) target = $region68
        $region67: #{bert_encode_pooled.1} parent=11 // pred_region
          _
        $region68: #{bert_encode_pooled.1} parent=11 // pred_fallthru
          _
        // Predicated region
        $region69: #{bert_encode_pooled.1} parent=11 // pred_check
          %p520 = pneg %p395
        $region70: #{bert_encode_pooled.1} parent=11 // pred_check_branch
          %522 = sbr.rel (%p520) target = $region72
        $region71: #{bert_encode_pooled.1} parent=11 // pred_region
          _
        $region72: #{bert_encode_pooled.1} parent=11 // pred_fallthru
          _
        // Predicated region
        $region73: #{bert_encode_pooled.1} parent=11 // pred_check
          %p523 = pneg %p416
        $region74: #{bert_encode_pooled.1} parent=11 // pred_check_branch
          %525 = sbr.rel (%p523) target = $region76
        $region75: #{bert_encode_pooled.1} parent=11 // pred_region
          _
        $region76: #{bert_encode_pooled.1} parent=11 // pred_fallthru
          _
        // Predicated region
        $region77: #{bert_encode_pooled.1} parent=11 // pred_check
          %p526 = pneg %p437
        $region78: #{bert_encode_pooled.1} parent=11 // pred_check_branch
          %528 = sbr.rel (%p526) target = $region80
        $region79: #{bert_encode_pooled.1} parent=11 // pred_region
          _
        $region80: #{bert_encode_pooled.1} parent=11 // pred_fallthru
          _
      $region12: #{bert_encode_pooled.1} parent=5 // pred_fallthru
        _
      %p529 = scmp.lt.s32.totalorder %s28, 2
      // Predicated region
      $region81: #{bert_encode_pooled.1} parent=5 // pred_check
        %p530 = pneg %p529
      $region82: #{bert_encode_pooled.1} parent=5 // pred_check_branch
        %532 = sbr.rel (%p530) target = $region84
      $region83: #{bert_encode_pooled.1} parent=5 // pred_region
        // Predicated region
        $region85: #{bert_encode_pooled.1} parent=83 // pred_check
          %p533 = pneg %p48
        $region86: #{bert_encode_pooled.1} parent=83 // pred_check_branch
          %535 = sbr.rel (%p533) target = $region88
        $region87: #{bert_encode_pooled.1} parent=83 // pred_region
          %p536 = scmp.lt.s32.totalorder %s28, 1
          %s537 = scalar_select %p536, %s28, 1
          %s538 = smul.addr %s537, 2
          %s539 = smul.addr %s538, 8
          %s540 = scalar_lea.vmem %s0, %s539
        $region88: #{bert_encode_pooled.1} parent=83 // pred_fallthru
          _
        // Predicated region
        $region89: #{bert_encode_pooled.1} parent=83 // pred_check
          %p541 = pneg %p74
        $region90: #{bert_encode_pooled.1} parent=83 // pred_check_branch
          %543 = sbr.rel (%p541) target = $region92
        $region91: #{bert_encode_pooled.1} parent=83 // pred_region
          %p544 = scmp.lt.s32.totalorder %s28, 1
          %s545 = scalar_select %p544, %s28, 1
          %s546 = smul.addr %s545, 2
          %s547 = scalar_lea.vmem %s1, %s546
        $region92: #{bert_encode_pooled.1} parent=83 // pred_fallthru
          _
      $region84: #{bert_encode_pooled.1} parent=5 // pred_fallthru
        _
      %p548 = scmp.le.s32.totalorder 1, %s28
      %p549 = scmp.lt.s32.totalorder %s28, 3
      %p550 = pnand %p548, %p549
      %p551 = pneg %p550
      // Predicated region
      $region93: #{bert_encode_pooled.1} parent=5 // pred_check
        _
      $region94: #{bert_encode_pooled.1} parent=5 // pred_check_branch
        %553 = sbr.rel (%p550) target = $region96
      $region95: #{bert_encode_pooled.1} parent=5 // pred_region
        %s554 = ssub.s32 %s28, 1
        %p555 = scmp.lt.s32.totalorder %s33, 1
        %s556 = scalar_select %p555, %s33, 1
        %s557 = smul.addr %s556, 2
        %s558 = smul.addr %s557, 8
        %s559 = scalar_lea.vmem %s0, %s558
        %p560 = pneg %p54
        %p561 = pneg %p51
        %p562 = scmp.lt.s32.totalorder %s33, 1
        %s563 = scalar_select %p562, %s33, 1
        %s564 = smul.addr %s563, 2
        %s565 = scalar_lea.vmem %s1, %s564
        %p566 = pneg %p80
        %p567 = pneg %p77
        %p568 = pneg %p101
        %p569 = pneg %p98
        %p570 = pneg %p122
        %p571 = pneg %p119
        %p572 = pneg %p143
        %p573 = pneg %p140
        %p574 = pneg %p164
        %p575 = pneg %p161
        %p576 = pneg %p185
        %p577 = pneg %p182
        %p578 = pneg %p206
        %p579 = pneg %p203
        %p580 = pneg %p227
        %p581 = pneg %p224
        %p582 = pneg %p248
        %p583 = pneg %p245
        %p584 = pneg %p269
        %p585 = pneg %p266
        %p586 = pneg %p290
        %p587 = pneg %p287
        %p588 = pneg %p311
        %p589 = pneg %p308
        %p590 = pneg %p332
        %p591 = pneg %p329
        %p592 = pneg %p353
        %p593 = pneg %p350
        %p594 = pneg %p374
        %p595 = pneg %p371
        %p596 = pneg %p395
        %p597 = pneg %p392
        %p598 = pneg %p416
        %p599 = pneg %p413
        %p600 = pneg %p437
        %p601 = pneg %p434
        %p602 = pneg %p463
        %p603 = pneg %p460
        %s604 = sand.u32 %s450, 1
        %s605 = scalar_lea.sflag [#allocation3], %s604
        %s606 = sand.u32 %s450, 1
        %s607 = smul.addr %s606, 2
        %s608 = scalar_lea.vmem [#allocation2], %s607
        %p609 = scmp.lt.s32.totalorder %s33, 1
        %s610 = scalar_select %p609, %s33, 1
        %s611 = smul.addr %s610, 2
        %s612 = smul.addr %s611, 8
        %s613 = scalar_lea.vmem %s0, %s612
        %p614 = scmp.lt.s32.totalorder %s33, 1
        %s615 = scalar_select %p614, %s33, 1
        %s616 = smul.addr %s615, 2
        %s617 = scalar_lea.vmem %s1, %s616
        %v619 = vld [vmem:[%s613] sm:$0xff]
        %v620 = vld [vmem:[%s613 + $0x8] sm:$0xff]
        %v621 = vld [vmem:[%s617] sm:$0x3]
        %v622 = vsub.f32 1.0, %v621
        %v623 = vmul.f32 %v622, -10000.0
        %v626 = vunpack.c.l.s4 1966171168
        %v627 = vunpack.c.0.s8 %v626
        %v628 = vlaneseq
        %v629 = vshrl.u32 %v628, 7
        %v630 = vsub.s32 %v627, %v629
        %v631 = vrot.slane %v623, %v630
        %v632 = vcombine.high %v631, %v631
        %v634 = vunpack.c.l.s4 1966171168
        %v635 = vunpack.c.0.s8 %v634
        %v636 = vlaneseq
        %v637 = vshrl.u32 %v636, 7
        %v638 = vsub.s32 %v635, %v637
        %v639 = vrot.slane %v631, %v638
        %v641 = vunpack.c.l.s4 1966171168
        %v642 = vunpack.c.0.s8 %v641
        %v643 = vlaneseq
        %v644 = vshrl.u32 %v643, 7
        %v645 = vsub.s32 %v642, %v644
        %v646 = vrot.slane %v632, %v645
        %v647 = vlaneseq
        %v648 = vand.u32 %v647, 127
        %649 = vset.pattern.permute.xlu0 0
        %650 = vperm.xlu0 %649, %v619
        %v651 = vpop.permute.xlu0 %650
        %652 = vset.pattern.permute.xlu0 0
        %653 = vperm.xlu0 %652, %v620
        %v654 = vpop.permute.xlu0 %653
        %vm655 = vcmp.eq.s32.totalorder %v648, %v651
        %vm656 = vcmp.eq.s32.totalorder %v648, %v654
        %v657 = vsel %vm655, 1, 0
        %v658 = vsel %vm656, 1, 0
        %v659 = vcvt.s32.f32 %v657
        %v660 = vcvt.s32.f32 %v658
        %v661 = vld [vmem:[%s2] sm:$0xff]
        %v662 = vld [vmem:[%s2 + $0x8] sm:$0xff]
        %v663 = vld [vmem:[%s2 + $0x10] sm:$0xff]
        %v664 = vld [vmem:[%s2 + $0x18] sm:$0xff]
        %v665 = vld [vmem:[%s2 + $0x20] sm:$0xff]
        %v666 = vld [vmem:[%s2 + $0x28] sm:$0xff]
        %v667 = vld [vmem:[%s2 + $0x30] sm:$0xff]
        %v668 = vld [vmem:[%s2 + $0x38] sm:$0xff]
        %vm669 = vcmask 523264
        %v671 = vsel %vm669, %v659, 0
        %v674 = vsel %vm669, %v660, 0
        %676 = vmatprep.subr.mxu0 0.0
        %677 = vmatpush1.msra.mxu0 %v661
        %678 = vmatprep.subr.mxu0 0.0
        %679 = vmatpush1.msra.mxu0 %v662
        %680 = vmatprep.subr.mxu0 0.0
        %681 = vmatpush1.msra.mxu0 %v663
        %682 = vmatprep.subr.mxu0 0.0
        %683 = vmatpush1.msra.mxu0 %v664
        %684 = vmatprep.subr.mxu0 0.0
        %685 = vmatpush1.msra.mxu0 %v665
        %686 = vmatprep.subr.mxu0 0.0
        %687 = vmatpush1.msra.mxu0 %v666
        %688 = vmatprep.subr.mxu0 0.0
        %689 = vmatpush1.msra.mxu0 %v667
        %690 = vmatprep.subr.mxu0 0.0
        %691 = vmatpush1.msra.mxu0 %v668
        %692 = vmatprep.subr.mxu0 0.0
        %693 = vmatpush1.msra.mxu0 0.0
        %694 = vmatprep.subr.mxu0 0.0
        %695 = vmatpush1.msra.mxu0 0.0
        %696 = vmatprep.subr.mxu0 0.0
        %697 = vmatpush1.msra.mxu0 0.0
        %698 = vmatprep.subr.mxu0 0.0
        %699 = vmatpush1.msra.mxu0 0.0
        %700 = vmatprep.subr.mxu0 0.0
        %701 = vmatpush1.msra.mxu0 0.0
        %702 = vmatprep.subr.mxu0 0.0
        %703 = vmatpush1.msra.mxu0 0.0
        %704 = vmatprep.subr.mxu0 0.0
        %705 = vmatpush1.msra.mxu0 0.0
        %706 = vmatprep.subr.mxu0 0.0
        %707 = vmatpush1.msra.mxu0 0.0
        %708 = vmatprep.subr.mxu0 0.0
        %709 = vmatpush1.msra.mxu0 0.0
        %710 = vmatprep.subr.mxu0 0.0
        %711 = vmatpush1.msra.mxu0 0.0
        %712 = vmatprep.subr.mxu0 0.0
        %713 = vmatpush1.msra.mxu0 0.0
        %714 = vmatprep.subr.mxu0 0.0
        %715 = vmatpush1.msra.mxu0 0.0
        %716 = vmatprep.subr.mxu0 0.0
        %717 = vmatpush1.msra.mxu0 0.0
        %718 = vmatprep.subr.mxu0 0.0
        %719 = vmatpush1.msra.mxu0 0.0
        %720 = vmatprep.subr.mxu0 0.0
        %721 = vmatpush1.msra.mxu0 0.0
        %722 = vmatprep.subr.mxu0 0.0
        %723 = vmatpush1.msra.mxu0 0.0
        %724 = vmatprep.subr.mxu0 0.0
        %725 = vmatpush1.msra.mxu0 0.0
        %726 = vmatprep.subr.mxu0 0.0
        %727 = vmatpush1.msra.mxu0 0.0
        %728 = vmatprep.subr.mxu0 0.0
        %729 = vmatpush1.msra.mxu0 0.0
        %730 = vmatprep.subr.mxu0 0.0
        %731 = vmatpush1.msra.mxu0 0.0
        %732 = vmatprep.subr.mxu0 0.0
        %733 = vmatpush1.msra.mxu0 0.0
        %734 = vmatprep.subr.mxu0 0.0
        %735 = vmatpush1.msra.mxu0 0.0
        %736 = vmatprep.subr.mxu0 0.0
        %737 = vmatpush1.msra.mxu0 0.0
        %738 = vmatprep.subr.mxu0 0.0
        %739 = vmatpush1.msra.mxu0 0.0
        %740 = vmatprep.mubr.f32.mxu0 0.0
        %741 = vmatmul.mubr.f32.gmra.mrb[0].mxu0 %v671
        %v742 = vpop.f32.mrb[0].mxu0
        %v743 = vadd.f32 0.0, %v742
        %v744 = vpop.f32.mrb[0].mxu0
        %745 = vmatprep.mubr.f32.mxu0 0.0
        %746 = vmatmul.mubr.f32.gmra.mrb[0].mxu0 %v674
        %v747 = vpop.f32.mrb[0].mxu0
        %v748 = vadd.f32 0.0, %v747
        %v749 = vpop.f32.mrb[0].mxu0
        %750 = vdwg.mxu0
        %v751 = vld [vmem:[%s3] sm:$0xff]
        %v752 = vadd.f32 %v743, %v751
        %v753 = vadd.f32 %v748, %v751
        %v754 = vld [vmem:[%s4] sm:$0x1]
        %v756 = vlaneseq
        %v757 = vshrl.u32 %v756, 7
        %v758 = vsub.s32 0, %v757
        %v759 = vrot.slane %v754, %v758
        %v761 = vadd.f32 %v752, %v759
        %v762 = vadd.f32 %v753, %v759
        %v763 = vld [vmem:[%s5] sm:$0x1]
        %v764 = vld [vmem:[%s6] sm:$0x1]
        %vm765 = vcmask 261120
        %v766 = vsel %vm765, %v761, 0.0
        %767 = vadd.xlane.f32.xlu0 %v766
        %v768 = vpop.xlane.xlu0 %767
        %v769 = vsel %vm765, %v762, 0.0
        %770 = vadd.xlane.f32.xlu0 %v769
        %v771 = vpop.xlane.xlu0 %770
        %v772 = vrcp.pop 32.0
        %v773 = vmul.f32 %v768, %v772
        %v774 = vmul.f32 %v771, %v772
        %v775 = vsub.f32 %v761, %v773
        %v776 = vsub.f32 %v762, %v774
        %v777 = vmul.f32 %v775, %v775
        %v778 = vmul.f32 %v776, %v776
        %v779 = vsel %vm765, %v777, 0.0
        %780 = vadd.xlane.f32.xlu0 %v779
        %v781 = vpop.xlane.xlu0 %780
        %v782 = vsel %vm765, %v778, 0.0
        %783 = vadd.xlane.f32.xlu0 %v782
        %v784 = vpop.xlane.xlu0 %783
        %v785 = vmul.f32 %v781, %v772
        %v786 = vmul.f32 %v784, %v772
        %v787 = vadd.f32 %v785, 1e-12
        %v788 = vadd.f32 %v786, 1e-12
        %v789 = vrsqrt.pop %v787
        %v790 = vrsqrt.pop %v788
        %v791 = vmul.f32 %v775, %v789
        %v792 = vmul.f32 %v776, %v790
        %v794 = vlaneseq
        %v795 = vshrl.u32 %v794, 7
        %v796 = vsub.s32 0, %v795
        %v797 = vrot.slane %v763, %v796
        %v799 = vmul.f32 %v791, %v797
        %v800 = vmul.f32 %v792, %v797
        %v802 = vlaneseq
        %v803 = vshrl.u32 %v802, 7
        %v804 = vsub.s32 0, %v803
        %v805 = vrot.slane %v764, %v804
        %v807 = vadd.f32 %v799, %v805
        %v808 = vadd.f32 %v800, %v805
        %v809 = vld [vmem:[%s7] sm:$0xf]
        %v810 = vld [vmem:[%s7 + $0x4] sm:$0xf]
        %v811 = vld [vmem:[%s7 + $0x8] sm:$0xf]
        %v812 = vld [vmem:[%s7 + $0xc] sm:$0xf]
        %v813 = vpack.c.bf16 %v808, %v807
        %v814 = vld [vmem:[%s8] sm:$0x1]
        %v816 = vlaneseq
        %v817 = vshrl.u32 %v816, 7
        %v818 = vsub.s32 0, %v817
        %v819 = vrot.slane %v814, %v818
        %v825 = vunpack.c.l.b16 %v809
        %v826 = vunpack.c.l.b16 %v810
        %v827 = vunpack.c.l.b16 %v811
        %v828 = vunpack.c.l.b16 %v812
        %v829 = vpack.c.b16 %v826, %v825
        %v830 = vpack.c.b16 %v828, %v827
        %v834 = vsel %vm765, %v813, 0
        %836 = vmatprep.subr.bf16.mxu0 0
        %837 = vmatpush1.bf16.msra.mxu0 %v829
        %838 = vmatprep.subr.bf16.mxu0 0
        %839 = vmatpush1.bf16.msra.mxu0 %v830
        %840 = vmatprep.subr.bf16.mxu0 0
        %841 = vmatpush1.bf16.msra.mxu0 0
        %842 = vmatprep.subr.bf16.mxu0 0
        %843 = vmatpush1.bf16.msra.mxu0 0
        %844 = vmatprep.subr.bf16.mxu0 0
        %845 = vmatpush1.bf16.msra.mxu0 0
        %846 = vmatprep.subr.bf16.mxu0 0
        %847 = vmatpush1.bf16.msra.mxu0 0
        %848 = vmatprep.subr.bf16.mxu0 0
        %849 = vmatpush1.bf16.msra.mxu0 0
        %850 = vmatprep.subr.bf16.mxu0 0
        %851 = vmatpush1.bf16.msra.mxu0 0
        %852 = vmatprep.subr.bf16.mxu0 0
        %853 = vmatpush1.bf16.msra.mxu0 0
        %854 = vmatprep.subr.bf16.mxu0 0
        %855 = vmatpush1.bf16.msra.mxu0 0
        %856 = vmatprep.subr.bf16.mxu0 0
        %857 = vmatpush1.bf16.msra.mxu0 0
        %858 = vmatprep.subr.bf16.mxu0 0
        %859 = vmatpush1.bf16.msra.mxu0 0
        %860 = vmatprep.subr.bf16.mxu0 0
        %861 = vmatpush1.bf16.msra.mxu0 0
        %862 = vmatprep.subr.bf16.mxu0 0
        %863 = vmatpush1.bf16.msra.mxu0 0
        %864 = vmatprep.subr.bf16.mxu0 0
        %865 = vmatpush1.bf16.msra.mxu0 0
        %866 = vmatprep.subr.bf16.mxu0 0
        %867 = vmatpush1.bf16.msra.mxu0 0
        %868 = vmatprep.mubr.bf16.mxu0 0
        %869 = vmatmul.mubr.bf16.gmra.mrb[0].mxu0 %v834
        %v870 = vpop.f32.mrb[0].mxu0
        %v871 = vadd.f32 %v819, %v870
        %v872 = vpop.f32.mrb[0].mxu0
        %v873 = vpop.f32.mrb[0].mxu0
        %v874 = vadd.f32 %v819, %v873
        %v875 = vpop.f32.mrb[0].mxu0
        %876 = vdwg.mxu0
        %v877 = vpack.c.bf16 %v871, %v871
        %v878 = vpack.c.bf16 %v874, %v874
        %v879 = vlaneseq
        %v880 = vshrl.u32 %v879, 7
        %v881 = vsub.s32 0, %v880
        %v882 = vrot.slane %v639, %v881
        %v883 = vlaneseq
        %v884 = vshrl.u32 %v883, 7
        %v885 = vsub.s32 0, %v884
        %v886 = vrot.slane %v646, %v885
        %890 = vrot.lane.b32.xlu0 %v877, 96
        %v891 = vpop.permute.xlu0 %890
        %vm892 = vcmask 130048
        %v894 = vsel %vm892, %v877, 0
        %v897 = vsel %vm892, %v891, 0
        %899 = vmatprep.subr.bf16.mxu0 0
        %900 = vmatpush1.bf16.xpose.msra.mxu0 %v897
        %901 = vmatprep.subr.bf16.mxu0 0
        %902 = vmatpush1.bf16.xpose.msra.mxu0 0
        %903 = vmatprep.subr.bf16.mxu0 0
        %904 = vmatpush1.bf16.xpose.msra.mxu0 0
        %905 = vmatprep.subr.bf16.mxu0 0
        %906 = vmatpush1.bf16.xpose.msra.mxu0 0
        %907 = vmatprep.subr.bf16.mxu0 0
        %908 = vmatpush1.bf16.xpose.msra.mxu0 0
        %909 = vmatprep.subr.bf16.mxu0 0
        %910 = vmatpush1.bf16.xpose.msra.mxu0 0
        %911 = vmatprep.subr.bf16.mxu0 0
        %912 = vmatpush1.bf16.xpose.msra.mxu0 0
        %913 = vmatprep.subr.bf16.mxu0 0
        %914 = vmatpush1.bf16.xpose.msra.mxu0 0
        %915 = vmatprep.subr.bf16.mxu0 0
        %916 = vmatpush1.bf16.xpose.msra.mxu0 0
        %917 = vmatprep.subr.bf16.mxu0 0
        %918 = vmatpush1.bf16.xpose.msra.mxu0 0
        %919 = vmatprep.subr.bf16.mxu0 0
        %920 = vmatpush1.bf16.xpose.msra.mxu0 0
        %921 = vmatprep.subr.bf16.mxu0 0
        %922 = vmatpush1.bf16.xpose.msra.mxu0 0
        %923 = vmatprep.subr.bf16.mxu0 0
        %924 = vmatpush1.bf16.xpose.msra.mxu0 0
        %925 = vmatprep.subr.bf16.mxu0 0
        %926 = vmatpush1.bf16.xpose.msra.mxu0 0
        %927 = vmatprep.subr.bf16.mxu0 0
        %928 = vmatpush1.bf16.xpose.msra.mxu0 0
        %929 = vmatprep.subr.bf16.mxu0 0
        %930 = vmatpush1.bf16.xpose.msra.mxu0 0
        %931 = vmatprep.mubr.bf16.mxu0 0
        %932 = vmatmul.mubr.bf16.gmra.mrb[0].mxu0 %v894
        %v933 = vpop.f32.mrb[0].mxu0
        %v934 = vadd.f32 %v882, %v933
        %v935 = vpop.f32.mrb[0].mxu0
        %v936 = vpop.f32.mrb[0].mxu0
        %v937 = vpop.f32.mrb[0].mxu0
        %938 = vdwg.mxu0
        %940 = vrot.lane.b32.xlu0 %v878, 96
        %v941 = vpop.permute.xlu0 %940
        %v943 = vsel %vm892, %v878, 0
        %v946 = vsel %vm892, %v941, 0
        %948 = vmatprep.subr.bf16.mxu0 0
        %949 = vmatpush1.bf16.xpose.msra.mxu0 %v946
        %950 = vmatprep.subr.bf16.mxu0 0
        %951 = vmatpush1.bf16.xpose.msra.mxu0 0
        %952 = vmatprep.subr.bf16.mxu0 0
        %953 = vmatpush1.bf16.xpose.msra.mxu0 0
        %954 = vmatprep.subr.bf16.mxu0 0
        %955 = vmatpush1.bf16.xpose.msra.mxu0 0
        %956 = vmatprep.subr.bf16.mxu0 0
        %957 = vmatpush1.bf16.xpose.msra.mxu0 0
        %958 = vmatprep.subr.bf16.mxu0 0
        %959 = vmatpush1.bf16.xpose.msra.mxu0 0
        %960 = vmatprep.subr.bf16.mxu0 0
        %961 = vmatpush1.bf16.xpose.msra.mxu0 0
        %962 = vmatprep.subr.bf16.mxu0 0
        %963 = vmatpush1.bf16.xpose.msra.mxu0 0
        %964 = vmatprep.subr.bf16.mxu0 0
        %965 = vmatpush1.bf16.xpose.msra.mxu0 0
        %966 = vmatprep.subr.bf16.mxu0 0
        %967 = vmatpush1.bf16.xpose.msra.mxu0 0
        %968 = vmatprep.subr.bf16.mxu0 0
        %969 = vmatpush1.bf16.xpose.msra.mxu0 0
        %970 = vmatprep.subr.bf16.mxu0 0
        %971 = vmatpush1.bf16.xpose.msra.mxu0 0
        %972 = vmatprep.subr.bf16.mxu0 0
        %973 = vmatpush1.bf16.xpose.msra.mxu0 0
        %974 = vmatprep.subr.bf16.mxu0 0
        %975 = vmatpush1.bf16.xpose.msra.mxu0 0
        %976 = vmatprep.subr.bf16.mxu0 0
        %977 = vmatpush1.bf16.xpose.msra.mxu0 0
        %978 = vmatprep.subr.bf16.mxu0 0
        %979 = vmatpush1.bf16.xpose.msra.mxu0 0
        %980 = vmatprep.mubr.bf16.mxu0 0
        %981 = vmatmul.mubr.bf16.gmra.mrb[0].mxu0 %v943
        %v982 = vpop.f32.mrb[0].mxu0
        %v983 = vadd.f32 %v886, %v982
        %v984 = vpop.f32.mrb[0].mxu0
        %v985 = vpop.f32.mrb[0].mxu0
        %v986 = vpop.f32.mrb[0].mxu0
        %987 = vdwg.mxu0
        %vm988 = vcmask 64512
        %v989 = vsel %vm988, %v934, -inf
        %990 = vmax.xlane.f32.xlu0 %v989
        %v991 = vpop.xlane.xlu0 %990
        %v992 = vsel %vm988, %v983, -inf
        %993 = vmax.xlane.f32.xlu0 %v992
        %v994 = vpop.xlane.xlu0 %993
        %v995 = vsub.f32 %v934, %v991
        %v996 = vsub.f32 %v983, %v994
        %v997 = vmul.f32 %v995, 1.442695
        %v998 = vpow.pop %v997
        %v999 = vmul.f32 %v996, 1.442695
        %v1000 = vpow.pop %v999
        %v1001 = vsel %vm988, %v998, 0.0
        %1002 = vadd.xlane.f32.xlu0 %v1001
        %v1003 = vpop.xlane.xlu0 %1002
        %v1004 = vsel %vm988, %v1000, 0.0
        %1005 = vadd.xlane.f32.xlu0 %v1004
        %v1006 = vpop.xlane.xlu0 %1005
        %v1007 = vrcp.pop %v1003
        %v1008 = vrcp.pop %v1006
        %v1009 = vmul.f32 %v998, %v1007
        %v1010 = vmul.f32 %v1000, %v1008
        %v1011 = vpack.c.bf16 %v1009, %v1009
        %v1012 = vpack.c.bf16 %v1010, %v1010
        %1013 = vrot.lane.b32.xlu0 %v877, 64
        %v1014 = vpop.permute.xlu0 %1013
        %v1016 = vsel %vm988, %v1011, 0
        %vm1018 = vcmask 1043456
        %v1020 = vsel %vm1018, %v1014, 0
        %1022 = vmatprep.subr.bf16.mxu0 0
        %1023 = vmatpush1.bf16.msra.mxu0 %v1020
        %1024 = vmatprep.subr.bf16.mxu0 0
        %1025 = vmatpush1.bf16.msra.mxu0 0
        %1026 = vmatprep.subr.bf16.mxu0 0
        %1027 = vmatpush1.bf16.msra.mxu0 0
        %1028 = vmatprep.subr.bf16.mxu0 0
        %1029 = vmatpush1.bf16.msra.mxu0 0
        %1030 = vmatprep.subr.bf16.mxu0 0
        %1031 = vmatpush1.bf16.msra.mxu0 0
        %1032 = vmatprep.subr.bf16.mxu0 0
        %1033 = vmatpush1.bf16.msra.mxu0 0
        %1034 = vmatprep.subr.bf16.mxu0 0
        %1035 = vmatpush1.bf16.msra.mxu0 0
        %1036 = vmatprep.subr.bf16.mxu0 0
        %1037 = vmatpush1.bf16.msra.mxu0 0
        %1038 = vmatprep.subr.bf16.mxu0 0
        %1039 = vmatpush1.bf16.msra.mxu0 0
        %1040 = vmatprep.subr.bf16.mxu0 0
        %1041 = vmatpush1.bf16.msra.mxu0 0
        %1042 = vmatprep.subr.bf16.mxu0 0
        %1043 = vmatpush1.bf16.msra.mxu0 0
        %1044 = vmatprep.subr.bf16.mxu0 0
        %1045 = vmatpush1.bf16.msra.mxu0 0
        %1046 = vmatprep.subr.bf16.mxu0 0
        %1047 = vmatpush1.bf16.msra.mxu0 0
        %1048 = vmatprep.subr.bf16.mxu0 0
        %1049 = vmatpush1.bf16.msra.mxu0 0
        %1050 = vmatprep.subr.bf16.mxu0 0
        %1051 = vmatpush1.bf16.msra.mxu0 0
        %1052 = vmatprep.subr.bf16.mxu0 0
        %1053 = vmatpush1.bf16.msra.mxu0 0
        %1054 = vmatprep.mubr.bf16.mxu0 0
        %1055 = vmatmul.mubr.bf16.gmra.mrb[0].mxu0 %v1016
        %v1056 = vpop.f32.mrb[0].mxu0
        %v1057 = vadd.f32 0.0, %v1056
        %v1058 = vpop.f32.mrb[0].mxu0
        %v1059 = vpop.f32.mrb[0].mxu0
        %v1060 = vpop.f32.mrb[0].mxu0
        %1061 = vdwg.mxu0
        %1062 = vrot.lane.b32.xlu0 %v878, 64
        %v1063 = vpop.permute.xlu0 %1062
        %v1065 = vsel %vm988, %v1012, 0
        %v1068 = vsel %vm1018, %v1063, 0
        %1070 = vmatprep.subr.bf16.mxu0 0
        %1071 = vmatpush1.bf16.msra.mxu0 %v1068
        %1072 = vmatprep.subr.bf16.mxu0 0
        %1073 = vmatpush1.bf16.msra.mxu0 0
        %1074 = vmatprep.subr.bf16.mxu0 0
        %1075 = vmatpush1.bf16.msra.mxu0 0
        %1076 = vmatprep.subr.bf16.mxu0 0
        %1077 = vmatpush1.bf16.msra.mxu0 0
        %1078 = vmatprep.subr.bf16.mxu0 0
        %1079 = vmatpush1.bf16.msra.mxu0 0
        %1080 = vmatprep.subr.bf16.mxu0 0
        %1081 = vmatpush1.bf16.msra.mxu0 0
        %1082 = vmatprep.subr.bf16.mxu0 0
        %1083 = vmatpush1.bf16.msra.mxu0 0
        %1084 = vmatprep.subr.bf16.mxu0 0
        %1085 = vmatpush1.bf16.msra.mxu0 0
        %1086 = vmatprep.subr.bf16.mxu0 0
        %1087 = vmatpush1.bf16.msra.mxu0 0
        %1088 = vmatprep.subr.bf16.mxu0 0
        %1089 = vmatpush1.bf16.msra.mxu0 0
        %1090 = vmatprep.subr.bf16.mxu0 0
        %1091 = vmatpush1.bf16.msra.mxu0 0
        %1092 = vmatprep.subr.bf16.mxu0 0
        %1093 = vmatpush1.bf16.msra.mxu0 0
        %1094 = vmatprep.subr.bf16.mxu0 0
        %1095 = vmatpush1.bf16.msra.mxu0 0
        %1096 = vmatprep.subr.bf16.mxu0 0
        %1097 = vmatpush1.bf16.msra.mxu0 0
        %1098 = vmatprep.subr.bf16.mxu0 0
        %1099 = vmatpush1.bf16.msra.mxu0 0
        %1100 = vmatprep.subr.bf16.mxu0 0
        %1101 = vmatpush1.bf16.msra.mxu0 0
        %1102 = vmatprep.mubr.bf16.mxu0 0
        %1103 = vmatmul.mubr.bf16.gmra.mrb[0].mxu0 %v1065
        %v1104 = vpop.f32.mrb[0].mxu0
        %v1105 = vadd.f32 0.0, %v1104
        %v1106 = vpop.f32.mrb[0].mxu0
        %v1107 = vpop.f32.mrb[0].mxu0
        %v1108 = vpop.f32.mrb[0].mxu0
        %1109 = vdwg.mxu0
        %1110 = vrot.lane.b32.xlu0 %v877, 112
        %v1111 = vpop.permute.xlu0 %1110
        %1112 = vrot.lane.b32.xlu0 %v877, 80
        %v1113 = vpop.permute.xlu0 %1112
        %v1115 = vsel %vm892, %v1111, 0
        %v1118 = vsel %vm892, %v1113, 0
        %1120 = vmatprep.subr.bf16.mxu0 0
        %1121 = vmatpush1.bf16.xpose.msra.mxu0 %v1118
        %1122 = vmatprep.subr.bf16.mxu0 0
        %1123 = vmatpush1.bf16.xpose.msra.mxu0 0
        %1124 = vmatprep.subr.bf16.mxu0 0
        %1125 = vmatpush1.bf16.xpose.msra.mxu0 0
        %1126 = vmatprep.subr.bf16.mxu0 0
        %1127 = vmatpush1.bf16.xpose.msra.mxu0 0
        %1128 = vmatprep.subr.bf16.mxu0 0
        %1129 = vmatpush1.bf16.xpose.msra.mxu0 0
        %1130 = vmatprep.subr.bf16.mxu0 0
        %1131 = vmatpush1.bf16.xpose.msra.mxu0 0
        %1132 = vmatprep.subr.bf16.mxu0 0
        %1133 = vmatpush1.bf16.xpose.msra.mxu0 0
        %1134 = vmatprep.subr.bf16.mxu0 0
        %1135 = vmatpush1.bf16.xpose.msra.mxu0 0
        %1136 = vmatprep.subr.bf16.mxu0 0
        %1137 = vmatpush1.bf16.xpose.msra.mxu0 0
        %1138 = vmatprep.subr.bf16.mxu0 0
        %1139 = vmatpush1.bf16.xpose.msra.mxu0 0
        %1140 = vmatprep.subr.bf16.mxu0 0
        %1141 = vmatpush1.bf16.xpose.msra.mxu0 0
        %1142 = vmatprep.subr.bf16.mxu0 0
        %1143 = vmatpush1.bf16.xpose.msra.mxu0 0
        %1144 = vmatprep.subr.bf16.mxu0 0
        %1145 = vmatpush1.bf16.xpose.msra.mxu0 0
        %1146 = vmatprep.subr.bf16.mxu0 0
        %1147 = vmatpush1.bf16.xpose.msra.mxu0 0
        %1148 = vmatprep.subr.bf16.mxu0 0
        %1149 = vmatpush1.bf16.xpose.msra.mxu0 0
        %1150 = vmatprep.subr.bf16.mxu0 0
        %1151 = vmatpush1.bf16.xpose.msra.mxu0 0
        %1152 = vmatprep.mubr.bf16.mxu0 0
        %1153 = vmatmul.mubr.bf16.gmra.mrb[0].mxu0 %v1115
        %v1154 = vpop.f32.mrb[0].mxu0
        %v1155 = vadd.f32 %v882, %v1154
        %v1156 = vpop.f32.mrb[0].mxu0
        %v1157 = vpop.f32.mrb[0].mxu0
        %v1158 = vpop.f32.mrb[0].mxu0
        %1159 = vdwg.mxu0
        %1160 = vrot.lane.b32.xlu0 %v878, 112
        %v1161 = vpop.permute.xlu0 %1160
        %1162 = vrot.lane.b32.xlu0 %v878, 80
        %v1163 = vpop.permute.xlu0 %1162
        %v1165 = vsel %vm892, %v1161, 0
        %v1168 = vsel %vm892, %v1163, 0
        %1170 = vmatprep.subr.bf16.mxu0 0
        %1171 = vmatpush1.bf16.xpose.msra.mxu0 %v1168
        %1172 = vmatprep.subr.bf16.mxu0 0
        %1173 = vmatpush1.bf16.xpose.msra.mxu0 0
        %1174 = vmatprep.subr.bf16.mxu0 0
        %1175 = vmatpush1.bf16.xpose.msra.mxu0 0
        %1176 = vmatprep.subr.bf16.mxu0 0
        %1177 = vmatpush1.bf16.xpose.msra.mxu0 0
        %1178 = vmatprep.subr.bf16.mxu0 0
        %1179 = vmatpush1.bf16.xpose.msra.mxu0 0
        %1180 = vmatprep.subr.bf16.mxu0 0
        %1181 = vmatpush1.bf16.xpose.msra.mxu0 0
        %1182 = vmatprep.subr.bf16.mxu0 0
        %1183 = vmatpush1.bf16.xpose.msra.mxu0 0
        %1184 = vmatprep.subr.bf16.mxu0 0
        %1185 = vmatpush1.bf16.xpose.msra.mxu0 0
        %1186 = vmatprep.subr.bf16.mxu0 0
        %1187 = vmatpush1.bf16.xpose.msra.mxu0 0
        %1188 = vmatprep.subr.bf16.mxu0 0
        %1189 = vmatpush1.bf16.xpose.msra.mxu0 0
        %1190 = vmatprep.subr.bf16.mxu0 0
        %1191 = vmatpush1.bf16.xpose.msra.mxu0 0
        %1192 = vmatprep.subr.bf16.mxu0 0
        %1193 = vmatpush1.bf16.xpose.msra.mxu0 0
        %1194 = vmatprep.subr.bf16.mxu0 0
        %1195 = vmatpush1.bf16.xpose.msra.mxu0 0
        %1196 = vmatprep.subr.bf16.mxu0 0
        %1197 = vmatpush1.bf16.xpose.msra.mxu0 0
        %1198 = vmatprep.subr.bf16.mxu0 0
        %1199 = vmatpush1.bf16.xpose.msra.mxu0 0
        %1200 = vmatprep.subr.bf16.mxu0 0
        %1201 = vmatpush1.bf16.xpose.msra.mxu0 0
        %1202 = vmatprep.mubr.bf16.mxu0 0
        %1203 = vmatmul.mubr.bf16.gmra.mrb[0].mxu0 %v1165
        %v1204 = vpop.f32.mrb[0].mxu0
        %v1205 = vadd.f32 %v886, %v1204
        %v1206 = vpop.f32.mrb[0].mxu0
        %v1207 = vpop.f32.mrb[0].mxu0
        %v1208 = vpop.f32.mrb[0].mxu0
        %1209 = vdwg.mxu0
        %v1210 = vsel %vm988, %v1155, -inf
        %1211 = vmax.xlane.f32.xlu0 %v1210
        %v1212 = vpop.xlane.xlu0 %1211
        %v1213 = vsel %vm988, %v1205, -inf
        %1214 = vmax.xlane.f32.xlu0 %v1213
        %v1215 = vpop.xlane.xlu0 %1214
        %v1216 = vsub.f32 %v1155, %v1212
        %v1217 = vsub.f32 %v1205, %v1215
        %v1218 = vmul.f32 %v1216, 1.442695
        %v1219 = vpow.pop %v1218
        %v1220 = vmul.f32 %v1217, 1.442695
        %v1221 = vpow.pop %v1220
        %v1222 = vsel %vm988, %v1219, 0.0
        %1223 = vadd.xlane.f32.xlu0 %v1222
        %v1224 = vpop.xlane.xlu0 %1223
        %v1225 = vsel %vm988, %v1221, 0.0
        %1226 = vadd.xlane.f32.xlu0 %v1225
        %v1227 = vpop.xlane.xlu0 %1226
        %v1228 = vrcp.pop %v1224
        %v1229 = vrcp.pop %v1227
        %v1230 = vmul.f32 %v1219, %v1228
        %v1231 = vmul.f32 %v1221, %v1229
        %v1232 = vpack.c.bf16 %v1230, %v1230
        %v1233 = vpack.c.bf16 %v1231, %v1231
        %1234 = vrot.lane.b32.xlu0 %v877, 48
        %v1235 = vpop.permute.xlu0 %1234
        %v1237 = vsel %vm988, %v1232, 0
        %v1240 = vsel %vm1018, %v1235, 0
        %1242 = vmatprep.subr.bf16.mxu0 0
        %1243 = vmatpush1.bf16.msra.mxu0 %v1240
        %1244 = vmatprep.subr.bf16.mxu0 0
        %1245 = vmatpush1.bf16.msra.mxu0 0
        %1246 = vmatprep.subr.bf16.mxu0 0
        %1247 = vmatpush1.bf16.msra.mxu0 0
        %1248 = vmatprep.subr.bf16.mxu0 0
        %1249 = vmatpush1.bf16.msra.mxu0 0
        %1250 = vmatprep.subr.bf16.mxu0 0
        %1251 = vmatpush1.bf16.msra.mxu0 0
        %1252 = vmatprep.subr.bf16.mxu0 0
        %1253 = vmatpush1.bf16.msra.mxu0 0
        %1254 = vmatprep.subr.bf16.mxu0 0
        %1255 = vmatpush1.bf16.msra.mxu0 0
        %1256 = vmatprep.subr.bf16.mxu0 0
        %1257 = vmatpush1.bf16.msra.mxu0 0
        %1258 = vmatprep.subr.bf16.mxu0 0
        %1259 = vmatpush1.bf16.msra.mxu0 0
        %1260 = vmatprep.subr.bf16.mxu0 0
        %1261 = vmatpush1.bf16.msra.mxu0 0
        %1262 = vmatprep.subr.bf16.mxu0 0
        %1263 = vmatpush1.bf16.msra.mxu0 0
        %1264 = vmatprep.subr.bf16.mxu0 0
        %1265 = vmatpush1.bf16.msra.mxu0 0
        %1266 = vmatprep.subr.bf16.mxu0 0
        %1267 = vmatpush1.bf16.msra.mxu0 0
        %1268 = vmatprep.subr.bf16.mxu0 0
        %1269 = vmatpush1.bf16.msra.mxu0 0
        %1270 = vmatprep.subr.bf16.mxu0 0
        %1271 = vmatpush1.bf16.msra.mxu0 0
        %1272 = vmatprep.subr.bf16.mxu0 0
        %1273 = vmatpush1.bf16.msra.mxu0 0
        %1274 = vmatprep.mubr.bf16.mxu0 0
        %1275 = vmatmul.mubr.bf16.gmra.mrb[0].mxu0 %v1237
        %v1276 = vpop.f32.mrb[0].mxu0
        %v1277 = vadd.f32 0.0, %v1276
        %v1278 = vpop.f32.mrb[0].mxu0
        %v1279 = vpop.f32.mrb[0].mxu0
        %v1280 = vpop.f32.mrb[0].mxu0
        %1281 = vdwg.mxu0
        %1282 = vrot.lane.b32.xlu0 %v878, 48
        %v1283 = vpop.permute.xlu0 %1282
        %v1285 = vsel %vm988, %v1233, 0
        %v1288 = vsel %vm1018, %v1283, 0
        %1290 = vmatprep.subr.bf16.mxu0 0
        %1291 = vmatpush1.bf16.msra.mxu0 %v1288
        %1292 = vmatprep.subr.bf16.mxu0 0
        %1293 = vmatpush1.bf16.msra.mxu0 0
        %1294 = vmatprep.subr.bf16.mxu0 0
        %1295 = vmatpush1.bf16.msra.mxu0 0
        %1296 = vmatprep.subr.bf16.mxu0 0
        %1297 = vmatpush1.bf16.msra.mxu0 0
        %1298 = vmatprep.subr.bf16.mxu0 0
        %1299 = vmatpush1.bf16.msra.mxu0 0
        %1300 = vmatprep.subr.bf16.mxu0 0
        %1301 = vmatpush1.bf16.msra.mxu0 0
        %1302 = vmatprep.subr.bf16.mxu0 0
        %1303 = vmatpush1.bf16.msra.mxu0 0
        %1304 = vmatprep.subr.bf16.mxu0 0
        %1305 = vmatpush1.bf16.msra.mxu0 0
        %1306 = vmatprep.subr.bf16.mxu0 0
        %1307 = vmatpush1.bf16.msra.mxu0 0
        %1308 = vmatprep.subr.bf16.mxu0 0
        %1309 = vmatpush1.bf16.msra.mxu0 0
        %1310 = vmatprep.subr.bf16.mxu0 0
        %1311 = vmatpush1.bf16.msra.mxu0 0
        %1312 = vmatprep.subr.bf16.mxu0 0
        %1313 = vmatpush1.bf16.msra.mxu0 0
        %1314 = vmatprep.subr.bf16.mxu0 0
        %1315 = vmatpush1.bf16.msra.mxu0 0
        %1316 = vmatprep.subr.bf16.mxu0 0
        %1317 = vmatpush1.bf16.msra.mxu0 0
        %1318 = vmatprep.subr.bf16.mxu0 0
        %1319 = vmatpush1.bf16.msra.mxu0 0
        %1320 = vmatprep.subr.bf16.mxu0 0
        %1321 = vmatpush1.bf16.msra.mxu0 0
        %1322 = vmatprep.mubr.bf16.mxu0 0
        %1323 = vmatmul.mubr.bf16.gmra.mrb[0].mxu0 %v1285
        %v1324 = vpop.f32.mrb[0].mxu0
        %v1325 = vadd.f32 0.0, %v1324
        %v1326 = vpop.f32.mrb[0].mxu0
        %v1327 = vpop.f32.mrb[0].mxu0
        %v1328 = vpop.f32.mrb[0].mxu0
        %1329 = vdwg.mxu0
        %1332 = vrot.lane.b32.xlu0 %v1277, 16
        %v1333 = vpop.permute.xlu0 %1332
        %1334 = vrot.lane.b32.xlu0 %v1325, 16
        %v1335 = vpop.permute.xlu0 %1334
        %v1338 = vsel %vm892, %v1057, %v1333
        %v1339 = vsel %vm892, %v1105, %v1335
        %v1340 = vld [vmem:[%s9] sm:$0xf]
        %v1341 = vld [vmem:[%s9 + $0x4] sm:$0xf]
        %v1342 = vld [vmem:[%s9 + $0x8] sm:$0xf]
        %v1343 = vld [vmem:[%s9 + $0xc] sm:$0xf]
        %v1344 = vpack.c.bf16 %v1339, %v1338
        %v1345 = vld [vmem:[%s10] sm:$0x1]
        %v1347 = vlaneseq
        %v1348 = vshrl.u32 %v1347, 7
        %v1349 = vsub.s32 0, %v1348
        %v1350 = vrot.slane %v1345, %v1349
        %v1356 = vunpack.c.l.b16 %v1340
        %v1357 = vunpack.c.l.b16 %v1341
        %v1358 = vunpack.c.l.b16 %v1342
        %v1359 = vunpack.c.l.b16 %v1343
        %v1360 = vpack.c.b16 %v1357, %v1356
        %v1361 = vpack.c.b16 %v1359, %v1358
        %v1365 = vsel %vm765, %v1344, 0
        %1367 = vmatprep.subr.bf16.mxu0 0
        %1368 = vmatpush1.bf16.msra.mxu0 %v1360
        %1369 = vmatprep.subr.bf16.mxu0 0
        %1370 = vmatpush1.bf16.msra.mxu0 %v1361
        %1371 = vmatprep.subr.bf16.mxu0 0
        %1372 = vmatpush1.bf16.msra.mxu0 0
        %1373 = vmatprep.subr.bf16.mxu0 0
        %1374 = vmatpush1.bf16.msra.mxu0 0
        %1375 = vmatprep.subr.bf16.mxu0 0
        %1376 = vmatpush1.bf16.msra.mxu0 0
        %1377 = vmatprep.subr.bf16.mxu0 0
        %1378 = vmatpush1.bf16.msra.mxu0 0
        %1379 = vmatprep.subr.bf16.mxu0 0
        %1380 = vmatpush1.bf16.msra.mxu0 0
        %1381 = vmatprep.subr.bf16.mxu0 0
        %1382 = vmatpush1.bf16.msra.mxu0 0
        %1383 = vmatprep.subr.bf16.mxu0 0
        %1384 = vmatpush1.bf16.msra.mxu0 0
        %1385 = vmatprep.subr.bf16.mxu0 0
        %1386 = vmatpush1.bf16.msra.mxu0 0
        %1387 = vmatprep.subr.bf16.mxu0 0
        %1388 = vmatpush1.bf16.msra.mxu0 0
        %1389 = vmatprep.subr.bf16.mxu0 0
        %1390 = vmatpush1.bf16.msra.mxu0 0
        %1391 = vmatprep.subr.bf16.mxu0 0
        %1392 = vmatpush1.bf16.msra.mxu0 0
        %1393 = vmatprep.subr.bf16.mxu0 0
        %1394 = vmatpush1.bf16.msra.mxu0 0
        %1395 = vmatprep.subr.bf16.mxu0 0
        %1396 = vmatpush1.bf16.msra.mxu0 0
        %1397 = vmatprep.subr.bf16.mxu0 0
        %1398 = vmatpush1.bf16.msra.mxu0 0
        %1399 = vmatprep.mubr.bf16.mxu0 0
        %1400 = vmatmul.mubr.bf16.gmra.mrb[0].mxu0 %v1365
        %v1401 = vpop.f32.mrb[0].mxu0
        %v1402 = vadd.f32 %v1350, %v1401
        %v1403 = vpop.f32.mrb[0].mxu0
        %v1404 = vpop.f32.mrb[0].mxu0
        %v1405 = vadd.f32 %v1350, %v1404
        %v1406 = vpop.f32.mrb[0].mxu0
        %1407 = vdwg.mxu0
        %v1408 = vadd.f32 %v1402, %v807
        %v1409 = vadd.f32 %v1405, %v808
        %v1410 = vld [vmem:[%s11] sm:$0x1]
        %v1411 = vld [vmem:[%s12] sm:$0x1]
        %v1412 = vsel %vm765, %v1408, 0.0
        %1413 = vadd.xlane.f32.xlu0 %v1412
        %v1414 = vpop.xlane.xlu0 %1413
        %v1415 = vsel %vm765, %v1409, 0.0
        %1416 = vadd.xlane.f32.xlu0 %v1415
        %v1417 = vpop.xlane.xlu0 %1416
        %v1418 = vmul.f32 %v1414, %v772
        %v1419 = vmul.f32 %v1417, %v772
        %v1420 = vsub.f32 %v1408, %v1418
        %v1421 = vsub.f32 %v1409, %v1419
        %v1422 = vmul.f32 %v1420, %v1420
        %v1423 = vmul.f32 %v1421, %v1421
        %v1424 = vsel %vm765, %v1422, 0.0
        %1425 = vadd.xlane.f32.xlu0 %v1424
        %v1426 = vpop.xlane.xlu0 %1425
        %v1427 = vsel %vm765, %v1423, 0.0
        %1428 = vadd.xlane.f32.xlu0 %v1427
        %v1429 = vpop.xlane.xlu0 %1428
        %v1430 = vmul.f32 %v1426, %v772
        %v1431 = vmul.f32 %v1429, %v772
        %v1432 = vadd.f32 %v1430, 1e-12
        %v1433 = vadd.f32 %v1431, 1e-12
        %v1434 = vrsqrt.pop %v1432
        %v1435 = vrsqrt.pop %v1433
        %v1436 = vmul.f32 %v1420, %v1434
        %v1437 = vmul.f32 %v1421, %v1435
        %v1439 = vlaneseq
        %v1440 = vshrl.u32 %v1439, 7
        %v1441 = vsub.s32 0, %v1440
        %v1442 = vrot.slane %v1410, %v1441
        %v1444 = vmul.f32 %v1436, %v1442
        %v1445 = vmul.f32 %v1437, %v1442
        %v1447 = vlaneseq
        %v1448 = vshrl.u32 %v1447, 7
        %v1449 = vsub.s32 0, %v1448
        %v1450 = vrot.slane %v1411, %v1449
        %v1452 = vadd.f32 %v1444, %v1450
        %v1453 = vadd.f32 %v1445, %v1450
        %v1454 = vld [vmem:[%s13] sm:$0xf]
        %v1455 = vld [vmem:[%s13 + $0x4] sm:$0xf]
        %v1456 = vld [vmem:[%s13 + $0x8] sm:$0xf]
        %v1457 = vld [vmem:[%s13 + $0xc] sm:$0xf]
        %v1458 = vpack.c.bf16 %v1453, %v1452
        %v1459 = vld [vmem:[%s14] sm:$0x1]
        %v1461 = vlaneseq
        %v1462 = vshrl.u32 %v1461, 7
        %v1463 = vsub.s32 0, %v1462
        %v1464 = vrot.slane %v1459, %v1463
        %v1470 = vunpack.c.l.b16 %v1454
        %v1471 = vunpack.c.l.b16 %v1455
        %v1472 = vunpack.c.l.b16 %v1456
        %v1473 = vunpack.c.l.b16 %v1457
        %v1474 = vpack.c.b16 %v1471, %v1470
        %v1475 = vpack.c.b16 %v1473, %v1472
        %v1479 = vsel %vm765, %v1458, 0
        %1481 = vmatprep.subr.bf16.mxu0 0
        %1482 = vmatpush1.bf16.msra.mxu0 %v1474
        %1483 = vmatprep.subr.bf16.mxu0 0
        %1484 = vmatpush1.bf16.msra.mxu0 %v1475
        %1485 = vmatprep.subr.bf16.mxu0 0
        %1486 = vmatpush1.bf16.msra.mxu0 0
        %1487 = vmatprep.subr.bf16.mxu0 0
        %1488 = vmatpush1.bf16.msra.mxu0 0
        %1489 = vmatprep.subr.bf16.mxu0 0
        %1490 = vmatpush1.bf16.msra.mxu0 0
        %1491 = vmatprep.subr.bf16.mxu0 0
        %1492 = vmatpush1.bf16.msra.mxu0 0
        %1493 = vmatprep.subr.bf16.mxu0 0
        %1494 = vmatpush1.bf16.msra.mxu0 0
        %1495 = vmatprep.subr.bf16.mxu0 0
        %1496 = vmatpush1.bf16.msra.mxu0 0
        %1497 = vmatprep.subr.bf16.mxu0 0
        %1498 = vmatpush1.bf16.msra.mxu0 0
        %1499 = vmatprep.subr.bf16.mxu0 0
        %1500 = vmatpush1.bf16.msra.mxu0 0
        %1501 = vmatprep.subr.bf16.mxu0 0
        %1502 = vmatpush1.bf16.msra.mxu0 0
        %1503 = vmatprep.subr.bf16.mxu0 0
        %1504 = vmatpush1.bf16.msra.mxu0 0
        %1505 = vmatprep.subr.bf16.mxu0 0
        %1506 = vmatpush1.bf16.msra.mxu0 0
        %1507 = vmatprep.subr.bf16.mxu0 0
        %1508 = vmatpush1.bf16.msra.mxu0 0
        %1509 = vmatprep.subr.bf16.mxu0 0
        %1510 = vmatpush1.bf16.msra.mxu0 0
        %1511 = vmatprep.subr.bf16.mxu0 0
        %1512 = vmatpush1.bf16.msra.mxu0 0
        %1513 = vmatprep.mubr.bf16.mxu0 0
        %1514 = vmatmul.mubr.bf16.gmra.mrb[0].mxu0 %v1479
        %v1515 = vpop.f32.mrb[0].mxu0
        %v1516 = vadd.f32 %v1464, %v1515
        %v1517 = vpop.f32.mrb[0].mxu0
        %v1518 = vpop.f32.mrb[0].mxu0
        %v1519 = vadd.f32 %v1464, %v1518
        %v1520 = vpop.f32.mrb[0].mxu0
        %1521 = vdwg.mxu0
        %v1522 = vmul.f32 %v1516, %v1516
        %v1523 = vmul.f32 %v1519, %v1519
        %v1524 = vmul.f32 %v1516, %v1522
        %v1525 = vmul.f32 %v1519, %v1523
        %v1526 = vmul.f32 %v1524, 0.044715
        %v1527 = vmul.f32 %v1525, 0.044715
        %v1528 = vadd.f32 %v1516, %v1526
        %v1529 = vadd.f32 %v1519, %v1527
        %v1530 = vmul.f32 %v1528, 0.7978846
        %v1531 = vmul.f32 %v1529, 0.7978846
        %v1532 = vtanh.pop %v1530
        %v1533 = vtanh.pop %v1531
        %v1534 = vadd.f32 %v1532, 1.0
        %v1535 = vadd.f32 %v1533, 1.0
        %v1536 = vmul.f32 %v1534, 0.5
        %v1537 = vmul.f32 %v1535, 0.5
        %v1538 = vmul.f32 %v1516, %v1536
        %v1539 = vmul.f32 %v1519, %v1537
        %v1540 = vld [vmem:[%s15] sm:$0xf]
        %v1541 = vld [vmem:[%s15 + $0x4] sm:$0xf]
        %v1542 = vld [vmem:[%s15 + $0x8] sm:$0xf]
        %v1543 = vld [vmem:[%s15 + $0xc] sm:$0xf]
        %v1544 = vld [vmem:[%s15 + $0x10] sm:$0xf]
        %v1545 = vld [vmem:[%s15 + $0x14] sm:$0xf]
        %v1546 = vld [vmem:[%s15 + $0x18] sm:$0xf]
        %v1547 = vld [vmem:[%s15 + $0x1c] sm:$0xf]
        %v1548 = vpack.c.bf16 %v1539, %v1538
        %v1549 = vld [vmem:[%s16] sm:$0x1]
        %v1551 = vlaneseq
        %v1552 = vshrl.u32 %v1551, 7
        %v1553 = vsub.s32 0, %v1552
        %v1554 = vrot.slane %v1549, %v1553
        %v1564 = vunpack.c.l.b16 %v1540
        %v1565 = vunpack.c.l.b16 %v1541
        %v1566 = vunpack.c.l.b16 %v1542
        %v1567 = vunpack.c.l.b16 %v1543
        %v1568 = vunpack.c.l.b16 %v1544
        %v1569 = vunpack.c.l.b16 %v1545
        %v1570 = vunpack.c.l.b16 %v1546
        %v1571 = vunpack.c.l.b16 %v1547
        %v1572 = vpack.c.b16 %v1565, %v1564
        %v1573 = vpack.c.b16 %v1567, %v1566
        %v1574 = vpack.c.b16 %v1569, %v1568
        %v1575 = vpack.c.b16 %v1571, %v1570
        %v1581 = vsel %vm669, %v1548, 0
        %1583 = vmatprep.subr.bf16.mxu0 0
        %1584 = vmatpush1.bf16.msra.mxu0 %v1572
        %1585 = vmatprep.subr.bf16.mxu0 0
        %1586 = vmatpush1.bf16.msra.mxu0 %v1573
        %1587 = vmatprep.subr.bf16.mxu0 0
        %1588 = vmatpush1.bf16.msra.mxu0 %v1574
        %1589 = vmatprep.subr.bf16.mxu0 0
        %1590 = vmatpush1.bf16.msra.mxu0 %v1575
        %1591 = vmatprep.subr.bf16.mxu0 0
        %1592 = vmatpush1.bf16.msra.mxu0 0
        %1593 = vmatprep.subr.bf16.mxu0 0
        %1594 = vmatpush1.bf16.msra.mxu0 0
        %1595 = vmatprep.subr.bf16.mxu0 0
        %1596 = vmatpush1.bf16.msra.mxu0 0
        %1597 = vmatprep.subr.bf16.mxu0 0
        %1598 = vmatpush1.bf16.msra.mxu0 0
        %1599 = vmatprep.subr.bf16.mxu0 0
        %1600 = vmatpush1.bf16.msra.mxu0 0
        %1601 = vmatprep.subr.bf16.mxu0 0
        %1602 = vmatpush1.bf16.msra.mxu0 0
        %1603 = vmatprep.subr.bf16.mxu0 0
        %1604 = vmatpush1.bf16.msra.mxu0 0
        %1605 = vmatprep.subr.bf16.mxu0 0
        %1606 = vmatpush1.bf16.msra.mxu0 0
        %1607 = vmatprep.subr.bf16.mxu0 0
        %1608 = vmatpush1.bf16.msra.mxu0 0
        %1609 = vmatprep.subr.bf16.mxu0 0
        %1610 = vmatpush1.bf16.msra.mxu0 0
        %1611 = vmatprep.subr.bf16.mxu0 0
        %1612 = vmatpush1.bf16.msra.mxu0 0
        %1613 = vmatprep.subr.bf16.mxu0 0
        %1614 = vmatpush1.bf16.msra.mxu0 0
        %1615 = vmatprep.mubr.bf16.mxu0 0
        %1616 = vmatmul.mubr.bf16.gmra.mrb[0].mxu0 %v1581
        %v1617 = vpop.f32.mrb[0].mxu0
        %v1618 = vadd.f32 %v1554, %v1617
        %v1619 = vpop.f32.mrb[0].mxu0
        %v1620 = vpop.f32.mrb[0].mxu0
        %v1621 = vadd.f32 %v1554, %v1620
        %v1622 = vpop.f32.mrb[0].mxu0
        %1623 = vdwg.mxu0
        %v1624 = vadd.f32 %v1618, %v1452
        %v1625 = vadd.f32 %v1621, %v1453
        %v1626 = vld [vmem:[%s17] sm:$0x1]
        %v1627 = vld [vmem:[%s18] sm:$0x1]
        %v1628 = vsel %vm765, %v1624, 0.0
        %1629 = vadd.xlane.f32.xlu0 %v1628
        %v1630 = vpop.xlane.xlu0 %1629
        %v1631 = vsel %vm765, %v1625, 0.0
        %1632 = vadd.xlane.f32.xlu0 %v1631
        %v1633 = vpop.xlane.xlu0 %1632
        %v1634 = vmul.f32 %v1630, %v772
        %v1635 = vmul.f32 %v1633, %v772
        %v1636 = vsub.f32 %v1624, %v1634
        %v1637 = vsub.f32 %v1625, %v1635
        %v1638 = vmul.f32 %v1636, %v1636
        %v1639 = vmul.f32 %v1637, %v1637
        %v1640 = vsel %vm765, %v1638, 0.0
        %1641 = vadd.xlane.f32.xlu0 %v1640
        %v1642 = vpop.xlane.xlu0 %1641
        %v1643 = vsel %vm765, %v1639, 0.0
        %1644 = vadd.xlane.f32.xlu0 %v1643
        %v1645 = vpop.xlane.xlu0 %1644
        %v1646 = vmul.f32 %v1642, %v772
        %v1647 = vmul.f32 %v1645, %v772
        %v1648 = vadd.f32 %v1646, 1e-12
        %v1649 = vadd.f32 %v1647, 1e-12
        %v1650 = vrsqrt.pop %v1648
        %v1651 = vrsqrt.pop %v1649
        %v1652 = vmul.f32 %v1636, %v1650
        %v1653 = vmul.f32 %v1637, %v1651
        %v1655 = vlaneseq
        %v1656 = vshrl.u32 %v1655, 7
        %v1657 = vsub.s32 0, %v1656
        %v1658 = vrot.slane %v1626, %v1657
        %v1660 = vmul.f32 %v1652, %v1658
        %v1661 = vmul.f32 %v1653, %v1658
        %v1663 = vlaneseq
        %v1664 = vshrl.u32 %v1663, 7
        %v1665 = vsub.s32 0, %v1664
        %v1666 = vrot.slane %v1627, %v1665
        %v1668 = vadd.f32 %v1660, %v1666
        %v1669 = vadd.f32 %v1661, %v1666
        %s1670 = scalar_lea.vmem %s7, 16
        %v1671 = vld [vmem:[%s1670] sm:$0xf]
        %v1672 = vld [vmem:[%s1670 + $0x4] sm:$0xf]
        %v1673 = vld [vmem:[%s1670 + $0x8] sm:$0xf]
        %v1674 = vld [vmem:[%s1670 + $0xc] sm:$0xf]
        %v1675 = vpack.c.bf16 %v1669, %v1668
        %s1676 = scalar_lea.vmem %s8, 1
        %v1677 = vld [vmem:[%s1676] sm:$0x1]
        %v1679 = vlaneseq
        %v1680 = vshrl.u32 %v1679, 7
        %v1681 = vsub.s32 0, %v1680
        %v1682 = vrot.slane %v1677, %v1681
        %v1688 = vunpack.c.l.b16 %v1671
        %v1689 = vunpack.c.l.b16 %v1672
        %v1690 = vunpack.c.l.b16 %v1673
        %v1691 = vunpack.c.l.b16 %v1674
        %v1692 = vpack.c.b16 %v1689, %v1688
        %v1693 = vpack.c.b16 %v1691, %v1690
        %v1697 = vsel %vm765, %v1675, 0
        %1699 = vmatprep.subr.bf16.mxu0 0
        %1700 = vmatpush1.bf16.msra.mxu0 %v1692
        %1701 = vmatprep.subr.bf16.mxu0 0
        %1702 = vmatpush1.bf16.msra.mxu0 %v1693
        %1703 = vmatprep.subr.bf16.mxu0 0
        %1704 = vmatpush1.bf16.msra.mxu0 0
        %1705 = vmatprep.subr.bf16.mxu0 0
        %1706 = vmatpush1.bf16.msra.mxu0 0
        %1707 = vmatprep.subr.bf16.mxu0 0
        %1708 = vmatpush1.bf16.msra.mxu0 0
        %1709 = vmatprep.subr.bf16.mxu0 0
        %1710 = vmatpush1.bf16.msra.mxu0 0
        %1711 = vmatprep.subr.bf16.mxu0 0
        %1712 = vmatpush1.bf16.msra.mxu0 0
        %1713 = vmatprep.subr.bf16.mxu0 0
        %1714 = vmatpush1.bf16.msra.mxu0 0
        %1715 = vmatprep.subr.bf16.mxu0 0
        %1716 = vmatpush1.bf16.msra.mxu0 0
        %1717 = vmatprep.subr.bf16.mxu0 0
        %1718 = vmatpush1.bf16.msra.mxu0 0
        %1719 = vmatprep.subr.bf16.mxu0 0
        %1720 = vmatpush1.bf16.msra.mxu0 0
        %1721 = vmatprep.subr.bf16.mxu0 0
        %1722 = vmatpush1.bf16.msra.mxu0 0
        %1723 = vmatprep.subr.bf16.mxu0 0
        %1724 = vmatpush1.bf16.msra.mxu0 0
        %1725 = vmatprep.subr.bf16.mxu0 0
        %1726 = vmatpush1.bf16.msra.mxu0 0
        %1727 = vmatprep.subr.bf16.mxu0 0
        %1728 = vmatpush1.bf16.msra.mxu0 0
        %1729 = vmatprep.subr.bf16.mxu0 0
        %1730 = vmatpush1.bf16.msra.mxu0 0
        %1731 = vmatprep.mubr.bf16.mxu0 0
        %1732 = vmatmul.mubr.bf16.gmra.mrb[0].mxu0 %v1697
        %v1733 = vpop.f32.mrb[0].mxu0
        %v1734 = vadd.f32 %v1682, %v1733
        %v1735 = vpop.f32.mrb[0].mxu0
        %v1736 = vpop.f32.mrb[0].mxu0
        %v1737 = vadd.f32 %v1682, %v1736
        %v1738 = vpop.f32.mrb[0].mxu0
        %1739 = vdwg.mxu0
        %v1740 = vpack.c.bf16 %v1734, %v1734
        %v1741 = vpack.c.bf16 %v1737, %v1737
        %1743 = vrot.lane.b32.xlu0 %v1740, 96
        %v1744 = vpop.permute.xlu0 %1743
        %v1746 = vsel %vm892, %v1740, 0
        %v1749 = vsel %vm892, %v1744, 0
        %1751 = vmatprep.subr.bf16.mxu0 0
        %1752 = vmatpush1.bf16.xpose.msra.mxu0 %v1749
        %1753 = vmatprep.subr.bf16.mxu0 0
        %1754 = vmatpush1.bf16.xpose.msra.mxu0 0
        %1755 = vmatprep.subr.bf16.mxu0 0
        %1756 = vmatpush1.bf16.xpose.msra.mxu0 0
        %1757 = vmatprep.subr.bf16.mxu0 0
        %1758 = vmatpush1.bf16.xpose.msra.mxu0 0
        %1759 = vmatprep.subr.bf16.mxu0 0
        %1760 = vmatpush1.bf16.xpose.msra.mxu0 0
        %1761 = vmatprep.subr.bf16.mxu0 0
        %1762 = vmatpush1.bf16.xpose.msra.mxu0 0
        %1763 = vmatprep.subr.bf16.mxu0 0
        %1764 = vmatpush1.bf16.xpose.msra.mxu0 0
        %1765 = vmatprep.subr.bf16.mxu0 0
        %1766 = vmatpush1.bf16.xpose.msra.mxu0 0
        %1767 = vmatprep.subr.bf16.mxu0 0
        %1768 = vmatpush1.bf16.xpose.msra.mxu0 0
        %1769 = vmatprep.subr.bf16.mxu0 0
        %1770 = vmatpush1.bf16.xpose.msra.mxu0 0
        %1771 = vmatprep.subr.bf16.mxu0 0
        %1772 = vmatpush1.bf16.xpose.msra.mxu0 0
        %1773 = vmatprep.subr.bf16.mxu0 0
        %1774 = vmatpush1.bf16.xpose.msra.mxu0 0
        %1775 = vmatprep.subr.bf16.mxu0 0
        %1776 = vmatpush1.bf16.xpose.msra.mxu0 0
        %1777 = vmatprep.subr.bf16.mxu0 0
        %1778 = vmatpush1.bf16.xpose.msra.mxu0 0
        %1779 = vmatprep.subr.bf16.mxu0 0
        %1780 = vmatpush1.bf16.xpose.msra.mxu0 0
        %1781 = vmatprep.subr.bf16.mxu0 0
        %1782 = vmatpush1.bf16.xpose.msra.mxu0 0
        %1783 = vmatprep.mubr.bf16.mxu0 0
        %1784 = vmatmul.mubr.bf16.gmra.mrb[0].mxu0 %v1746
        %v1785 = vpop.f32.mrb[0].mxu0
        %v1786 = vadd.f32 %v882, %v1785
        %v1787 = vpop.f32.mrb[0].mxu0
        %v1788 = vpop.f32.mrb[0].mxu0
        %v1789 = vpop.f32.mrb[0].mxu0
        %1790 = vdwg.mxu0
        %1792 = vrot.lane.b32.xlu0 %v1741, 96
        %v1793 = vpop.permute.xlu0 %1792
        %v1795 = vsel %vm892, %v1741, 0
        %v1798 = vsel %vm892, %v1793, 0
        %1800 = vmatprep.subr.bf16.mxu0 0
        %1801 = vmatpush1.bf16.xpose.msra.mxu0 %v1798
        %1802 = vmatprep.subr.bf16.mxu0 0
        %1803 = vmatpush1.bf16.xpose.msra.mxu0 0
        %1804 = vmatprep.subr.bf16.mxu0 0
        %1805 = vmatpush1.bf16.xpose.msra.mxu0 0
        %1806 = vmatprep.subr.bf16.mxu0 0
        %1807 = vmatpush1.bf16.xpose.msra.mxu0 0
        %1808 = vmatprep.subr.bf16.mxu0 0
        %1809 = vmatpush1.bf16.xpose.msra.mxu0 0
        %1810 = vmatprep.subr.bf16.mxu0 0
        %1811 = vmatpush1.bf16.xpose.msra.mxu0 0
        %1812 = vmatprep.subr.bf16.mxu0 0
        %1813 = vmatpush1.bf16.xpose.msra.mxu0 0
        %1814 = vmatprep.subr.bf16.mxu0 0
        %1815 = vmatpush1.bf16.xpose.msra.mxu0 0
        %1816 = vmatprep.subr.bf16.mxu0 0
        %1817 = vmatpush1.bf16.xpose.msra.mxu0 0
        %1818 = vmatprep.subr.bf16.mxu0 0
        %1819 = vmatpush1.bf16.xpose.msra.mxu0 0
        %1820 = vmatprep.subr.bf16.mxu0 0
        %1821 = vmatpush1.bf16.xpose.msra.mxu0 0
        %1822 = vmatprep.subr.bf16.mxu0 0
        %1823 = vmatpush1.bf16.xpose.msra.mxu0 0
        %1824 = vmatprep.subr.bf16.mxu0 0
        %1825 = vmatpush1.bf16.xpose.msra.mxu0 0
        %1826 = vmatprep.subr.bf16.mxu0 0
        %1827 = vmatpush1.bf16.xpose.msra.mxu0 0
        %1828 = vmatprep.subr.bf16.mxu0 0
        %1829 = vmatpush1.bf16.xpose.msra.mxu0 0
        %1830 = vmatprep.subr.bf16.mxu0 0
        %1831 = vmatpush1.bf16.xpose.msra.mxu0 0
        %1832 = vmatprep.mubr.bf16.mxu0 0
        %1833 = vmatmul.mubr.bf16.gmra.mrb[0].mxu0 %v1795
        %v1834 = vpop.f32.mrb[0].mxu0
        %v1835 = vadd.f32 %v886, %v1834
        %v1836 = vpop.f32.mrb[0].mxu0
        %v1837 = vpop.f32.mrb[0].mxu0
        %v1838 = vpop.f32.mrb[0].mxu0
        %1839 = vdwg.mxu0
        %v1840 = vsel %vm988, %v1786, -inf
        %1841 = vmax.xlane.f32.xlu0 %v1840
        %v1842 = vpop.xlane.xlu0 %1841
        %v1843 = vsel %vm988, %v1835, -inf
        %1844 = vmax.xlane.f32.xlu0 %v1843
        %v1845 = vpop.xlane.xlu0 %1844
        %v1846 = vsub.f32 %v1786, %v1842
        %v1847 = vsub.f32 %v1835, %v1845
        %v1848 = vmul.f32 %v1846, 1.442695
        %v1849 = vpow.pop %v1848
        %v1850 = vmul.f32 %v1847, 1.442695
        %v1851 = vpow.pop %v1850
        %v1852 = vsel %vm988, %v1849, 0.0
        %1853 = vadd.xlane.f32.xlu0 %v1852
        %v1854 = vpop.xlane.xlu0 %1853
        %v1855 = vsel %vm988, %v1851, 0.0
        %1856 = vadd.xlane.f32.xlu0 %v1855
        %v1857 = vpop.xlane.xlu0 %1856
        %v1858 = vrcp.pop %v1854
        %v1859 = vrcp.pop %v1857
        %v1860 = vmul.f32 %v1849, %v1858
        %v1861 = vmul.f32 %v1851, %v1859
        %v1862 = vpack.c.bf16 %v1860, %v1860
        %v1863 = vpack.c.bf16 %v1861, %v1861
        %1864 = vrot.lane.b32.xlu0 %v1740, 64
        %v1865 = vpop.permute.xlu0 %1864
        %v1867 = vsel %vm988, %v1862, 0
        %v1870 = vsel %vm1018, %v1865, 0
        %1872 = vmatprep.subr.bf16.mxu0 0
        %1873 = vmatpush1.bf16.msra.mxu0 %v1870
        %1874 = vmatprep.subr.bf16.mxu0 0
        %1875 = vmatpush1.bf16.msra.mxu0 0
        %1876 = vmatprep.subr.bf16.mxu0 0
        %1877 = vmatpush1.bf16.msra.mxu0 0
        %1878 = vmatprep.subr.bf16.mxu0 0
        %1879 = vmatpush1.bf16.msra.mxu0 0
        %1880 = vmatprep.subr.bf16.mxu0 0
        %1881 = vmatpush1.bf16.msra.mxu0 0
        %1882 = vmatprep.subr.bf16.mxu0 0
        %1883 = vmatpush1.bf16.msra.mxu0 0
        %1884 = vmatprep.subr.bf16.mxu0 0
        %1885 = vmatpush1.bf16.msra.mxu0 0
        %1886 = vmatprep.subr.bf16.mxu0 0
        %1887 = vmatpush1.bf16.msra.mxu0 0
        %1888 = vmatprep.subr.bf16.mxu0 0
        %1889 = vmatpush1.bf16.msra.mxu0 0
        %1890 = vmatprep.subr.bf16.mxu0 0
        %1891 = vmatpush1.bf16.msra.mxu0 0
        %1892 = vmatprep.subr.bf16.mxu0 0
        %1893 = vmatpush1.bf16.msra.mxu0 0
        %1894 = vmatprep.subr.bf16.mxu0 0
        %1895 = vmatpush1.bf16.msra.mxu0 0
        %1896 = vmatprep.subr.bf16.mxu0 0
        %1897 = vmatpush1.bf16.msra.mxu0 0
        %1898 = vmatprep.subr.bf16.mxu0 0
        %1899 = vmatpush1.bf16.msra.mxu0 0
        %1900 = vmatprep.subr.bf16.mxu0 0
        %1901 = vmatpush1.bf16.msra.mxu0 0
        %1902 = vmatprep.subr.bf16.mxu0 0
        %1903 = vmatpush1.bf16.msra.mxu0 0
        %1904 = vmatprep.mubr.bf16.mxu0 0
        %1905 = vmatmul.mubr.bf16.gmra.mrb[0].mxu0 %v1867
        %v1906 = vpop.f32.mrb[0].mxu0
        %v1907 = vadd.f32 0.0, %v1906
        %v1908 = vpop.f32.mrb[0].mxu0
        %v1909 = vpop.f32.mrb[0].mxu0
        %v1910 = vpop.f32.mrb[0].mxu0
        %1911 = vdwg.mxu0
        %1912 = vrot.lane.b32.xlu0 %v1741, 64
        %v1913 = vpop.permute.xlu0 %1912
        %v1915 = vsel %vm988, %v1863, 0
        %v1918 = vsel %vm1018, %v1913, 0
        %1920 = vmatprep.subr.bf16.mxu0 0
        %1921 = vmatpush1.bf16.msra.mxu0 %v1918
        %1922 = vmatprep.subr.bf16.mxu0 0
        %1923 = vmatpush1.bf16.msra.mxu0 0
        %1924 = vmatprep.subr.bf16.mxu0 0
        %1925 = vmatpush1.bf16.msra.mxu0 0
        %1926 = vmatprep.subr.bf16.mxu0 0
        %1927 = vmatpush1.bf16.msra.mxu0 0
        %1928 = vmatprep.subr.bf16.mxu0 0
        %1929 = vmatpush1.bf16.msra.mxu0 0
        %1930 = vmatprep.subr.bf16.mxu0 0
        %1931 = vmatpush1.bf16.msra.mxu0 0
        %1932 = vmatprep.subr.bf16.mxu0 0
        %1933 = vmatpush1.bf16.msra.mxu0 0
        %1934 = vmatprep.subr.bf16.mxu0 0
        %1935 = vmatpush1.bf16.msra.mxu0 0
        %1936 = vmatprep.subr.bf16.mxu0 0
        %1937 = vmatpush1.bf16.msra.mxu0 0
        %1938 = vmatprep.subr.bf16.mxu0 0
        %1939 = vmatpush1.bf16.msra.mxu0 0
        %1940 = vmatprep.subr.bf16.mxu0 0
        %1941 = vmatpush1.bf16.msra.mxu0 0
        %1942 = vmatprep.subr.bf16.mxu0 0
        %1943 = vmatpush1.bf16.msra.mxu0 0
        %1944 = vmatprep.subr.bf16.mxu0 0
        %1945 = vmatpush1.bf16.msra.mxu0 0
        %1946 = vmatprep.subr.bf16.mxu0 0
        %1947 = vmatpush1.bf16.msra.mxu0 0
        %1948 = vmatprep.subr.bf16.mxu0 0
        %1949 = vmatpush1.bf16.msra.mxu0 0
        %1950 = vmatprep.subr.bf16.mxu0 0
        %1951 = vmatpush1.bf16.msra.mxu0 0
        %1952 = vmatprep.mubr.bf16.mxu0 0
        %1953 = vmatmul.mubr.bf16.gmra.mrb[0].mxu0 %v1915
        %v1954 = vpop.f32.mrb[0].mxu0
        %v1955 = vadd.f32 0.0, %v1954
        %v1956 = vpop.f32.mrb[0].mxu0
        %v1957 = vpop.f32.mrb[0].mxu0
        %v1958 = vpop.f32.mrb[0].mxu0
        %1959 = vdwg.mxu0
        %1960 = vrot.lane.b32.xlu0 %v1740, 112
        %v1961 = vpop.permute.xlu0 %1960
        %1962 = vrot.lane.b32.xlu0 %v1740, 80
        %v1963 = vpop.permute.xlu0 %1962
        %v1965 = vsel %vm892, %v1961, 0
        %v1968 = vsel %vm892, %v1963, 0
        %1970 = vmatprep.subr.bf16.mxu0 0
        %1971 = vmatpush1.bf16.xpose.msra.mxu0 %v1968
        %1972 = vmatprep.subr.bf16.mxu0 0
        %1973 = vmatpush1.bf16.xpose.msra.mxu0 0
        %1974 = vmatprep.subr.bf16.mxu0 0
        %1975 = vmatpush1.bf16.xpose.msra.mxu0 0
        %1976 = vmatprep.subr.bf16.mxu0 0
        %1977 = vmatpush1.bf16.xpose.msra.mxu0 0
        %1978 = vmatprep.subr.bf16.mxu0 0
        %1979 = vmatpush1.bf16.xpose.msra.mxu0 0
        %1980 = vmatprep.subr.bf16.mxu0 0
        %1981 = vmatpush1.bf16.xpose.msra.mxu0 0
        %1982 = vmatprep.subr.bf16.mxu0 0
        %1983 = vmatpush1.bf16.xpose.msra.mxu0 0
        %1984 = vmatprep.subr.bf16.mxu0 0
        %1985 = vmatpush1.bf16.xpose.msra.mxu0 0
        %1986 = vmatprep.subr.bf16.mxu0 0
        %1987 = vmatpush1.bf16.xpose.msra.mxu0 0
        %1988 = vmatprep.subr.bf16.mxu0 0
        %1989 = vmatpush1.bf16.xpose.msra.mxu0 0
        %1990 = vmatprep.subr.bf16.mxu0 0
        %1991 = vmatpush1.bf16.xpose.msra.mxu0 0
        %1992 = vmatprep.subr.bf16.mxu0 0
        %1993 = vmatpush1.bf16.xpose.msra.mxu0 0
        %1994 = vmatprep.subr.bf16.mxu0 0
        %1995 = vmatpush1.bf16.xpose.msra.mxu0 0
        %1996 = vmatprep.subr.bf16.mxu0 0
        %1997 = vmatpush1.bf16.xpose.msra.mxu0 0
        %1998 = vmatprep.subr.bf16.mxu0 0
        %1999 = vmatpush1.bf16.xpose.msra.mxu0 0
        %2000 = vmatprep.subr.bf16.mxu0 0
        %2001 = vmatpush1.bf16.xpose.msra.mxu0 0
        %2002 = vmatprep.mubr.bf16.mxu0 0
        %2003 = vmatmul.mubr.bf16.gmra.mrb[0].mxu0 %v1965
        %v2004 = vpop.f32.mrb[0].mxu0
        %v2005 = vadd.f32 %v882, %v2004
        %v2006 = vpop.f32.mrb[0].mxu0
        %v2007 = vpop.f32.mrb[0].mxu0
        %v2008 = vpop.f32.mrb[0].mxu0
        %2009 = vdwg.mxu0
        %2010 = vrot.lane.b32.xlu0 %v1741, 112
        %v2011 = vpop.permute.xlu0 %2010
        %2012 = vrot.lane.b32.xlu0 %v1741, 80
        %v2013 = vpop.permute.xlu0 %2012
        %v2015 = vsel %vm892, %v2011, 0
        %v2018 = vsel %vm892, %v2013, 0
        %2020 = vmatprep.subr.bf16.mxu0 0
        %2021 = vmatpush1.bf16.xpose.msra.mxu0 %v2018
        %2022 = vmatprep.subr.bf16.mxu0 0
        %2023 = vmatpush1.bf16.xpose.msra.mxu0 0
        %2024 = vmatprep.subr.bf16.mxu0 0
        %2025 = vmatpush1.bf16.xpose.msra.mxu0 0
        %2026 = vmatprep.subr.bf16.mxu0 0
        %2027 = vmatpush1.bf16.xpose.msra.mxu0 0
        %2028 = vmatprep.subr.bf16.mxu0 0
        %2029 = vmatpush1.bf16.xpose.msra.mxu0 0
        %2030 = vmatprep.subr.bf16.mxu0 0
        %2031 = vmatpush1.bf16.xpose.msra.mxu0 0
        %2032 = vmatprep.subr.bf16.mxu0 0
        %2033 = vmatpush1.bf16.xpose.msra.mxu0 0
        %2034 = vmatprep.subr.bf16.mxu0 0
        %2035 = vmatpush1.bf16.xpose.msra.mxu0 0
        %2036 = vmatprep.subr.bf16.mxu0 0
        %2037 = vmatpush1.bf16.xpose.msra.mxu0 0
        %2038 = vmatprep.subr.bf16.mxu0 0
        %2039 = vmatpush1.bf16.xpose.msra.mxu0 0
        %2040 = vmatprep.subr.bf16.mxu0 0
        %2041 = vmatpush1.bf16.xpose.msra.mxu0 0
        %2042 = vmatprep.subr.bf16.mxu0 0
        %2043 = vmatpush1.bf16.xpose.msra.mxu0 0
        %2044 = vmatprep.subr.bf16.mxu0 0
        %2045 = vmatpush1.bf16.xpose.msra.mxu0 0
        %2046 = vmatprep.subr.bf16.mxu0 0
        %2047 = vmatpush1.bf16.xpose.msra.mxu0 0
        %2048 = vmatprep.subr.bf16.mxu0 0
        %2049 = vmatpush1.bf16.xpose.msra.mxu0 0
        %2050 = vmatprep.subr.bf16.mxu0 0
        %2051 = vmatpush1.bf16.xpose.msra.mxu0 0
        %2052 = vmatprep.mubr.bf16.mxu0 0
        %2053 = vmatmul.mubr.bf16.gmra.mrb[0].mxu0 %v2015
        %v2054 = vpop.f32.mrb[0].mxu0
        %v2055 = vadd.f32 %v886, %v2054
        %v2056 = vpop.f32.mrb[0].mxu0
        %v2057 = vpop.f32.mrb[0].mxu0
        %v2058 = vpop.f32.mrb[0].mxu0
        %2059 = vdwg.mxu0
        %v2060 = vsel %vm988, %v2005, -inf
        %2061 = vmax.xlane.f32.xlu0 %v2060
        %v2062 = vpop.xlane.xlu0 %2061
        %v2063 = vsel %vm988, %v2055, -inf
        %2064 = vmax.xlane.f32.xlu0 %v2063
        %v2065 = vpop.xlane.xlu0 %2064
        %v2066 = vsub.f32 %v2005, %v2062
        %v2067 = vsub.f32 %v2055, %v2065
        %v2068 = vmul.f32 %v2066, 1.442695
        %v2069 = vpow.pop %v2068
        %v2070 = vmul.f32 %v2067, 1.442695
        %v2071 = vpow.pop %v2070
        %v2072 = vsel %vm988, %v2069, 0.0
        %2073 = vadd.xlane.f32.xlu0 %v2072
        %v2074 = vpop.xlane.xlu0 %2073
        %v2075 = vsel %vm988, %v2071, 0.0
        %2076 = vadd.xlane.f32.xlu0 %v2075
        %v2077 = vpop.xlane.xlu0 %2076
        %v2078 = vrcp.pop %v2074
        %v2079 = vrcp.pop %v2077
        %v2080 = vmul.f32 %v2069, %v2078
        %v2081 = vmul.f32 %v2071, %v2079
        %v2082 = vpack.c.bf16 %v2080, %v2080
        %v2083 = vpack.c.bf16 %v2081, %v2081
        %2084 = vrot.lane.b32.xlu0 %v1740, 48
        %v2085 = vpop.permute.xlu0 %2084
        %v2087 = vsel %vm988, %v2082, 0
        %v2090 = vsel %vm1018, %v2085, 0
        %2092 = vmatprep.subr.bf16.mxu0 0
        %2093 = vmatpush1.bf16.msra.mxu0 %v2090
        %2094 = vmatprep.subr.bf16.mxu0 0
        %2095 = vmatpush1.bf16.msra.mxu0 0
        %2096 = vmatprep.subr.bf16.mxu0 0
        %2097 = vmatpush1.bf16.msra.mxu0 0
        %2098 = vmatprep.subr.bf16.mxu0 0
        %2099 = vmatpush1.bf16.msra.mxu0 0
        %2100 = vmatprep.subr.bf16.mxu0 0
        %2101 = vmatpush1.bf16.msra.mxu0 0
        %2102 = vmatprep.subr.bf16.mxu0 0
        %2103 = vmatpush1.bf16.msra.mxu0 0
        %2104 = vmatprep.subr.bf16.mxu0 0
        %2105 = vmatpush1.bf16.msra.mxu0 0
        %2106 = vmatprep.subr.bf16.mxu0 0
        %2107 = vmatpush1.bf16.msra.mxu0 0
        %2108 = vmatprep.subr.bf16.mxu0 0
        %2109 = vmatpush1.bf16.msra.mxu0 0
        %2110 = vmatprep.subr.bf16.mxu0 0
        %2111 = vmatpush1.bf16.msra.mxu0 0
        %2112 = vmatprep.subr.bf16.mxu0 0
        %2113 = vmatpush1.bf16.msra.mxu0 0
        %2114 = vmatprep.subr.bf16.mxu0 0
        %2115 = vmatpush1.bf16.msra.mxu0 0
        %2116 = vmatprep.subr.bf16.mxu0 0
        %2117 = vmatpush1.bf16.msra.mxu0 0
        %2118 = vmatprep.subr.bf16.mxu0 0
        %2119 = vmatpush1.bf16.msra.mxu0 0
        %2120 = vmatprep.subr.bf16.mxu0 0
        %2121 = vmatpush1.bf16.msra.mxu0 0
        %2122 = vmatprep.subr.bf16.mxu0 0
        %2123 = vmatpush1.bf16.msra.mxu0 0
        %2124 = vmatprep.mubr.bf16.mxu0 0
        %2125 = vmatmul.mubr.bf16.gmra.mrb[0].mxu0 %v2087
        %v2126 = vpop.f32.mrb[0].mxu0
        %v2127 = vadd.f32 0.0, %v2126
        %v2128 = vpop.f32.mrb[0].mxu0
        %v2129 = vpop.f32.mrb[0].mxu0
        %v2130 = vpop.f32.mrb[0].mxu0
        %2131 = vdwg.mxu0
        %2132 = vrot.lane.b32.xlu0 %v1741, 48
        %v2133 = vpop.permute.xlu0 %2132
        %v2135 = vsel %vm988, %v2083, 0
        %v2138 = vsel %vm1018, %v2133, 0
        %2140 = vmatprep.subr.bf16.mxu0 0
        %2141 = vmatpush1.bf16.msra.mxu0 %v2138
        %2142 = vmatprep.subr.bf16.mxu0 0
        %2143 = vmatpush1.bf16.msra.mxu0 0
        %2144 = vmatprep.subr.bf16.mxu0 0
        %2145 = vmatpush1.bf16.msra.mxu0 0
        %2146 = vmatprep.subr.bf16.mxu0 0
        %2147 = vmatpush1.bf16.msra.mxu0 0
        %2148 = vmatprep.subr.bf16.mxu0 0
        %2149 = vmatpush1.bf16.msra.mxu0 0
        %2150 = vmatprep.subr.bf16.mxu0 0
        %2151 = vmatpush1.bf16.msra.mxu0 0
        %2152 = vmatprep.subr.bf16.mxu0 0
        %2153 = vmatpush1.bf16.msra.mxu0 0
        %2154 = vmatprep.subr.bf16.mxu0 0
        %2155 = vmatpush1.bf16.msra.mxu0 0
        %2156 = vmatprep.subr.bf16.mxu0 0
        %2157 = vmatpush1.bf16.msra.mxu0 0
        %2158 = vmatprep.subr.bf16.mxu0 0
        %2159 = vmatpush1.bf16.msra.mxu0 0
        %2160 = vmatprep.subr.bf16.mxu0 0
        %2161 = vmatpush1.bf16.msra.mxu0 0
        %2162 = vmatprep.subr.bf16.mxu0 0
        %2163 = vmatpush1.bf16.msra.mxu0 0
        %2164 = vmatprep.subr.bf16.mxu0 0
        %2165 = vmatpush1.bf16.msra.mxu0 0
        %2166 = vmatprep.subr.bf16.mxu0 0
        %2167 = vmatpush1.bf16.msra.mxu0 0
        %2168 = vmatprep.subr.bf16.mxu0 0
        %2169 = vmatpush1.bf16.msra.mxu0 0
        %2170 = vmatprep.subr.bf16.mxu0 0
        %2171 = vmatpush1.bf16.msra.mxu0 0
        %2172 = vmatprep.mubr.bf16.mxu0 0
        %2173 = vmatmul.mubr.bf16.gmra.mrb[0].mxu0 %v2135
        %v2174 = vpop.f32.mrb[0].mxu0
        %v2175 = vadd.f32 0.0, %v2174
        %v2176 = vpop.f32.mrb[0].mxu0
        %v2177 = vpop.f32.mrb[0].mxu0
        %v2178 = vpop.f32.mrb[0].mxu0
        %2179 = vdwg.mxu0
        %2182 = vrot.lane.b32.xlu0 %v2127, 16
        %v2183 = vpop.permute.xlu0 %2182
        %2184 = vrot.lane.b32.xlu0 %v2175, 16
        %v2185 = vpop.permute.xlu0 %2184
        %v2188 = vsel %vm892, %v1907, %v2183
        %v2189 = vsel %vm892, %v1955, %v2185
        %s2190 = scalar_lea.vmem %s9, 16
        %v2191 = vld [vmem:[%s2190] sm:$0xf]
        %v2192 = vld [vmem:[%s2190 + $0x4] sm:$0xf]
        %v2193 = vld [vmem:[%s2190 + $0x8] sm:$0xf]
        %v2194 = vld [vmem:[%s2190 + $0xc] sm:$0xf]
        %v2195 = vpack.c.bf16 %v2189, %v2188
        %s2196 = scalar_lea.vmem %s10, 1
        %v2197 = vld [vmem:[%s2196] sm:$0x1]
        %v2199 = vlaneseq
        %v2200 = vshrl.u32 %v2199, 7
        %v2201 = vsub.s32 0, %v2200
        %v2202 = vrot.slane %v2197, %v2201
        %v2208 = vunpack.c.l.b16 %v2191
        %v2209 = vunpack.c.l.b16 %v2192
        %v2210 = vunpack.c.l.b16 %v2193
        %v2211 = vunpack.c.l.b16 %v2194
        %v2212 = vpack.c.b16 %v2209, %v2208
        %v2213 = vpack.c.b16 %v2211, %v2210
        %v2217 = vsel %vm765, %v2195, 0
        %2219 = vmatprep.subr.bf16.mxu0 0
        %2220 = vmatpush1.bf16.msra.mxu0 %v2212
        %2221 = vmatprep.subr.bf16.mxu0 0
        %2222 = vmatpush1.bf16.msra.mxu0 %v2213
        %2223 = vmatprep.subr.bf16.mxu0 0
        %2224 = vmatpush1.bf16.msra.mxu0 0
        %2225 = vmatprep.subr.bf16.mxu0 0
        %2226 = vmatpush1.bf16.msra.mxu0 0
        %2227 = vmatprep.subr.bf16.mxu0 0
        %2228 = vmatpush1.bf16.msra.mxu0 0
        %2229 = vmatprep.subr.bf16.mxu0 0
        %2230 = vmatpush1.bf16.msra.mxu0 0
        %2231 = vmatprep.subr.bf16.mxu0 0
        %2232 = vmatpush1.bf16.msra.mxu0 0
        %2233 = vmatprep.subr.bf16.mxu0 0
        %2234 = vmatpush1.bf16.msra.mxu0 0
        %2235 = vmatprep.subr.bf16.mxu0 0
        %2236 = vmatpush1.bf16.msra.mxu0 0
        %2237 = vmatprep.subr.bf16.mxu0 0
        %2238 = vmatpush1.bf16.msra.mxu0 0
        %2239 = vmatprep.subr.bf16.mxu0 0
        %2240 = vmatpush1.bf16.msra.mxu0 0
        %2241 = vmatprep.subr.bf16.mxu0 0
        %2242 = vmatpush1.bf16.msra.mxu0 0
        %2243 = vmatprep.subr.bf16.mxu0 0
        %2244 = vmatpush1.bf16.msra.mxu0 0
        %2245 = vmatprep.subr.bf16.mxu0 0
        %2246 = vmatpush1.bf16.msra.mxu0 0
        %2247 = vmatprep.subr.bf16.mxu0 0
        %2248 = vmatpush1.bf16.msra.mxu0 0
        %2249 = vmatprep.subr.bf16.mxu0 0
        %2250 = vmatpush1.bf16.msra.mxu0 0
        %2251 = vmatprep.mubr.bf16.mxu0 0
        %2252 = vmatmul.mubr.bf16.gmra.mrb[0].mxu0 %v2217
        %v2253 = vpop.f32.mrb[0].mxu0
        %v2254 = vadd.f32 %v2202, %v2253
        %v2255 = vpop.f32.mrb[0].mxu0
        %v2256 = vpop.f32.mrb[0].mxu0
        %v2257 = vadd.f32 %v2202, %v2256
        %v2258 = vpop.f32.mrb[0].mxu0
        %2259 = vdwg.mxu0
        %v2260 = vadd.f32 %v2254, %v1668
        %v2261 = vadd.f32 %v2257, %v1669
        %s2262 = scalar_lea.vmem %s11, 1
        %v2263 = vld [vmem:[%s2262] sm:$0x1]
        %s2264 = scalar_lea.vmem %s12, 1
        %v2265 = vld [vmem:[%s2264] sm:$0x1]
        %v2266 = vsel %vm765, %v2260, 0.0
        %2267 = vadd.xlane.f32.xlu0 %v2266
        %v2268 = vpop.xlane.xlu0 %2267
        %v2269 = vsel %vm765, %v2261, 0.0
        %2270 = vadd.xlane.f32.xlu0 %v2269
        %v2271 = vpop.xlane.xlu0 %2270
        %v2272 = vmul.f32 %v2268, %v772
        %v2273 = vmul.f32 %v2271, %v772
        %v2274 = vsub.f32 %v2260, %v2272
        %v2275 = vsub.f32 %v2261, %v2273
        %v2276 = vmul.f32 %v2274, %v2274
        %v2277 = vmul.f32 %v2275, %v2275
        %v2278 = vsel %vm765, %v2276, 0.0
        %2279 = vadd.xlane.f32.xlu0 %v2278
        %v2280 = vpop.xlane.xlu0 %2279
        %v2281 = vsel %vm765, %v2277, 0.0
        %2282 = vadd.xlane.f32.xlu0 %v2281
        %v2283 = vpop.xlane.xlu0 %2282
        %v2284 = vmul.f32 %v2280, %v772
        %v2285 = vmul.f32 %v2283, %v772
        %v2286 = vadd.f32 %v2284, 1e-12
        %v2287 = vadd.f32 %v2285, 1e-12
        %v2288 = vrsqrt.pop %v2286
        %v2289 = vrsqrt.pop %v2287
        %v2290 = vmul.f32 %v2274, %v2288
        %v2291 = vmul.f32 %v2275, %v2289
        %v2293 = vlaneseq
        %v2294 = vshrl.u32 %v2293, 7
        %v2295 = vsub.s32 0, %v2294
        %v2296 = vrot.slane %v2263, %v2295
        %v2298 = vmul.f32 %v2290, %v2296
        %v2299 = vmul.f32 %v2291, %v2296
        %v2301 = vlaneseq
        %v2302 = vshrl.u32 %v2301, 7
        %v2303 = vsub.s32 0, %v2302
        %v2304 = vrot.slane %v2265, %v2303
        %v2306 = vadd.f32 %v2298, %v2304
        %v2307 = vadd.f32 %v2299, %v2304
        %s2308 = scalar_lea.vmem %s13, 16
        %v2309 = vld [vmem:[%s2308] sm:$0xf]
        %v2310 = vld [vmem:[%s2308 + $0x4] sm:$0xf]
        %v2311 = vld [vmem:[%s2308 + $0x8] sm:$0xf]
        %v2312 = vld [vmem:[%s2308 + $0xc] sm:$0xf]
        %v2313 = vpack.c.bf16 %v2307, %v2306
        %s2314 = scalar_lea.vmem %s14, 1
        %v2315 = vld [vmem:[%s2314] sm:$0x1]
        %v2317 = vlaneseq
        %v2318 = vshrl.u32 %v2317, 7
        %v2319 = vsub.s32 0, %v2318
        %v2320 = vrot.slane %v2315, %v2319
        %v2326 = vunpack.c.l.b16 %v2309
        %v2327 = vunpack.c.l.b16 %v2310
        %v2328 = vunpack.c.l.b16 %v2311
        %v2329 = vunpack.c.l.b16 %v2312
        %v2330 = vpack.c.b16 %v2327, %v2326
        %v2331 = vpack.c.b16 %v2329, %v2328
        %v2335 = vsel %vm765, %v2313, 0
        %2337 = vmatprep.subr.bf16.mxu0 0
        %2338 = vmatpush1.bf16.msra.mxu0 %v2330
        %2339 = vmatprep.subr.bf16.mxu0 0
        %2340 = vmatpush1.bf16.msra.mxu0 %v2331
        %2341 = vmatprep.subr.bf16.mxu0 0
        %2342 = vmatpush1.bf16.msra.mxu0 0
        %2343 = vmatprep.subr.bf16.mxu0 0
        %2344 = vmatpush1.bf16.msra.mxu0 0
        %2345 = vmatprep.subr.bf16.mxu0 0
        %2346 = vmatpush1.bf16.msra.mxu0 0
        %2347 = vmatprep.subr.bf16.mxu0 0
        %2348 = vmatpush1.bf16.msra.mxu0 0
        %2349 = vmatprep.subr.bf16.mxu0 0
        %2350 = vmatpush1.bf16.msra.mxu0 0
        %2351 = vmatprep.subr.bf16.mxu0 0
        %2352 = vmatpush1.bf16.msra.mxu0 0
        %2353 = vmatprep.subr.bf16.mxu0 0
        %2354 = vmatpush1.bf16.msra.mxu0 0
        %2355 = vmatprep.subr.bf16.mxu0 0
        %2356 = vmatpush1.bf16.msra.mxu0 0
        %2357 = vmatprep.subr.bf16.mxu0 0
        %2358 = vmatpush1.bf16.msra.mxu0 0
        %2359 = vmatprep.subr.bf16.mxu0 0
        %2360 = vmatpush1.bf16.msra.mxu0 0
        %2361 = vmatprep.subr.bf16.mxu0 0
        %2362 = vmatpush1.bf16.msra.mxu0 0
        %2363 = vmatprep.subr.bf16.mxu0 0
        %2364 = vmatpush1.bf16.msra.mxu0 0
        %2365 = vmatprep.subr.bf16.mxu0 0
        %2366 = vmatpush1.bf16.msra.mxu0 0
        %2367 = vmatprep.subr.bf16.mxu0 0
        %2368 = vmatpush1.bf16.msra.mxu0 0
        %2369 = vmatprep.mubr.bf16.mxu0 0
        %2370 = vmatmul.mubr.bf16.gmra.mrb[0].mxu0 %v2335
        %v2371 = vpop.f32.mrb[0].mxu0
        %v2372 = vadd.f32 %v2320, %v2371
        %v2373 = vpop.f32.mrb[0].mxu0
        %v2374 = vpop.f32.mrb[0].mxu0
        %v2375 = vadd.f32 %v2320, %v2374
        %v2376 = vpop.f32.mrb[0].mxu0
        %2377 = vdwg.mxu0
        %v2378 = vmul.f32 %v2372, %v2372
        %v2379 = vmul.f32 %v2375, %v2375
        %v2380 = vmul.f32 %v2372, %v2378
        %v2381 = vmul.f32 %v2375, %v2379
        %v2382 = vmul.f32 %v2380, 0.044715
        %v2383 = vmul.f32 %v2381, 0.044715
        %v2384 = vadd.f32 %v2372, %v2382
        %v2385 = vadd.f32 %v2375, %v2383
        %v2386 = vmul.f32 %v2384, 0.7978846
        %v2387 = vmul.f32 %v2385, 0.7978846
        %v2388 = vtanh.pop %v2386
        %v2389 = vtanh.pop %v2387
        %v2390 = vadd.f32 %v2388, 1.0
        %v2391 = vadd.f32 %v2389, 1.0
        %v2392 = vmul.f32 %v2390, 0.5
        %v2393 = vmul.f32 %v2391, 0.5
        %v2394 = vmul.f32 %v2372, %v2392
        %v2395 = vmul.f32 %v2375, %v2393
        %s2396 = scalar_lea.vmem %s15, 32
        %v2397 = vld [vmem:[%s2396] sm:$0xf]
        %v2398 = vld [vmem:[%s2396 + $0x4] sm:$0xf]
        %v2399 = vld [vmem:[%s2396 + $0x8] sm:$0xf]
        %v2400 = vld [vmem:[%s2396 + $0xc] sm:$0xf]
        %v2401 = vld [vmem:[%s2396 + $0x10] sm:$0xf]
        %v2402 = vld [vmem:[%s2396 + $0x14] sm:$0xf]
        %v2403 = vld [vmem:[%s2396 + $0x18] sm:$0xf]
        %v2404 = vld [vmem:[%s2396 + $0x1c] sm:$0xf]
        %v2405 = vpack.c.bf16 %v2395, %v2394
        %s2406 = scalar_lea.vmem %s16, 1
        %v2407 = vld [vmem:[%s2406] sm:$0x1]
        %v2409 = vlaneseq
        %v2410 = vshrl.u32 %v2409, 7
        %v2411 = vsub.s32 0, %v2410
        %v2412 = vrot.slane %v2407, %v2411
        %v2422 = vunpack.c.l.b16 %v2397
        %v2423 = vunpack.c.l.b16 %v2398
        %v2424 = vunpack.c.l.b16 %v2399
        %v2425 = vunpack.c.l.b16 %v2400
        %v2426 = vunpack.c.l.b16 %v2401
        %v2427 = vunpack.c.l.b16 %v2402
        %v2428 = vunpack.c.l.b16 %v2403
        %v2429 = vunpack.c.l.b16 %v2404
        %v2430 = vpack.c.b16 %v2423, %v2422
        %v2431 = vpack.c.b16 %v2425, %v2424
        %v2432 = vpack.c.b16 %v2427, %v2426
        %v2433 = vpack.c.b16 %v2429, %v2428
        %v2439 = vsel %vm669, %v2405, 0
        %2441 = vmatprep.subr.bf16.mxu0 0
        %2442 = vmatpush1.bf16.msra.mxu0 %v2430
        %2443 = vmatprep.subr.bf16.mxu0 0
        %2444 = vmatpush1.bf16.msra.mxu0 %v2431
        %2445 = vmatprep.subr.bf16.mxu0 0
        %2446 = vmatpush1.bf16.msra.mxu0 %v2432
        %2447 = vmatprep.subr.bf16.mxu0 0
        %2448 = vmatpush1.bf16.msra.mxu0 %v2433
        %2449 = vmatprep.subr.bf16.mxu0 0
        %2450 = vmatpush1.bf16.msra.mxu0 0
        %2451 = vmatprep.subr.bf16.mxu0 0
        %2452 = vmatpush1.bf16.msra.mxu0 0
        %2453 = vmatprep.subr.bf16.mxu0 0
        %2454 = vmatpush1.bf16.msra.mxu0 0
        %2455 = vmatprep.subr.bf16.mxu0 0
        %2456 = vmatpush1.bf16.msra.mxu0 0
        %2457 = vmatprep.subr.bf16.mxu0 0
        %2458 = vmatpush1.bf16.msra.mxu0 0
        %2459 = vmatprep.subr.bf16.mxu0 0
        %2460 = vmatpush1.bf16.msra.mxu0 0
        %2461 = vmatprep.subr.bf16.mxu0 0
        %2462 = vmatpush1.bf16.msra.mxu0 0
        %2463 = vmatprep.subr.bf16.mxu0 0
        %2464 = vmatpush1.bf16.msra.mxu0 0
        %2465 = vmatprep.subr.bf16.mxu0 0
        %2466 = vmatpush1.bf16.msra.mxu0 0
        %2467 = vmatprep.subr.bf16.mxu0 0
        %2468 = vmatpush1.bf16.msra.mxu0 0
        %2469 = vmatprep.subr.bf16.mxu0 0
        %2470 = vmatpush1.bf16.msra.mxu0 0
        %2471 = vmatprep.subr.bf16.mxu0 0
        %2472 = vmatpush1.bf16.msra.mxu0 0
        %2473 = vmatprep.mubr.bf16.mxu0 0
        %2474 = vmatmul.mubr.bf16.gmra.mrb[0].mxu0 %v2439
        %v2475 = vpop.f32.mrb[0].mxu0
        %v2476 = vadd.f32 %v2412, %v2475
        %v2477 = vpop.f32.mrb[0].mxu0
        %v2478 = vpop.f32.mrb[0].mxu0
        %v2479 = vadd.f32 %v2412, %v2478
        %v2480 = vpop.f32.mrb[0].mxu0
        %2481 = vdwg.mxu0
        %v2482 = vadd.f32 %v2476, %v2306
        %v2483 = vadd.f32 %v2479, %v2307
        %s2484 = scalar_lea.vmem %s17, 1
        %v2485 = vld [vmem:[%s2484] sm:$0x1]
        %s2486 = scalar_lea.vmem %s18, 1
        %v2487 = vld [vmem:[%s2486] sm:$0x1]
        %v2488 = vsel %vm765, %v2482, 0.0
        %2489 = vadd.xlane.f32.xlu0 %v2488
        %v2490 = vpop.xlane.xlu0 %2489
        %v2491 = vsel %vm765, %v2483, 0.0
        %2492 = vadd.xlane.f32.xlu0 %v2491
        %v2493 = vpop.xlane.xlu0 %2492
        %v2494 = vmul.f32 %v2490, %v772
        %v2495 = vmul.f32 %v2493, %v772
        %v2496 = vsub.f32 %v2482, %v2494
        %v2497 = vsub.f32 %v2483, %v2495
        %v2498 = vmul.f32 %v2496, %v2496
        %v2499 = vmul.f32 %v2497, %v2497
        %v2500 = vsel %vm765, %v2498, 0.0
        %2501 = vadd.xlane.f32.xlu0 %v2500
        %v2502 = vpop.xlane.xlu0 %2501
        %v2503 = vsel %vm765, %v2499, 0.0
        %2504 = vadd.xlane.f32.xlu0 %v2503
        %v2505 = vpop.xlane.xlu0 %2504
        %v2506 = vmul.f32 %v2502, %v772
        %v2507 = vmul.f32 %v2505, %v772
        %v2508 = vadd.f32 %v2506, 1e-12
        %v2509 = vadd.f32 %v2507, 1e-12
        %v2510 = vrsqrt.pop %v2508
        %v2511 = vrsqrt.pop %v2509
        %v2512 = vmul.f32 %v2496, %v2510
        %v2513 = vmul.f32 %v2497, %v2511
        %v2515 = vlaneseq
        %v2516 = vshrl.u32 %v2515, 7
        %v2517 = vsub.s32 0, %v2516
        %v2518 = vrot.slane %v2485, %v2517
        %v2520 = vmul.f32 %v2512, %v2518
        %v2521 = vmul.f32 %v2513, %v2518
        %v2523 = vlaneseq
        %v2524 = vshrl.u32 %v2523, 7
        %v2525 = vsub.s32 0, %v2524
        %v2526 = vrot.slane %v2487, %v2525
        %v2528 = vadd.f32 %v2520, %v2526
        %v2529 = vadd.f32 %v2521, %v2526
        %v2532 = vrot.slane %v2529, 7
        %vm2533 = vcmask 1041409
        %v2534 = vsel %vm2533, %v2532, %v2528
        %vm2536 = vcmask 254976
        %2537 = vst.msk [vmem:[%s608] sm:$0x3] %vm2536, %v2534
        %s2538 = sand.u32 %s450, 1
        %s2539 = scalar_lea.sflag [#allocation3], %s2538
        %s2540 = sand.u32 %s450, 1
        %s2541 = smul.addr %s2540, 2
        %s2542 = scalar_lea.vmem [#allocation2], %s2541
        // Predicated region
        $region97: #{bert_encode_pooled.1} parent=95 // pred_check
          %p2543 = pneg %p460
        $region98: #{bert_encode_pooled.1} parent=95 // pred_check_branch
          %2545 = sbr.rel (%p2543) target = $region100
        $region99: #{bert_encode_pooled.1} parent=95 // pred_region
          %s2547 = ssub.s32 32, 32
          %2548 = vsyncadd %s2539, %s2547
          %s2549 = smul.addr %s33, 32
          %s2550 = scalar_lea.hbm %s19, %s2549
          %s2552 = sshll.u32 %s2542, 4
          %s2553 = int_to_ptr.vmem [resolvable:$true] %s2552
          %2555 = dma.vmem_to_hbm [thread:$0]  %s2553, 32, %s2550, %s2539
        $region100: #{bert_encode_pooled.1} parent=95 // pred_fallthru
          _
      $region96: #{bert_encode_pooled.1} parent=5 // pred_fallthru
        _
      %p2556 = scmp.le.s32.totalorder 2, %s28
      // Predicated region
      $region101: #{bert_encode_pooled.1} parent=5 // pred_check
        %p2557 = pneg %p2556
      $region102: #{bert_encode_pooled.1} parent=5 // pred_check_branch
        %2559 = sbr.rel (%p2557) target = $region104
      $region103: #{bert_encode_pooled.1} parent=5 // pred_region
        %s2560 = ssub.s32 %s28, 2
        // Predicated region
        $region105: #{bert_encode_pooled.1} parent=103 // pred_check
          %p2561 = pneg %p466
        $region106: #{bert_encode_pooled.1} parent=103 // pred_check_branch
          %2563 = sbr.rel (%p2561) target = $region108
        $region107: #{bert_encode_pooled.1} parent=103 // pred_region
          %s2564 = sand.u32 %s451, 1
          %s2565 = scalar_lea.sflag [#allocation3], %s2564
          %s2566 = sand.u32 %s451, 1
          %s2567 = smul.addr %s2566, 2
          %s2568 = scalar_lea.vmem [#allocation2], %s2567
          %2569 = dma.done %s2565, 32
        $region108: #{bert_encode_pooled.1} parent=103 // pred_fallthru
          _
      $region104: #{bert_encode_pooled.1} parent=5 // pred_fallthru
        _
    $region6: #{bert_encode_pooled.1} parent=1 // loop_footer
      %s32 = sadd.s32 1, %s28
    $region7: #{bert_encode_pooled.1} parent=1 // loop_footer_branch
      %27 = sbr.rel target = $region3
    $region8: #{bert_encode_pooled.1} parent=1 // loop_exit
      _
    %2570 = vsyncpa [#allocation3], 1
    %s2571 = scalar_lea.sflag [#allocation3], 1
    %2572 = vsyncpa %s2571, 1

</llo_original>
